<compile_context>
chip_gen: v7x
topology: tpu7x:2x2x1
jax: 0.10.0
libtpu: 0.0.40
codegen_flags: <defaults>
</compile_context>

<pallas_src>
import functools

import jax
import jax.numpy as jnp
from jax.experimental import pallas as pl
from jax.experimental.pallas import tpu as pltpu

_LN_EPS = 1e-5


# ----------------------------------------------------------------------------
# Per-generation VMEM limit + single-buffer feature probe
# ----------------------------------------------------------------------------
def _vmem_limit_bytes():
    cap = 64 * 1024 * 1024
    try:
        info = pltpu.get_tpu_info()
        cap = int(getattr(info, "vmem_capacity_bytes", cap))
    except Exception:
        pass
    # ~3/4 of physical VMEM, capped: ~96 MiB on v5e/v6e, ~48 MiB on v7x.
    return min((cap * 3) // 4, 100 * 1024 * 1024)


_VMEM_LIMIT = _vmem_limit_bytes()


def _probe_buffered_single():
    """Check whether pipeline_mode=pl.Buffered(1) is supported on this JAX."""
    try:
        def k(x_ref, o_ref):
            o_ref[...] = x_ref[...] + 1.0

        x = jnp.ones((16, 128), jnp.float32)
        out = pl.pallas_call(
            k,
            out_shape=jax.ShapeDtypeStruct((16, 128), jnp.float32),
            grid=(2,),
            in_specs=[pl.BlockSpec((16, 128), lambda i: (0, 0),
                                   pipeline_mode=pl.Buffered(1))],
            out_specs=pl.BlockSpec((8, 128), lambda i: (i, 0)),
        )(x)
        jax.block_until_ready(out)
        return bool(jnp.all(jnp.isfinite(out)))
    except Exception:
        return False


_BUFFERED_SINGLE = _probe_buffered_single()


def _resident_spec(shape, index_map):
    """BlockSpec for weights/biases whose block index is constant over the
    whole grid: single-buffer them (halves their VMEM) when supported."""
    if _BUFFERED_SINGLE:
        return pl.BlockSpec(shape, index_map, pipeline_mode=pl.Buffered(1))
    return pl.BlockSpec(shape, index_map)


# ----------------------------------------------------------------------------
# Tile-size selection
# ----------------------------------------------------------------------------
def _seq_tile(n):
    for cand in (256, 128):
        if n % cand == 0 and n > cand:
            return cand
    return n


def _ffn_row_tile(m):
    for cand in (512, 256, 128, 64, 32, 16, 8):
        if m % cand == 0 and m // cand >= 2:
            return cand
    return m


def _ffn_f_tile(f):
    for cand in (2048, 1024, 512):
        if f % cand == 0 and f // cand >= 2:
            return cand
    return f


# ----------------------------------------------------------------------------
# Fused kernels
# ----------------------------------------------------------------------------
def attn_flash_kernel(q_src_ref, kv_src_ref, wq_ref, bq_ref, wk_ref, bk_ref,
                      wv_ref, bv_ref, wo_ref, bo_ref, g_ref, beta_ref,
                      o_ref, q_scr, m_scr, l_scr, acc_scr, *, nhead):
    """Flash-style MHA block: QKV proj -> online-softmax attention over KV
    tiles -> per-head out-proj accumulation -> residual add -> LayerNorm."""
    ki = pl.program_id(2)

    # ---- first KV tile for this (b, q-tile): project Q once, reset state.
    @pl.when(ki == 0)
    def _():
        xq = q_src_ref[0].astype(jnp.bfloat16)                      # (tq, D)
        for h in range(nhead):
            qh = jnp.dot(xq, wq_ref[h],
                         preferred_element_type=jnp.float32) + bq_ref[h]
            q_scr[h] = qh.astype(jnp.bfloat16)                      # (tq, dh)
        m_scr[...] = jnp.full_like(m_scr, -jnp.inf)
        l_scr[...] = jnp.zeros_like(l_scr)
        acc_scr[...] = jnp.zeros_like(acc_scr)

    # ---- project this KV tile and take one online-softmax step per head.
    # TODO(synk): attn_mask / key_padding_mask would be applied to `s` here.
    kv = kv_src_ref[0].astype(jnp.bfloat16)                         # (tk, D)
    for h in range(nhead):
        kh = (jnp.dot(kv, wk_ref[h], preferred_element_type=jnp.float32)
              + bk_ref[h]).astype(jnp.bfloat16)                     # (tk, dh)
        vh = (jnp.dot(kv, wv_ref[h], preferred_element_type=jnp.float32)
              + bv_ref[h]).astype(jnp.bfloat16)                     # (tk, dh)
        s = jax.lax.dot_general(q_scr[h], kh, (((1,), (1,)), ((), ())),
                                preferred_element_type=jnp.float32)  # (tq, tk)
        m_prev = m_scr[h]
        m_new = jnp.maximum(m_prev, jnp.max(s, axis=-1, keepdims=True))
        alpha = jnp.exp(m_prev - m_new)
        p = jnp.exp(s - m_new)
        l_scr[h] = alpha * l_scr[h] + jnp.sum(p, axis=-1, keepdims=True)
        acc_scr[h] = alpha * acc_scr[h] + jax.lax.dot_general(
            p.astype(jnp.bfloat16), vh, (((1,), (0,)), ((), ())),
            preferred_element_type=jnp.float32)
        m_scr[h] = m_new

    # ---- last KV tile: normalize, out-proj per head, residual + LayerNorm.
    @pl.when(ki == pl.num_programs(2) - 1)
    def _():
        y = q_src_ref[0].astype(jnp.float32) + bo_ref[...]          # (tq, D)
        for h in range(nhead):
            attn_h = acc_scr[h] * pl.reciprocal(l_scr[h], approx=True)
            y = y + jnp.dot(attn_h.astype(jnp.bfloat16), wo_ref[h],
                            preferred_element_type=jnp.float32)     # (tq, D)
        mean = jnp.mean(y, axis=-1, keepdims=True)
        var = jnp.mean((y - mean) ** 2, axis=-1, keepdims=True)
        yn = (y - mean) * jax.lax.rsqrt(var + _LN_EPS)
        o_ref[0] = (yn * g_ref[...] + beta_ref[...]).astype(o_ref.dtype)


def ffn_ln_kernel(x_ref, w1_ref, b1_ref, w2_ref, b2_ref, g_ref, beta_ref,
                  o_ref, acc_ref):
    """F-tiled FFN: linear1 chunk -> ReLU -> linear2 chunk accumulated into
    an f32 scratch; residual add + LayerNorm at the last F chunk."""
    f = pl.program_id(1)

    @pl.when(f == 0)
    def _():
        acc_ref[...] = jnp.zeros_like(acc_ref)

    x_bf = x_ref[...].astype(jnp.bfloat16)                          # (tm, D)
    h = jnp.dot(x_bf, w1_ref[...],
                preferred_element_type=jnp.float32) + b1_ref[...]   # (tm, tf)
    h = jnp.maximum(h, 0.0).astype(jnp.bfloat16)
    acc_ref[...] += jnp.dot(h, w2_ref[...],
                            preferred_element_type=jnp.float32)     # (tm, D)

    @pl.when(f == pl.num_programs(1) - 1)
    def _():
        y = x_ref[...].astype(jnp.float32) + acc_ref[...] + b2_ref[...]
        mean = jnp.mean(y, axis=-1, keepdims=True)
        var = jnp.mean((y - mean) ** 2, axis=-1, keepdims=True)
        yn = (y - mean) * jax.lax.rsqrt(var + _LN_EPS)
        o_ref[...] = (yn * g_ref[...] + beta_ref[...]).astype(o_ref.dtype)


# ----------------------------------------------------------------------------
# Pallas wrappers
# ----------------------------------------------------------------------------
def attention_block(q_src, kv_src, p, gamma, beta, nhead):
    """q_src: (B, T, D) batch-major, kv_src: (B, S, D). Returns (B, T, D)."""
    B, T, D = q_src.shape
    S = kv_src.shape[1]
    dh = D // nhead
    tq = _seq_tile(T)
    tk = _seq_tile(S)
    kernel = functools.partial(attn_flash_kernel, nhead=nhead)
    return pl.pallas_call(
        kernel,
        out_shape=jax.ShapeDtypeStruct((B, T, D), q_src.dtype),
        grid=(B, T // tq, S // tk),
        in_specs=[
            pl.BlockSpec((1, tq, D), lambda b, qi, ki: (b, qi, 0)),   # q / residual
            pl.BlockSpec((1, tk, D), lambda b, qi, ki: (b, ki, 0)),   # kv source
            _resident_spec((nhead, D, dh), lambda b, qi, ki: (0, 0, 0)),  # wq
            _resident_spec((nhead, 1, dh), lambda b, qi, ki: (0, 0, 0)),  # bq
            _resident_spec((nhead, D, dh), lambda b, qi, ki: (0, 0, 0)),  # wk
            _resident_spec((nhead, 1, dh), lambda b, qi, ki: (0, 0, 0)),  # bk
            _resident_spec((nhead, D, dh), lambda b, qi, ki: (0, 0, 0)),  # wv
            _resident_spec((nhead, 1, dh), lambda b, qi, ki: (0, 0, 0)),  # bv
            _resident_spec((nhead, dh, D), lambda b, qi, ki: (0, 0, 0)),  # wo
            _resident_spec((1, D), lambda b, qi, ki: (0, 0)),             # bo
            _resident_spec((1, D), lambda b, qi, ki: (0, 0)),             # gamma
            _resident_spec((1, D), lambda b, qi, ki: (0, 0)),             # beta
        ],
        out_specs=pl.BlockSpec((1, tq, D), lambda b, qi, ki: (b, qi, 0)),
        scratch_shapes=[
            pltpu.VMEM((nhead, tq, dh), jnp.bfloat16),   # cached Q heads
            pltpu.VMEM((nhead, tq, 1), jnp.float32),     # m (running max)
            pltpu.VMEM((nhead, tq, 1), jnp.float32),     # l (running sum)
            pltpu.VMEM((nhead, tq, dh), jnp.float32),    # acc (running PV)
        ],
        compiler_params=pltpu.CompilerParams(
            dimension_semantics=("parallel", "parallel", "arbitrary"),
            vmem_limit_bytes=_VMEM_LIMIT),
    )(q_src, kv_src, p["wq"], p["bq"], p["wk"], p["bk"], p["wv"], p["bv"],
      p["wo"], p["bo"], gamma, beta)


def ffn_ln_block(x, w1, b1, w2, b2, gamma, beta):
    """x: (M, D). Grid over (row tiles, F chunks); F axis is the reduction."""
    M, D = x.shape
    F = w1.shape[1]
    tm = _ffn_row_tile(M)
    tf = _ffn_f_tile(F)
    return pl.pallas_call(
        ffn_ln_kernel,
        out_shape=jax.ShapeDtypeStruct((M, D), x.dtype),
        grid=(M // tm, F // tf),
        in_specs=[
            pl.BlockSpec((tm, D), lambda i, f: (i, 0)),
            pl.BlockSpec((D, tf), lambda i, f: (0, f)),     # w1 chunk
            pl.BlockSpec((1, tf), lambda i, f: (0, f)),     # b1 chunk
            pl.BlockSpec((tf, D), lambda i, f: (f, 0)),     # w2 chunk
            _resident_spec((1, D), lambda i, f: (0, 0)),    # b2
            _resident_spec((1, D), lambda i, f: (0, 0)),    # gamma
            _resident_spec((1, D), lambda i, f: (0, 0)),    # beta
        ],
        out_specs=pl.BlockSpec((tm, D), lambda i, f: (i, 0)),
        scratch_shapes=[pltpu.VMEM((tm, D), jnp.float32)],
        compiler_params=pltpu.CompilerParams(
            dimension_semantics=("parallel", "arbitrary"),
            vmem_limit_bytes=_VMEM_LIMIT),
    )(x, w1, b1, w2, b2, gamma, beta)


# ----------------------------------------------------------------------------
# TransformerDecoderLayer forward (dropout = identity, eval mode)
# ----------------------------------------------------------------------------
def transformer_decoder_layer(tgt, memory, prepped, nhead):
    T, B, D = tgt.shape
    x = jnp.transpose(tgt, (1, 0, 2))        # (B, T, D)
    mem = jnp.transpose(memory, (1, 0, 2))   # (B, S, D)

    # self-attention block (q = k = v = tgt)
    x = attention_block(x, x, prepped["self_attn"],
                        prepped["norm1_gamma"], prepped["norm1_beta"], nhead)
    # cross-attention block (k = v = memory)
    x = attention_block(x, mem, prepped["multihead_attn"],
                        prepped["norm2_gamma"], prepped["norm2_beta"], nhead)
    # feed-forward block
    y = ffn_ln_block(x.reshape(B * T, D),
                     prepped["w1"], prepped["b1"], prepped["w2"], prepped["b2"],
                     prepped["norm3_gamma"], prepped["norm3_beta"])
    return jnp.transpose(y.reshape(B, T, D), (1, 0, 2))


# ----------------------------------------------------------------------------
# Parameters: PyTorch-layout init + one-time prep (head-major, bf16, folding)
# ----------------------------------------------------------------------------
def init_params(key, d_model, nhead, dim_feedforward):
    ks = jax.random.split(key, 12)
    s = 0.02

    def mha_params(k0, k1, k2, k3):
        return {
            "in_proj_weight": s * jax.random.normal(k0, (3 * d_model, d_model), jnp.float32),
            "in_proj_bias": s * jax.random.normal(k1, (3 * d_model,), jnp.float32),
            "out_proj_weight": s * jax.random.normal(k2, (d_model, d_model), jnp.float32),
            "out_proj_bias": s * jax.random.normal(k3, (d_model,), jnp.float32),
        }

    return {
        "self_attn": mha_params(ks[0], ks[1], ks[2], ks[3]),
        "multihead_attn": mha_params(ks[4], ks[5], ks[6], ks[7]),
        "linear1_weight": s * jax.random.normal(ks[8], (dim_feedforward, d_model), jnp.float32),
        "linear1_bias": s * jax.random.normal(ks[9], (dim_feedforward,), jnp.float32),
        "linear2_weight": s * jax.random.normal(ks[10], (d_model, dim_feedforward), jnp.float32),
        "linear2_bias": s * jax.random.normal(ks[11], (d_model,), jnp.float32),
        "norm1_gamma": jnp.ones((d_model,), jnp.float32),
        "norm1_beta": jnp.zeros((d_model,), jnp.float32),
        "norm2_gamma": jnp.ones((d_model,), jnp.float32),
        "norm2_beta": jnp.zeros((d_model,), jnp.float32),
        "norm3_gamma": jnp.ones((d_model,), jnp.float32),
        "norm3_beta": jnp.zeros((d_model,), jnp.float32),
    }


def prepare_params(params, nhead):
    """Run ONCE outside jit: head-major bf16 weights, fold 1/sqrt(dh) into Q."""
    d_model = params["norm1_gamma"].shape[0]
    assert d_model % nhead == 0
    dh = d_model // nhead
    scale = 1.0 / float(dh) ** 0.5

    def head_major_in(wt):     # (D, D) in->out  ->  (H, D, dh)
        return jnp.transpose(wt.reshape(d_model, nhead, dh), (1, 0, 2))

    def head_major_bias(b):    # (D,) -> (H, 1, dh)
        return b.reshape(nhead, 1, dh)

    def prep_mha(p):
        w = p["in_proj_weight"]            # (3D, D), rows = [q | k | v]
        b = p["in_proj_bias"]              # (3D,)
        wq = jnp.transpose(w[:d_model]) * scale
        wk = jnp.transpose(w[d_model:2 * d_model])
        wv = jnp.transpose(w[2 * d_model:])
        wo_t = jnp.transpose(p["out_proj_weight"])     # (D, D) in->out
        return {
            "wq": head_major_in(wq).astype(jnp.bfloat16),
            "bq": head_major_bias(b[:d_model] * scale),
            "wk": head_major_in(wk).astype(jnp.bfloat16),
            "bk": head_major_bias(b[d_model:2 * d_model]),
            "wv": head_major_in(wv).astype(jnp.bfloat16),
            "bv": head_major_bias(b[2 * d_model:]),
            "wo": wo_t.reshape(nhead, dh, d_model).astype(jnp.bfloat16),
            "bo": p["out_proj_bias"].reshape(1, d_model),
        }

    return {
        "self_attn": prep_mha(params["self_attn"]),
        "multihead_attn": prep_mha(params["multihead_attn"]),
        "w1": jnp.transpose(params["linear1_weight"]).astype(jnp.bfloat16),  # (D, F)
        "b1": params["linear1_bias"].reshape(1, -1),
        "w2": jnp.transpose(params["linear2_weight"]).astype(jnp.bfloat16),  # (F, D)
        "b2": params["linear2_bias"].reshape(1, -1),
        "norm1_gamma": params["norm1_gamma"].reshape(1, -1),
        "norm1_beta": params["norm1_beta"].reshape(1, -1),
        "norm2_gamma": params["norm2_gamma"].reshape(1, -1),
        "norm2_beta": params["norm2_beta"].reshape(1, -1),
        "norm3_gamma": params["norm3_gamma"].reshape(1, -1),
        "norm3_beta": params["norm3_beta"].reshape(1, -1),
    }


if __name__ == "__main__":
    d_model = 32
    nhead = 4
    dim_feedforward = 64
    T = 8      # target sequence length
    S = 8      # memory sequence length
    B = 2      # batch

    key = jax.random.PRNGKey(0)
    k_tgt, k_mem, k_par = jax.random.split(key, 3)

    tgt = jax.random.normal(k_tgt, (T, B, d_model), jnp.float32)
    memory = jax.random.normal(k_mem, (S, B, d_model), jnp.float32)
    params = init_params(k_par, d_model, nhead, dim_feedforward)
    prepped = prepare_params(params, nhead)   # one-time weight prep, outside jit

    fwd = jax.jit(functools.partial(transformer_decoder_layer, nhead=nhead))
    out = fwd(tgt, memory, prepped)
    out = jax.block_until_ready(out)
    assert out.shape == (T, B, d_model)
    assert bool(jnp.all(jnp.isfinite(out)))
    print("KERNEL_OK")
</pallas_src>

<mosaic_0001>
module attributes {stable_mosaic.version = 11 : i64} {
  func.func @attn_flash_kernel(%arg0: i32, %arg1: i32, %arg2: i32, %arg3: memref<1x8x32xf32, #tpu.memory_space<vmem>>, %arg4: memref<1x8x32xf32, #tpu.memory_space<vmem>>, %arg5: memref<4x32x8xbf16, #tpu.memory_space<vmem>>, %arg6: memref<4x1x8xf32, #tpu.memory_space<vmem>>, %arg7: memref<4x32x8xbf16, #tpu.memory_space<vmem>>, %arg8: memref<4x1x8xf32, #tpu.memory_space<vmem>>, %arg9: memref<4x32x8xbf16, #tpu.memory_space<vmem>>, %arg10: memref<4x1x8xf32, #tpu.memory_space<vmem>>, %arg11: memref<4x8x32xbf16, #tpu.memory_space<vmem>>, %arg12: memref<1x32xf32, #tpu.memory_space<vmem>>, %arg13: memref<1x32xf32, #tpu.memory_space<vmem>>, %arg14: memref<1x32xf32, #tpu.memory_space<vmem>>, %arg15: memref<1x8x32xf32, #tpu.memory_space<vmem>>, %arg16: memref<4x8x8xbf16, #tpu.memory_space<vmem>>, %arg17: memref<4x8x1xf32, #tpu.memory_space<vmem>>, %arg18: memref<4x8x1xf32, #tpu.memory_space<vmem>>, %arg19: memref<4x8x8xf32, #tpu.memory_space<vmem>>) attributes {dimension_semantics = [#tpu.dimension_semantics<parallel>, #tpu.dimension_semantics<parallel>, #tpu.dimension_semantics<arbitrary>], iteration_bounds = array<i64: 2, 1, 1>, scalar_prefetch = 0 : i64, scratch_operands = 4 : i64, tpu.core_type = #tpu.core_type<tc>, window_params = [{transform_indices = @transform_0, window_bounds = array<i64: 1, 8, 32>}, {transform_indices = @transform_1, window_bounds = array<i64: 1, 8, 32>}, {pipeline_mode = #tpu.pipeline_mode<synchronous>, transform_indices = @transform_2, window_bounds = array<i64: 4, 32, 8>}, {pipeline_mode = #tpu.pipeline_mode<synchronous>, transform_indices = @transform_3, window_bounds = array<i64: 4, 1, 8>}, {pipeline_mode = #tpu.pipeline_mode<synchronous>, transform_indices = @transform_4, window_bounds = array<i64: 4, 32, 8>}, {pipeline_mode = #tpu.pipeline_mode<synchronous>, transform_indices = @transform_5, window_bounds = array<i64: 4, 1, 8>}, {pipeline_mode = #tpu.pipeline_mode<synchronous>, transform_indices = @transform_6, window_bounds = array<i64: 4, 32, 8>}, {pipeline_mode = #tpu.pipeline_mode<synchronous>, transform_indices = @transform_7, window_bounds = array<i64: 4, 1, 8>}, {pipeline_mode = #tpu.pipeline_mode<synchronous>, transform_indices = @transform_8, window_bounds = array<i64: 4, 8, 32>}, {pipeline_mode = #tpu.pipeline_mode<synchronous>, transform_indices = @transform_9, window_bounds = array<i64: 1, 32>}, {pipeline_mode = #tpu.pipeline_mode<synchronous>, transform_indices = @transform_10, window_bounds = array<i64: 1, 32>}, {pipeline_mode = #tpu.pipeline_mode<synchronous>, transform_indices = @transform_11, window_bounds = array<i64: 1, 32>}, {transform_indices = @transform_12, window_bounds = array<i64: 1, 8, 32>}]} {
    %c0_i32 = arith.constant 0 : i32
    %0 = arith.cmpi eq, %arg2, %c0_i32 : i32
    %1 = arith.extui %0 : i1 to i32
    %c0_i32_0 = arith.constant 0 : i32
    %2 = arith.cmpi ne, %1, %c0_i32_0 : i32
    scf.if %2 {
      %c0_157 = arith.constant 0 : index
      %c0_158 = arith.constant 0 : index
      %c0_159 = arith.constant 0 : index
      %213 = vector.load %arg3[%c0_157, %c0_158, %c0_159] : memref<1x8x32xf32, #tpu.memory_space<vmem>>, vector<1x8x32xf32>
      %214 = vector.shape_cast %213 : vector<1x8x32xf32> to vector<8x32xf32>
      %215 = arith.truncf %214 : vector<8x32xf32> to vector<8x32xbf16>
      %c0_160 = arith.constant 0 : index
      %c0_161 = arith.constant 0 : index
      %c0_162 = arith.constant 0 : index
      %216 = vector.load %arg5[%c0_160, %c0_161, %c0_162] : memref<4x32x8xbf16, #tpu.memory_space<vmem>>, vector<1x32x8xbf16>
      %217 = vector.shape_cast %216 : vector<1x32x8xbf16> to vector<32x8xbf16>
      %cst_163 = arith.constant dense<0.000000e+00> : vector<8x8xf32>
      %218 = tpu.matmul %215, %217, %cst_163 {dimension_numbers = #tpu.dot_dimension_numbers<[1], [0], [0], [1], [0, 0, 1, 1], [], []>} : vector<8x32xbf16>, vector<32x8xbf16>, vector<8x8xf32> -> vector<8x8xf32>
      %c0_164 = arith.constant 0 : index
      %c0_165 = arith.constant 0 : index
      %c0_166 = arith.constant 0 : index
      %219 = vector.load %arg6[%c0_164, %c0_165, %c0_166] : memref<4x1x8xf32, #tpu.memory_space<vmem>>, vector<1x1x8xf32>
      %220 = vector.shape_cast %219 : vector<1x1x8xf32> to vector<1x8xf32>
      %221 = vector.broadcast %220 : vector<1x8xf32> to vector<8x8xf32>
      %222 = arith.addf %218, %221 : vector<8x8xf32>
      %223 = arith.truncf %222 : vector<8x8xf32> to vector<8x8xbf16>
      %c0_167 = arith.constant 0 : index
      %c0_168 = arith.constant 0 : index
      %c0_169 = arith.constant 0 : index
      %224 = vector.load %arg16[%c0_167, %c0_168, %c0_169] : memref<4x8x8xbf16, #tpu.memory_space<vmem>>, vector<1x8x8xbf16>
      %225 = vector.shape_cast %224 : vector<1x8x8xbf16> to vector<8x8xbf16>
      %226 = vector.shape_cast %223 : vector<8x8xbf16> to vector<1x8x8xbf16>
      tpu.vector_store %arg16[%c0_167, %c0_168, %c0_169], %226 {strides = array<i32>} : memref<4x8x8xbf16, #tpu.memory_space<vmem>>, vector<1x8x8xbf16>,
      %c1_170 = arith.constant 1 : index
      %c0_171 = arith.constant 0 : index
      %c0_172 = arith.constant 0 : index
      %227 = vector.load %arg5[%c1_170, %c0_171, %c0_172] : memref<4x32x8xbf16, #tpu.memory_space<vmem>>, vector<1x32x8xbf16>
      %228 = vector.shape_cast %227 : vector<1x32x8xbf16> to vector<32x8xbf16>
      %cst_173 = arith.constant dense<0.000000e+00> : vector<8x8xf32>
      %229 = tpu.matmul %215, %228, %cst_173 {dimension_numbers = #tpu.dot_dimension_numbers<[1], [0], [0], [1], [0, 0, 1, 1], [], []>} : vector<8x32xbf16>, vector<32x8xbf16>, vector<8x8xf32> -> vector<8x8xf32>
      %c1_174 = arith.constant 1 : index
      %c0_175 = arith.constant 0 : index
      %c0_176 = arith.constant 0 : index
      %230 = vector.load %arg6[%c1_174, %c0_175, %c0_176] : memref<4x1x8xf32, #tpu.memory_space<vmem>>, vector<1x1x8xf32>
      %231 = vector.shape_cast %230 : vector<1x1x8xf32> to vector<1x8xf32>
      %232 = vector.broadcast %231 : vector<1x8xf32> to vector<8x8xf32>
      %233 = arith.addf %229, %232 : vector<8x8xf32>
      %234 = arith.truncf %233 : vector<8x8xf32> to vector<8x8xbf16>
      %c1_177 = arith.constant 1 : index
      %c0_178 = arith.constant 0 : index
      %c0_179 = arith.constant 0 : index
      %235 = vector.load %arg16[%c1_177, %c0_178, %c0_179] : memref<4x8x8xbf16, #tpu.memory_space<vmem>>, vector<1x8x8xbf16>
      %236 = vector.shape_cast %235 : vector<1x8x8xbf16> to vector<8x8xbf16>
      %237 = vector.shape_cast %234 : vector<8x8xbf16> to vector<1x8x8xbf16>
      tpu.vector_store %arg16[%c1_177, %c0_178, %c0_179], %237 {strides = array<i32>} : memref<4x8x8xbf16, #tpu.memory_space<vmem>>, vector<1x8x8xbf16>,
      %c2_180 = arith.constant 2 : index
      %c0_181 = arith.constant 0 : index
      %c0_182 = arith.constant 0 : index
      %238 = vector.load %arg5[%c2_180, %c0_181, %c0_182] : memref<4x32x8xbf16, #tpu.memory_space<vmem>>, vector<1x32x8xbf16>
      %239 = vector.shape_cast %238 : vector<1x32x8xbf16> to vector<32x8xbf16>
      %cst_183 = arith.constant dense<0.000000e+00> : vector<8x8xf32>
      %240 = tpu.matmul %215, %239, %cst_183 {dimension_numbers = #tpu.dot_dimension_numbers<[1], [0], [0], [1], [0, 0, 1, 1], [], []>} : vector<8x32xbf16>, vector<32x8xbf16>, vector<8x8xf32> -> vector<8x8xf32>
      %c2_184 = arith.constant 2 : index
      %c0_185 = arith.constant 0 : index
      %c0_186 = arith.constant 0 : index
      %241 = vector.load %arg6[%c2_184, %c0_185, %c0_186] : memref<4x1x8xf32, #tpu.memory_space<vmem>>, vector<1x1x8xf32>
      %242 = vector.shape_cast %241 : vector<1x1x8xf32> to vector<1x8xf32>
      %243 = vector.broadcast %242 : vector<1x8xf32> to vector<8x8xf32>
      %244 = arith.addf %240, %243 : vector<8x8xf32>
      %245 = arith.truncf %244 : vector<8x8xf32> to vector<8x8xbf16>
      %c2_187 = arith.constant 2 : index
      %c0_188 = arith.constant 0 : index
      %c0_189 = arith.constant 0 : index
      %246 = vector.load %arg16[%c2_187, %c0_188, %c0_189] : memref<4x8x8xbf16, #tpu.memory_space<vmem>>, vector<1x8x8xbf16>
      %247 = vector.shape_cast %246 : vector<1x8x8xbf16> to vector<8x8xbf16>
      %248 = vector.shape_cast %245 : vector<8x8xbf16> to vector<1x8x8xbf16>
      tpu.vector_store %arg16[%c2_187, %c0_188, %c0_189], %248 {strides = array<i32>} : memref<4x8x8xbf16, #tpu.memory_space<vmem>>, vector<1x8x8xbf16>,
      %c3_190 = arith.constant 3 : index
      %c0_191 = arith.constant 0 : index
      %c0_192 = arith.constant 0 : index
      %249 = vector.load %arg5[%c3_190, %c0_191, %c0_192] : memref<4x32x8xbf16, #tpu.memory_space<vmem>>, vector<1x32x8xbf16>
      %250 = vector.shape_cast %249 : vector<1x32x8xbf16> to vector<32x8xbf16>
      %cst_193 = arith.constant dense<0.000000e+00> : vector<8x8xf32>
      %251 = tpu.matmul %215, %250, %cst_193 {dimension_numbers = #tpu.dot_dimension_numbers<[1], [0], [0], [1], [0, 0, 1, 1], [], []>} : vector<8x32xbf16>, vector<32x8xbf16>, vector<8x8xf32> -> vector<8x8xf32>
      %c3_194 = arith.constant 3 : index
      %c0_195 = arith.constant 0 : index
      %c0_196 = arith.constant 0 : index
      %252 = vector.load %arg6[%c3_194, %c0_195, %c0_196] : memref<4x1x8xf32, #tpu.memory_space<vmem>>, vector<1x1x8xf32>
      %253 = vector.shape_cast %252 : vector<1x1x8xf32> to vector<1x8xf32>
      %254 = vector.broadcast %253 : vector<1x8xf32> to vector<8x8xf32>
      %255 = arith.addf %251, %254 : vector<8x8xf32>
      %256 = arith.truncf %255 : vector<8x8xf32> to vector<8x8xbf16>
      %c3_197 = arith.constant 3 : index
      %c0_198 = arith.constant 0 : index
      %c0_199 = arith.constant 0 : index
      %257 = vector.load %arg16[%c3_197, %c0_198, %c0_199] : memref<4x8x8xbf16, #tpu.memory_space<vmem>>, vector<1x8x8xbf16>
      %258 = vector.shape_cast %257 : vector<1x8x8xbf16> to vector<8x8xbf16>
      %259 = vector.shape_cast %256 : vector<8x8xbf16> to vector<1x8x8xbf16>
      tpu.vector_store %arg16[%c3_197, %c0_198, %c0_199], %259 {strides = array<i32>} : memref<4x8x8xbf16, #tpu.memory_space<vmem>>, vector<1x8x8xbf16>,
      %cst_200 = arith.constant 0xFF800000 : f32
      %260 = vector.broadcast %cst_200 : f32 to vector<4x8x1xf32>
      %c0_201 = arith.constant 0 : index
      %c0_202 = arith.constant 0 : index
      %c0_203 = arith.constant 0 : index
      %261 = vector.load %arg17[%c0_201, %c0_202, %c0_203] : memref<4x8x1xf32, #tpu.memory_space<vmem>>, vector<4x8x1xf32>
      tpu.vector_store %arg17[%c0_201, %c0_202, %c0_203], %260 {strides = array<i32>} : memref<4x8x1xf32, #tpu.memory_space<vmem>>, vector<4x8x1xf32>,
      %cst_204 = arith.constant 0.000000e+00 : f32
      %262 = vector.broadcast %cst_204 : f32 to vector<4x8x1xf32>
      %c0_205 = arith.constant 0 : index
      %c0_206 = arith.constant 0 : index
      %c0_207 = arith.constant 0 : index
      %263 = vector.load %arg18[%c0_205, %c0_206, %c0_207] : memref<4x8x1xf32, #tpu.memory_space<vmem>>, vector<4x8x1xf32>
      tpu.vector_store %arg18[%c0_205, %c0_206, %c0_207], %262 {strides = array<i32>} : memref<4x8x1xf32, #tpu.memory_space<vmem>>, vector<4x8x1xf32>,
      %cst_208 = arith.constant 0.000000e+00 : f32
      %264 = vector.broadcast %cst_208 : f32 to vector<4x8x8xf32>
      %c0_209 = arith.constant 0 : index
      %c0_210 = arith.constant 0 : index
      %c0_211 = arith.constant 0 : index
      %265 = vector.load %arg19[%c0_209, %c0_210, %c0_211] : memref<4x8x8xf32, #tpu.memory_space<vmem>>, vector<4x8x8xf32>
      tpu.vector_store %arg19[%c0_209, %c0_210, %c0_211], %264 {strides = array<i32>} : memref<4x8x8xf32, #tpu.memory_space<vmem>>, vector<4x8x8xf32>,
    } else {
    }
    %c0 = arith.constant 0 : index
    %c0_1 = arith.constant 0 : index
    %c0_2 = arith.constant 0 : index
    %3 = vector.load %arg4[%c0, %c0_1, %c0_2] : memref<1x8x32xf32, #tpu.memory_space<vmem>>, vector<1x8x32xf32>
    %4 = vector.shape_cast %3 : vector<1x8x32xf32> to vector<8x32xf32>
    %5 = arith.truncf %4 : vector<8x32xf32> to vector<8x32xbf16>
    %c0_3 = arith.constant 0 : index
    %c0_4 = arith.constant 0 : index
    %c0_5 = arith.constant 0 : index
    %6 = vector.load %arg7[%c0_3, %c0_4, %c0_5] : memref<4x32x8xbf16, #tpu.memory_space<vmem>>, vector<1x32x8xbf16>
    %7 = vector.shape_cast %6 : vector<1x32x8xbf16> to vector<32x8xbf16>
    %cst = arith.constant dense<0.000000e+00> : vector<8x8xf32>
    %8 = tpu.matmul %5, %7, %cst {dimension_numbers = #tpu.dot_dimension_numbers<[1], [0], [0], [1], [0, 0, 1, 1], [], []>} : vector<8x32xbf16>, vector<32x8xbf16>, vector<8x8xf32> -> vector<8x8xf32>
    %c0_6 = arith.constant 0 : index
    %c0_7 = arith.constant 0 : index
    %c0_8 = arith.constant 0 : index
    %9 = vector.load %arg8[%c0_6, %c0_7, %c0_8] : memref<4x1x8xf32, #tpu.memory_space<vmem>>, vector<1x1x8xf32>
    %10 = vector.shape_cast %9 : vector<1x1x8xf32> to vector<1x8xf32>
    %11 = vector.broadcast %10 : vector<1x8xf32> to vector<8x8xf32>
    %12 = arith.addf %8, %11 : vector<8x8xf32>
    %13 = arith.truncf %12 : vector<8x8xf32> to vector<8x8xbf16>
    %c0_9 = arith.constant 0 : index
    %c0_10 = arith.constant 0 : index
    %c0_11 = arith.constant 0 : index
    %14 = vector.load %arg9[%c0_9, %c0_10, %c0_11] : memref<4x32x8xbf16, #tpu.memory_space<vmem>>, vector<1x32x8xbf16>
    %15 = vector.shape_cast %14 : vector<1x32x8xbf16> to vector<32x8xbf16>
    %cst_12 = arith.constant dense<0.000000e+00> : vector<8x8xf32>
    %16 = tpu.matmul %5, %15, %cst_12 {dimension_numbers = #tpu.dot_dimension_numbers<[1], [0], [0], [1], [0, 0, 1, 1], [], []>} : vector<8x32xbf16>, vector<32x8xbf16>, vector<8x8xf32> -> vector<8x8xf32>
    %c0_13 = arith.constant 0 : index
    %c0_14 = arith.constant 0 : index
    %c0_15 = arith.constant 0 : index
    %17 = vector.load %arg10[%c0_13, %c0_14, %c0_15] : memref<4x1x8xf32, #tpu.memory_space<vmem>>, vector<1x1x8xf32>
    %18 = vector.shape_cast %17 : vector<1x1x8xf32> to vector<1x8xf32>
    %19 = vector.broadcast %18 : vector<1x8xf32> to vector<8x8xf32>
    %20 = arith.addf %16, %19 : vector<8x8xf32>
    %21 = arith.truncf %20 : vector<8x8xf32> to vector<8x8xbf16>
    %c0_16 = arith.constant 0 : index
    %c0_17 = arith.constant 0 : index
    %c0_18 = arith.constant 0 : index
    %22 = vector.load %arg16[%c0_16, %c0_17, %c0_18] : memref<4x8x8xbf16, #tpu.memory_space<vmem>>, vector<1x8x8xbf16>
    %23 = vector.shape_cast %22 : vector<1x8x8xbf16> to vector<8x8xbf16>
    %cst_19 = arith.constant dense<0.000000e+00> : vector<8x8xf32>
    %24 = tpu.matmul %23, %13, %cst_19 {dimension_numbers = #tpu.dot_dimension_numbers<[1], [1], [0], [0], [0, 0, 1, 0], [], []>} : vector<8x8xbf16>, vector<8x8xbf16>, vector<8x8xf32> -> vector<8x8xf32>
    %c0_20 = arith.constant 0 : index
    %c0_21 = arith.constant 0 : index
    %c0_22 = arith.constant 0 : index
    %25 = vector.load %arg17[%c0_20, %c0_21, %c0_22] : memref<4x8x1xf32, #tpu.memory_space<vmem>>, vector<1x8x1xf32>
    %26 = vector.shape_cast %25 : vector<1x8x1xf32> to vector<8x1xf32>
    %cst_23 = arith.constant dense<0xFF800000> : vector<8xf32>
    %27 = vector.multi_reduction <maximumf>, %24, %cst_23 [1] : vector<8x8xf32> to vector<8xf32>
    %28 = vector.shape_cast %27 : vector<8xf32> to vector<8x1xf32>
    %29 = arith.maximumf %26, %28 : vector<8x1xf32>
    %30 = arith.subf %26, %29 : vector<8x1xf32>
    %31 = math.exp %30 : vector<8x1xf32>
    %32 = vector.broadcast %29 : vector<8x1xf32> to vector<8x8xf32>
    %33 = arith.subf %24, %32 : vector<8x8xf32>
    %34 = math.exp %33 : vector<8x8xf32>
    %c0_24 = arith.constant 0 : index
    %c0_25 = arith.constant 0 : index
    %c0_26 = arith.constant 0 : index
    %35 = vector.load %arg18[%c0_24, %c0_25, %c0_26] : memref<4x8x1xf32, #tpu.memory_space<vmem>>, vector<1x8x1xf32>
    %36 = vector.shape_cast %35 : vector<1x8x1xf32> to vector<8x1xf32>
    %37 = arith.mulf %31, %36 : vector<8x1xf32>
    %cst_27 = arith.constant dense<0.000000e+00> : vector<8xf32>
    %38 = vector.multi_reduction <add>, %34, %cst_27 [1] : vector<8x8xf32> to vector<8xf32>
    %39 = vector.shape_cast %38 : vector<8xf32> to vector<8x1xf32>
    %40 = arith.addf %37, %39 : vector<8x1xf32>
    %c0_28 = arith.constant 0 : index
    %c0_29 = arith.constant 0 : index
    %c0_30 = arith.constant 0 : index
    %41 = vector.load %arg18[%c0_28, %c0_29, %c0_30] : memref<4x8x1xf32, #tpu.memory_space<vmem>>, vector<1x8x1xf32>
    %42 = vector.shape_cast %41 : vector<1x8x1xf32> to vector<8x1xf32>
    %43 = vector.shape_cast %40 : vector<8x1xf32> to vector<1x8x1xf32>
    tpu.vector_store %arg18[%c0_28, %c0_29, %c0_30], %43 {strides = array<i32>} : memref<4x8x1xf32, #tpu.memory_space<vmem>>, vector<1x8x1xf32>,
    %c0_31 = arith.constant 0 : index
    %c0_32 = arith.constant 0 : index
    %c0_33 = arith.constant 0 : index
    %44 = vector.load %arg19[%c0_31, %c0_32, %c0_33] : memref<4x8x8xf32, #tpu.memory_space<vmem>>, vector<1x8x8xf32>
    %45 = vector.shape_cast %44 : vector<1x8x8xf32> to vector<8x8xf32>
    %46 = vector.broadcast %31 : vector<8x1xf32> to vector<8x8xf32>
    %47 = arith.mulf %46, %45 : vector<8x8xf32>
    %48 = arith.truncf %34 : vector<8x8xf32> to vector<8x8xbf16>
    %cst_34 = arith.constant dense<0.000000e+00> : vector<8x8xf32>
    %49 = tpu.matmul %48, %21, %cst_34 {dimension_numbers = #tpu.dot_dimension_numbers<[1], [0], [0], [1], [0, 0, 1, 1], [], []>} : vector<8x8xbf16>, vector<8x8xbf16>, vector<8x8xf32> -> vector<8x8xf32>
    %50 = arith.addf %47, %49 : vector<8x8xf32>
    %c0_35 = arith.constant 0 : index
    %c0_36 = arith.constant 0 : index
    %c0_37 = arith.constant 0 : index
    %51 = vector.load %arg19[%c0_35, %c0_36, %c0_37] : memref<4x8x8xf32, #tpu.memory_space<vmem>>, vector<1x8x8xf32>
    %52 = vector.shape_cast %51 : vector<1x8x8xf32> to vector<8x8xf32>
    %53 = vector.shape_cast %50 : vector<8x8xf32> to vector<1x8x8xf32>
    tpu.vector_store %arg19[%c0_35, %c0_36, %c0_37], %53 {strides = array<i32>} : memref<4x8x8xf32, #tpu.memory_space<vmem>>, vector<1x8x8xf32>,
    %c0_38 = arith.constant 0 : index
    %c0_39 = arith.constant 0 : index
    %c0_40 = arith.constant 0 : index
    %54 = vector.load %arg17[%c0_38, %c0_39, %c0_40] : memref<4x8x1xf32, #tpu.memory_space<vmem>>, vector<1x8x1xf32>
    %55 = vector.shape_cast %54 : vector<1x8x1xf32> to vector<8x1xf32>
    %56 = vector.shape_cast %29 : vector<8x1xf32> to vector<1x8x1xf32>
    tpu.vector_store %arg17[%c0_38, %c0_39, %c0_40], %56 {strides = array<i32>} : memref<4x8x1xf32, #tpu.memory_space<vmem>>, vector<1x8x1xf32>,
    %c1 = arith.constant 1 : index
    %c0_41 = arith.constant 0 : index
    %c0_42 = arith.constant 0 : index
    %57 = vector.load %arg7[%c1, %c0_41, %c0_42] : memref<4x32x8xbf16, #tpu.memory_space<vmem>>, vector<1x32x8xbf16>
    %58 = vector.shape_cast %57 : vector<1x32x8xbf16> to vector<32x8xbf16>
    %cst_43 = arith.constant dense<0.000000e+00> : vector<8x8xf32>
    %59 = tpu.matmul %5, %58, %cst_43 {dimension_numbers = #tpu.dot_dimension_numbers<[1], [0], [0], [1], [0, 0, 1, 1], [], []>} : vector<8x32xbf16>, vector<32x8xbf16>, vector<8x8xf32> -> vector<8x8xf32>
    %c1_44 = arith.constant 1 : index
    %c0_45 = arith.constant 0 : index
    %c0_46 = arith.constant 0 : index
    %60 = vector.load %arg8[%c1_44, %c0_45, %c0_46] : memref<4x1x8xf32, #tpu.memory_space<vmem>>, vector<1x1x8xf32>
    %61 = vector.shape_cast %60 : vector<1x1x8xf32> to vector<1x8xf32>
    %62 = vector.broadcast %61 : vector<1x8xf32> to vector<8x8xf32>
    %63 = arith.addf %59, %62 : vector<8x8xf32>
    %64 = arith.truncf %63 : vector<8x8xf32> to vector<8x8xbf16>
    %c1_47 = arith.constant 1 : index
    %c0_48 = arith.constant 0 : index
    %c0_49 = arith.constant 0 : index
    %65 = vector.load %arg9[%c1_47, %c0_48, %c0_49] : memref<4x32x8xbf16, #tpu.memory_space<vmem>>, vector<1x32x8xbf16>
    %66 = vector.shape_cast %65 : vector<1x32x8xbf16> to vector<32x8xbf16>
    %cst_50 = arith.constant dense<0.000000e+00> : vector<8x8xf32>
    %67 = tpu.matmul %5, %66, %cst_50 {dimension_numbers = #tpu.dot_dimension_numbers<[1], [0], [0], [1], [0, 0, 1, 1], [], []>} : vector<8x32xbf16>, vector<32x8xbf16>, vector<8x8xf32> -> vector<8x8xf32>
    %c1_51 = arith.constant 1 : index
    %c0_52 = arith.constant 0 : index
    %c0_53 = arith.constant 0 : index
    %68 = vector.load %arg10[%c1_51, %c0_52, %c0_53] : memref<4x1x8xf32, #tpu.memory_space<vmem>>, vector<1x1x8xf32>
    %69 = vector.shape_cast %68 : vector<1x1x8xf32> to vector<1x8xf32>
    %70 = vector.broadcast %69 : vector<1x8xf32> to vector<8x8xf32>
    %71 = arith.addf %67, %70 : vector<8x8xf32>
    %72 = arith.truncf %71 : vector<8x8xf32> to vector<8x8xbf16>
    %c1_54 = arith.constant 1 : index
    %c0_55 = arith.constant 0 : index
    %c0_56 = arith.constant 0 : index
    %73 = vector.load %arg16[%c1_54, %c0_55, %c0_56] : memref<4x8x8xbf16, #tpu.memory_space<vmem>>, vector<1x8x8xbf16>
    %74 = vector.shape_cast %73 : vector<1x8x8xbf16> to vector<8x8xbf16>
    %cst_57 = arith.constant dense<0.000000e+00> : vector<8x8xf32>
    %75 = tpu.matmul %74, %64, %cst_57 {dimension_numbers = #tpu.dot_dimension_numbers<[1], [1], [0], [0], [0, 0, 1, 0], [], []>} : vector<8x8xbf16>, vector<8x8xbf16>, vector<8x8xf32> -> vector<8x8xf32>
    %c1_58 = arith.constant 1 : index
    %c0_59 = arith.constant 0 : index
    %c0_60 = arith.constant 0 : index
    %76 = vector.load %arg17[%c1_58, %c0_59, %c0_60] : memref<4x8x1xf32, #tpu.memory_space<vmem>>, vector<1x8x1xf32>
    %77 = vector.shape_cast %76 : vector<1x8x1xf32> to vector<8x1xf32>
    %cst_61 = arith.constant dense<0xFF800000> : vector<8xf32>
    %78 = vector.multi_reduction <maximumf>, %75, %cst_61 [1] : vector<8x8xf32> to vector<8xf32>
    %79 = vector.shape_cast %78 : vector<8xf32> to vector<8x1xf32>
    %80 = arith.maximumf %77, %79 : vector<8x1xf32>
    %81 = arith.subf %77, %80 : vector<8x1xf32>
    %82 = math.exp %81 : vector<8x1xf32>
    %83 = vector.broadcast %80 : vector<8x1xf32> to vector<8x8xf32>
    %84 = arith.subf %75, %83 : vector<8x8xf32>
    %85 = math.exp %84 : vector<8x8xf32>
    %c1_62 = arith.constant 1 : index
    %c0_63 = arith.constant 0 : index
    %c0_64 = arith.constant 0 : index
    %86 = vector.load %arg18[%c1_62, %c0_63, %c0_64] : memref<4x8x1xf32, #tpu.memory_space<vmem>>, vector<1x8x1xf32>
    %87 = vector.shape_cast %86 : vector<1x8x1xf32> to vector<8x1xf32>
    %88 = arith.mulf %82, %87 : vector<8x1xf32>
    %cst_65 = arith.constant dense<0.000000e+00> : vector<8xf32>
    %89 = vector.multi_reduction <add>, %85, %cst_65 [1] : vector<8x8xf32> to vector<8xf32>
    %90 = vector.shape_cast %89 : vector<8xf32> to vector<8x1xf32>
    %91 = arith.addf %88, %90 : vector<8x1xf32>
    %c1_66 = arith.constant 1 : index
    %c0_67 = arith.constant 0 : index
    %c0_68 = arith.constant 0 : index
    %92 = vector.load %arg18[%c1_66, %c0_67, %c0_68] : memref<4x8x1xf32, #tpu.memory_space<vmem>>, vector<1x8x1xf32>
    %93 = vector.shape_cast %92 : vector<1x8x1xf32> to vector<8x1xf32>
    %94 = vector.shape_cast %91 : vector<8x1xf32> to vector<1x8x1xf32>
    tpu.vector_store %arg18[%c1_66, %c0_67, %c0_68], %94 {strides = array<i32>} : memref<4x8x1xf32, #tpu.memory_space<vmem>>, vector<1x8x1xf32>,
    %c1_69 = arith.constant 1 : index
    %c0_70 = arith.constant 0 : index
    %c0_71 = arith.constant 0 : index
    %95 = vector.load %arg19[%c1_69, %c0_70, %c0_71] : memref<4x8x8xf32, #tpu.memory_space<vmem>>, vector<1x8x8xf32>
    %96 = vector.shape_cast %95 : vector<1x8x8xf32> to vector<8x8xf32>
    %97 = vector.broadcast %82 : vector<8x1xf32> to vector<8x8xf32>
    %98 = arith.mulf %97, %96 : vector<8x8xf32>
    %99 = arith.truncf %85 : vector<8x8xf32> to vector<8x8xbf16>
    %cst_72 = arith.constant dense<0.000000e+00> : vector<8x8xf32>
    %100 = tpu.matmul %99, %72, %cst_72 {dimension_numbers = #tpu.dot_dimension_numbers<[1], [0], [0], [1], [0, 0, 1, 1], [], []>} : vector<8x8xbf16>, vector<8x8xbf16>, vector<8x8xf32> -> vector<8x8xf32>
    %101 = arith.addf %98, %100 : vector<8x8xf32>
    %c1_73 = arith.constant 1 : index
    %c0_74 = arith.constant 0 : index
    %c0_75 = arith.constant 0 : index
    %102 = vector.load %arg19[%c1_73, %c0_74, %c0_75] : memref<4x8x8xf32, #tpu.memory_space<vmem>>, vector<1x8x8xf32>
    %103 = vector.shape_cast %102 : vector<1x8x8xf32> to vector<8x8xf32>
    %104 = vector.shape_cast %101 : vector<8x8xf32> to vector<1x8x8xf32>
    tpu.vector_store %arg19[%c1_73, %c0_74, %c0_75], %104 {strides = array<i32>} : memref<4x8x8xf32, #tpu.memory_space<vmem>>, vector<1x8x8xf32>,
    %c1_76 = arith.constant 1 : index
    %c0_77 = arith.constant 0 : index
    %c0_78 = arith.constant 0 : index
    %105 = vector.load %arg17[%c1_76, %c0_77, %c0_78] : memref<4x8x1xf32, #tpu.memory_space<vmem>>, vector<1x8x1xf32>
    %106 = vector.shape_cast %105 : vector<1x8x1xf32> to vector<8x1xf32>
    %107 = vector.shape_cast %80 : vector<8x1xf32> to vector<1x8x1xf32>
    tpu.vector_store %arg17[%c1_76, %c0_77, %c0_78], %107 {strides = array<i32>} : memref<4x8x1xf32, #tpu.memory_space<vmem>>, vector<1x8x1xf32>,
    %c2 = arith.constant 2 : index
    %c0_79 = arith.constant 0 : index
    %c0_80 = arith.constant 0 : index
    %108 = vector.load %arg7[%c2, %c0_79, %c0_80] : memref<4x32x8xbf16, #tpu.memory_space<vmem>>, vector<1x32x8xbf16>
    %109 = vector.shape_cast %108 : vector<1x32x8xbf16> to vector<32x8xbf16>
    %cst_81 = arith.constant dense<0.000000e+00> : vector<8x8xf32>
    %110 = tpu.matmul %5, %109, %cst_81 {dimension_numbers = #tpu.dot_dimension_numbers<[1], [0], [0], [1], [0, 0, 1, 1], [], []>} : vector<8x32xbf16>, vector<32x8xbf16>, vector<8x8xf32> -> vector<8x8xf32>
    %c2_82 = arith.constant 2 : index
    %c0_83 = arith.constant 0 : index
    %c0_84 = arith.constant 0 : index
    %111 = vector.load %arg8[%c2_82, %c0_83, %c0_84] : memref<4x1x8xf32, #tpu.memory_space<vmem>>, vector<1x1x8xf32>
    %112 = vector.shape_cast %111 : vector<1x1x8xf32> to vector<1x8xf32>
    %113 = vector.broadcast %112 : vector<1x8xf32> to vector<8x8xf32>
    %114 = arith.addf %110, %113 : vector<8x8xf32>
    %115 = arith.truncf %114 : vector<8x8xf32> to vector<8x8xbf16>
    %c2_85 = arith.constant 2 : index
    %c0_86 = arith.constant 0 : index
    %c0_87 = arith.constant 0 : index
    %116 = vector.load %arg9[%c2_85, %c0_86, %c0_87] : memref<4x32x8xbf16, #tpu.memory_space<vmem>>, vector<1x32x8xbf16>
    %117 = vector.shape_cast %116 : vector<1x32x8xbf16> to vector<32x8xbf16>
    %cst_88 = arith.constant dense<0.000000e+00> : vector<8x8xf32>
    %118 = tpu.matmul %5, %117, %cst_88 {dimension_numbers = #tpu.dot_dimension_numbers<[1], [0], [0], [1], [0, 0, 1, 1], [], []>} : vector<8x32xbf16>, vector<32x8xbf16>, vector<8x8xf32> -> vector<8x8xf32>
    %c2_89 = arith.constant 2 : index
    %c0_90 = arith.constant 0 : index
    %c0_91 = arith.constant 0 : index
    %119 = vector.load %arg10[%c2_89, %c0_90, %c0_91] : memref<4x1x8xf32, #tpu.memory_space<vmem>>, vector<1x1x8xf32>
    %120 = vector.shape_cast %119 : vector<1x1x8xf32> to vector<1x8xf32>
    %121 = vector.broadcast %120 : vector<1x8xf32> to vector<8x8xf32>
    %122 = arith.addf %118, %121 : vector<8x8xf32>
    %123 = arith.truncf %122 : vector<8x8xf32> to vector<8x8xbf16>
    %c2_92 = arith.constant 2 : index
    %c0_93 = arith.constant 0 : index
    %c0_94 = arith.constant 0 : index
    %124 = vector.load %arg16[%c2_92, %c0_93, %c0_94] : memref<4x8x8xbf16, #tpu.memory_space<vmem>>, vector<1x8x8xbf16>
    %125 = vector.shape_cast %124 : vector<1x8x8xbf16> to vector<8x8xbf16>
    %cst_95 = arith.constant dense<0.000000e+00> : vector<8x8xf32>
    %126 = tpu.matmul %125, %115, %cst_95 {dimension_numbers = #tpu.dot_dimension_numbers<[1], [1], [0], [0], [0, 0, 1, 0], [], []>} : vector<8x8xbf16>, vector<8x8xbf16>, vector<8x8xf32> -> vector<8x8xf32>
    %c2_96 = arith.constant 2 : index
    %c0_97 = arith.constant 0 : index
    %c0_98 = arith.constant 0 : index
    %127 = vector.load %arg17[%c2_96, %c0_97, %c0_98] : memref<4x8x1xf32, #tpu.memory_space<vmem>>, vector<1x8x1xf32>
    %128 = vector.shape_cast %127 : vector<1x8x1xf32> to vector<8x1xf32>
    %cst_99 = arith.constant dense<0xFF800000> : vector<8xf32>
    %129 = vector.multi_reduction <maximumf>, %126, %cst_99 [1] : vector<8x8xf32> to vector<8xf32>
    %130 = vector.shape_cast %129 : vector<8xf32> to vector<8x1xf32>
    %131 = arith.maximumf %128, %130 : vector<8x1xf32>
    %132 = arith.subf %128, %131 : vector<8x1xf32>
    %133 = math.exp %132 : vector<8x1xf32>
    %134 = vector.broadcast %131 : vector<8x1xf32> to vector<8x8xf32>
    %135 = arith.subf %126, %134 : vector<8x8xf32>
    %136 = math.exp %135 : vector<8x8xf32>
    %c2_100 = arith.constant 2 : index
    %c0_101 = arith.constant 0 : index
    %c0_102 = arith.constant 0 : index
    %137 = vector.load %arg18[%c2_100, %c0_101, %c0_102] : memref<4x8x1xf32, #tpu.memory_space<vmem>>, vector<1x8x1xf32>
    %138 = vector.shape_cast %137 : vector<1x8x1xf32> to vector<8x1xf32>
    %139 = arith.mulf %133, %138 : vector<8x1xf32>
    %cst_103 = arith.constant dense<0.000000e+00> : vector<8xf32>
    %140 = vector.multi_reduction <add>, %136, %cst_103 [1] : vector<8x8xf32> to vector<8xf32>
    %141 = vector.shape_cast %140 : vector<8xf32> to vector<8x1xf32>
    %142 = arith.addf %139, %141 : vector<8x1xf32>
    %c2_104 = arith.constant 2 : index
    %c0_105 = arith.constant 0 : index
    %c0_106 = arith.constant 0 : index
    %143 = vector.load %arg18[%c2_104, %c0_105, %c0_106] : memref<4x8x1xf32, #tpu.memory_space<vmem>>, vector<1x8x1xf32>
    %144 = vector.shape_cast %143 : vector<1x8x1xf32> to vector<8x1xf32>
    %145 = vector.shape_cast %142 : vector<8x1xf32> to vector<1x8x1xf32>
    tpu.vector_store %arg18[%c2_104, %c0_105, %c0_106], %145 {strides = array<i32>} : memref<4x8x1xf32, #tpu.memory_space<vmem>>, vector<1x8x1xf32>,
    %c2_107 = arith.constant 2 : index
    %c0_108 = arith.constant 0 : index
    %c0_109 = arith.constant 0 : index
    %146 = vector.load %arg19[%c2_107, %c0_108, %c0_109] : memref<4x8x8xf32, #tpu.memory_space<vmem>>, vector<1x8x8xf32>
    %147 = vector.shape_cast %146 : vector<1x8x8xf32> to vector<8x8xf32>
    %148 = vector.broadcast %133 : vector<8x1xf32> to vector<8x8xf32>
    %149 = arith.mulf %148, %147 : vector<8x8xf32>
    %150 = arith.truncf %136 : vector<8x8xf32> to vector<8x8xbf16>
    %cst_110 = arith.constant dense<0.000000e+00> : vector<8x8xf32>
    %151 = tpu.matmul %150, %123, %cst_110 {dimension_numbers = #tpu.dot_dimension_numbers<[1], [0], [0], [1], [0, 0, 1, 1], [], []>} : vector<8x8xbf16>, vector<8x8xbf16>, vector<8x8xf32> -> vector<8x8xf32>
    %152 = arith.addf %149, %151 : vector<8x8xf32>
    %c2_111 = arith.constant 2 : index
    %c0_112 = arith.constant 0 : index
    %c0_113 = arith.constant 0 : index
    %153 = vector.load %arg19[%c2_111, %c0_112, %c0_113] : memref<4x8x8xf32, #tpu.memory_space<vmem>>, vector<1x8x8xf32>
    %154 = vector.shape_cast %153 : vector<1x8x8xf32> to vector<8x8xf32>
    %155 = vector.shape_cast %152 : vector<8x8xf32> to vector<1x8x8xf32>
    tpu.vector_store %arg19[%c2_111, %c0_112, %c0_113], %155 {strides = array<i32>} : memref<4x8x8xf32, #tpu.memory_space<vmem>>, vector<1x8x8xf32>,
    %c2_114 = arith.constant 2 : index
    %c0_115 = arith.constant 0 : index
    %c0_116 = arith.constant 0 : index
    %156 = vector.load %arg17[%c2_114, %c0_115, %c0_116] : memref<4x8x1xf32, #tpu.memory_space<vmem>>, vector<1x8x1xf32>
    %157 = vector.shape_cast %156 : vector<1x8x1xf32> to vector<8x1xf32>
    %158 = vector.shape_cast %131 : vector<8x1xf32> to vector<1x8x1xf32>
    tpu.vector_store %arg17[%c2_114, %c0_115, %c0_116], %158 {strides = array<i32>} : memref<4x8x1xf32, #tpu.memory_space<vmem>>, vector<1x8x1xf32>,
    %c3 = arith.constant 3 : index
    %c0_117 = arith.constant 0 : index
    %c0_118 = arith.constant 0 : index
    %159 = vector.load %arg7[%c3, %c0_117, %c0_118] : memref<4x32x8xbf16, #tpu.memory_space<vmem>>, vector<1x32x8xbf16>
    %160 = vector.shape_cast %159 : vector<1x32x8xbf16> to vector<32x8xbf16>
    %cst_119 = arith.constant dense<0.000000e+00> : vector<8x8xf32>
    %161 = tpu.matmul %5, %160, %cst_119 {dimension_numbers = #tpu.dot_dimension_numbers<[1], [0], [0], [1], [0, 0, 1, 1], [], []>} : vector<8x32xbf16>, vector<32x8xbf16>, vector<8x8xf32> -> vector<8x8xf32>
    %c3_120 = arith.constant 3 : index
    %c0_121 = arith.constant 0 : index
    %c0_122 = arith.constant 0 : index
    %162 = vector.load %arg8[%c3_120, %c0_121, %c0_122] : memref<4x1x8xf32, #tpu.memory_space<vmem>>, vector<1x1x8xf32>
    %163 = vector.shape_cast %162 : vector<1x1x8xf32> to vector<1x8xf32>
    %164 = vector.broadcast %163 : vector<1x8xf32> to vector<8x8xf32>
    %165 = arith.addf %161, %164 : vector<8x8xf32>
    %166 = arith.truncf %165 : vector<8x8xf32> to vector<8x8xbf16>
    %c3_123 = arith.constant 3 : index
    %c0_124 = arith.constant 0 : index
    %c0_125 = arith.constant 0 : index
    %167 = vector.load %arg9[%c3_123, %c0_124, %c0_125] : memref<4x32x8xbf16, #tpu.memory_space<vmem>>, vector<1x32x8xbf16>
    %168 = vector.shape_cast %167 : vector<1x32x8xbf16> to vector<32x8xbf16>
    %cst_126 = arith.constant dense<0.000000e+00> : vector<8x8xf32>
    %169 = tpu.matmul %5, %168, %cst_126 {dimension_numbers = #tpu.dot_dimension_numbers<[1], [0], [0], [1], [0, 0, 1, 1], [], []>} : vector<8x32xbf16>, vector<32x8xbf16>, vector<8x8xf32> -> vector<8x8xf32>
    %c3_127 = arith.constant 3 : index
    %c0_128 = arith.constant 0 : index
    %c0_129 = arith.constant 0 : index
    %170 = vector.load %arg10[%c3_127, %c0_128, %c0_129] : memref<4x1x8xf32, #tpu.memory_space<vmem>>, vector<1x1x8xf32>
    %171 = vector.shape_cast %170 : vector<1x1x8xf32> to vector<1x8xf32>
    %172 = vector.broadcast %171 : vector<1x8xf32> to vector<8x8xf32>
    %173 = arith.addf %169, %172 : vector<8x8xf32>
    %174 = arith.truncf %173 : vector<8x8xf32> to vector<8x8xbf16>
    %c3_130 = arith.constant 3 : index
    %c0_131 = arith.constant 0 : index
    %c0_132 = arith.constant 0 : index
    %175 = vector.load %arg16[%c3_130, %c0_131, %c0_132] : memref<4x8x8xbf16, #tpu.memory_space<vmem>>, vector<1x8x8xbf16>
    %176 = vector.shape_cast %175 : vector<1x8x8xbf16> to vector<8x8xbf16>
    %cst_133 = arith.constant dense<0.000000e+00> : vector<8x8xf32>
    %177 = tpu.matmul %176, %166, %cst_133 {dimension_numbers = #tpu.dot_dimension_numbers<[1], [1], [0], [0], [0, 0, 1, 0], [], []>} : vector<8x8xbf16>, vector<8x8xbf16>, vector<8x8xf32> -> vector<8x8xf32>
    %c3_134 = arith.constant 3 : index
    %c0_135 = arith.constant 0 : index
    %c0_136 = arith.constant 0 : index
    %178 = vector.load %arg17[%c3_134, %c0_135, %c0_136] : memref<4x8x1xf32, #tpu.memory_space<vmem>>, vector<1x8x1xf32>
    %179 = vector.shape_cast %178 : vector<1x8x1xf32> to vector<8x1xf32>
    %cst_137 = arith.constant dense<0xFF800000> : vector<8xf32>
    %180 = vector.multi_reduction <maximumf>, %177, %cst_137 [1] : vector<8x8xf32> to vector<8xf32>
    %181 = vector.shape_cast %180 : vector<8xf32> to vector<8x1xf32>
    %182 = arith.maximumf %179, %181 : vector<8x1xf32>
    %183 = arith.subf %179, %182 : vector<8x1xf32>
    %184 = math.exp %183 : vector<8x1xf32>
    %185 = vector.broadcast %182 : vector<8x1xf32> to vector<8x8xf32>
    %186 = arith.subf %177, %185 : vector<8x8xf32>
    %187 = math.exp %186 : vector<8x8xf32>
    %c3_138 = arith.constant 3 : index
    %c0_139 = arith.constant 0 : index
    %c0_140 = arith.constant 0 : index
    %188 = vector.load %arg18[%c3_138, %c0_139, %c0_140] : memref<4x8x1xf32, #tpu.memory_space<vmem>>, vector<1x8x1xf32>
    %189 = vector.shape_cast %188 : vector<1x8x1xf32> to vector<8x1xf32>
    %190 = arith.mulf %184, %189 : vector<8x1xf32>
    %cst_141 = arith.constant dense<0.000000e+00> : vector<8xf32>
    %191 = vector.multi_reduction <add>, %187, %cst_141 [1] : vector<8x8xf32> to vector<8xf32>
    %192 = vector.shape_cast %191 : vector<8xf32> to vector<8x1xf32>
    %193 = arith.addf %190, %192 : vector<8x1xf32>
    %c3_142 = arith.constant 3 : index
    %c0_143 = arith.constant 0 : index
    %c0_144 = arith.constant 0 : index
    %194 = vector.load %arg18[%c3_142, %c0_143, %c0_144] : memref<4x8x1xf32, #tpu.memory_space<vmem>>, vector<1x8x1xf32>
    %195 = vector.shape_cast %194 : vector<1x8x1xf32> to vector<8x1xf32>
    %196 = vector.shape_cast %193 : vector<8x1xf32> to vector<1x8x1xf32>
    tpu.vector_store %arg18[%c3_142, %c0_143, %c0_144], %196 {strides = array<i32>} : memref<4x8x1xf32, #tpu.memory_space<vmem>>, vector<1x8x1xf32>,
    %c3_145 = arith.constant 3 : index
    %c0_146 = arith.constant 0 : index
    %c0_147 = arith.constant 0 : index
    %197 = vector.load %arg19[%c3_145, %c0_146, %c0_147] : memref<4x8x8xf32, #tpu.memory_space<vmem>>, vector<1x8x8xf32>
    %198 = vector.shape_cast %197 : vector<1x8x8xf32> to vector<8x8xf32>
    %199 = vector.broadcast %184 : vector<8x1xf32> to vector<8x8xf32>
    %200 = arith.mulf %199, %198 : vector<8x8xf32>
    %201 = arith.truncf %187 : vector<8x8xf32> to vector<8x8xbf16>
    %cst_148 = arith.constant dense<0.000000e+00> : vector<8x8xf32>
    %202 = tpu.matmul %201, %174, %cst_148 {dimension_numbers = #tpu.dot_dimension_numbers<[1], [0], [0], [1], [0, 0, 1, 1], [], []>} : vector<8x8xbf16>, vector<8x8xbf16>, vector<8x8xf32> -> vector<8x8xf32>
    %203 = arith.addf %200, %202 : vector<8x8xf32>
    %c3_149 = arith.constant 3 : index
    %c0_150 = arith.constant 0 : index
    %c0_151 = arith.constant 0 : index
    %204 = vector.load %arg19[%c3_149, %c0_150, %c0_151] : memref<4x8x8xf32, #tpu.memory_space<vmem>>, vector<1x8x8xf32>
    %205 = vector.shape_cast %204 : vector<1x8x8xf32> to vector<8x8xf32>
    %206 = vector.shape_cast %203 : vector<8x8xf32> to vector<1x8x8xf32>
    tpu.vector_store %arg19[%c3_149, %c0_150, %c0_151], %206 {strides = array<i32>} : memref<4x8x8xf32, #tpu.memory_space<vmem>>, vector<1x8x8xf32>,
    %c3_152 = arith.constant 3 : index
    %c0_153 = arith.constant 0 : index
    %c0_154 = arith.constant 0 : index
    %207 = vector.load %arg17[%c3_152, %c0_153, %c0_154] : memref<4x8x1xf32, #tpu.memory_space<vmem>>, vector<1x8x1xf32>
    %208 = vector.shape_cast %207 : vector<1x8x1xf32> to vector<8x1xf32>
    %209 = vector.shape_cast %182 : vector<8x1xf32> to vector<1x8x1xf32>
    tpu.vector_store %arg17[%c3_152, %c0_153, %c0_154], %209 {strides = array<i32>} : memref<4x8x1xf32, #tpu.memory_space<vmem>>, vector<1x8x1xf32>,
    %c0_i32_155 = arith.constant 0 : i32
    %210 = arith.cmpi eq, %arg2, %c0_i32_155 : i32
    %211 = arith.extui %210 : i1 to i32
    %c0_i32_156 = arith.constant 0 : i32
    %212 = arith.cmpi ne, %211, %c0_i32_156 : i32
    scf.if %212 {
      %c0_157 = arith.constant 0 : index
      %c0_158 = arith.constant 0 : index
      %c0_159 = arith.constant 0 : index
      %213 = vector.load %arg3[%c0_157, %c0_158, %c0_159] : memref<1x8x32xf32, #tpu.memory_space<vmem>>, vector<1x8x32xf32>
      %214 = vector.shape_cast %213 : vector<1x8x32xf32> to vector<8x32xf32>
      %c0_160 = arith.constant 0 : index
      %c0_161 = arith.constant 0 : index
      %215 = vector.load %arg12[%c0_160, %c0_161] : memref<1x32xf32, #tpu.memory_space<vmem>>, vector<1x32xf32>
      %216 = vector.broadcast %215 : vector<1x32xf32> to vector<8x32xf32>
      %217 = arith.addf %214, %216 : vector<8x32xf32>
      %c0_162 = arith.constant 0 : index
      %c0_163 = arith.constant 0 : index
      %c0_164 = arith.constant 0 : index
      %218 = vector.load %arg19[%c0_162, %c0_163, %c0_164] : memref<4x8x8xf32, #tpu.memory_space<vmem>>, vector<1x8x8xf32>
      %219 = vector.shape_cast %218 : vector<1x8x8xf32> to vector<8x8xf32>
      %c0_165 = arith.constant 0 : index
      %c0_166 = arith.constant 0 : index
      %c0_167 = arith.constant 0 : index
      %220 = vector.load %arg18[%c0_165, %c0_166, %c0_167] : memref<4x8x1xf32, #tpu.memory_space<vmem>>, vector<1x8x1xf32>
      %221 = vector.shape_cast %220 : vector<1x8x1xf32> to vector<8x1xf32>
      %222 = tpu.reciprocal %221 {approx = true} : vector<8x1xf32> -> vector<8x1xf32>
      %223 = vector.broadcast %222 : vector<8x1xf32> to vector<8x8xf32>
      %224 = arith.mulf %219, %223 : vector<8x8xf32>
      %225 = arith.truncf %224 : vector<8x8xf32> to vector<8x8xbf16>
      %c0_168 = arith.constant 0 : index
      %c0_169 = arith.constant 0 : index
      %c0_170 = arith.constant 0 : index
      %226 = vector.load %arg11[%c0_168, %c0_169, %c0_170] : memref<4x8x32xbf16, #tpu.memory_space<vmem>>, vector<1x8x32xbf16>
      %227 = vector.shape_cast %226 : vector<1x8x32xbf16> to vector<8x32xbf16>
      %cst_171 = arith.constant dense<0.000000e+00> : vector<8x32xf32>
      %228 = tpu.matmul %225, %227, %cst_171 {dimension_numbers = #tpu.dot_dimension_numbers<[1], [0], [0], [1], [0, 0, 1, 1], [], []>} : vector<8x8xbf16>, vector<8x32xbf16>, vector<8x32xf32> -> vector<8x32xf32>
      %229 = arith.addf %217, %228 : vector<8x32xf32>
      %c1_172 = arith.constant 1 : index
      %c0_173 = arith.constant 0 : index
      %c0_174 = arith.constant 0 : index
      %230 = vector.load %arg19[%c1_172, %c0_173, %c0_174] : memref<4x8x8xf32, #tpu.memory_space<vmem>>, vector<1x8x8xf32>
      %231 = vector.shape_cast %230 : vector<1x8x8xf32> to vector<8x8xf32>
      %c1_175 = arith.constant 1 : index
      %c0_176 = arith.constant 0 : index
      %c0_177 = arith.constant 0 : index
      %232 = vector.load %arg18[%c1_175, %c0_176, %c0_177] : memref<4x8x1xf32, #tpu.memory_space<vmem>>, vector<1x8x1xf32>
      %233 = vector.shape_cast %232 : vector<1x8x1xf32> to vector<8x1xf32>
      %234 = tpu.reciprocal %233 {approx = true} : vector<8x1xf32> -> vector<8x1xf32>
      %235 = vector.broadcast %234 : vector<8x1xf32> to vector<8x8xf32>
      %236 = arith.mulf %231, %235 : vector<8x8xf32>
      %237 = arith.truncf %236 : vector<8x8xf32> to vector<8x8xbf16>
      %c1_178 = arith.constant 1 : index
      %c0_179 = arith.constant 0 : index
      %c0_180 = arith.constant 0 : index
      %238 = vector.load %arg11[%c1_178, %c0_179, %c0_180] : memref<4x8x32xbf16, #tpu.memory_space<vmem>>, vector<1x8x32xbf16>
      %239 = vector.shape_cast %238 : vector<1x8x32xbf16> to vector<8x32xbf16>
      %cst_181 = arith.constant dense<0.000000e+00> : vector<8x32xf32>
      %240 = tpu.matmul %237, %239, %cst_181 {dimension_numbers = #tpu.dot_dimension_numbers<[1], [0], [0], [1], [0, 0, 1, 1], [], []>} : vector<8x8xbf16>, vector<8x32xbf16>, vector<8x32xf32> -> vector<8x32xf32>
      %241 = arith.addf %229, %240 : vector<8x32xf32>
      %c2_182 = arith.constant 2 : index
      %c0_183 = arith.constant 0 : index
      %c0_184 = arith.constant 0 : index
      %242 = vector.load %arg19[%c2_182, %c0_183, %c0_184] : memref<4x8x8xf32, #tpu.memory_space<vmem>>, vector<1x8x8xf32>
      %243 = vector.shape_cast %242 : vector<1x8x8xf32> to vector<8x8xf32>
      %c2_185 = arith.constant 2 : index
      %c0_186 = arith.constant 0 : index
      %c0_187 = arith.constant 0 : index
      %244 = vector.load %arg18[%c2_185, %c0_186, %c0_187] : memref<4x8x1xf32, #tpu.memory_space<vmem>>, vector<1x8x1xf32>
      %245 = vector.shape_cast %244 : vector<1x8x1xf32> to vector<8x1xf32>
      %246 = tpu.reciprocal %245 {approx = true} : vector<8x1xf32> -> vector<8x1xf32>
      %247 = vector.broadcast %246 : vector<8x1xf32> to vector<8x8xf32>
      %248 = arith.mulf %243, %247 : vector<8x8xf32>
      %249 = arith.truncf %248 : vector<8x8xf32> to vector<8x8xbf16>
      %c2_188 = arith.constant 2 : index
      %c0_189 = arith.constant 0 : index
      %c0_190 = arith.constant 0 : index
      %250 = vector.load %arg11[%c2_188, %c0_189, %c0_190] : memref<4x8x32xbf16, #tpu.memory_space<vmem>>, vector<1x8x32xbf16>
      %251 = vector.shape_cast %250 : vector<1x8x32xbf16> to vector<8x32xbf16>
      %cst_191 = arith.constant dense<0.000000e+00> : vector<8x32xf32>
      %252 = tpu.matmul %249, %251, %cst_191 {dimension_numbers = #tpu.dot_dimension_numbers<[1], [0], [0], [1], [0, 0, 1, 1], [], []>} : vector<8x8xbf16>, vector<8x32xbf16>, vector<8x32xf32> -> vector<8x32xf32>
      %253 = arith.addf %241, %252 : vector<8x32xf32>
      %c3_192 = arith.constant 3 : index
      %c0_193 = arith.constant 0 : index
      %c0_194 = arith.constant 0 : index
      %254 = vector.load %arg19[%c3_192, %c0_193, %c0_194] : memref<4x8x8xf32, #tpu.memory_space<vmem>>, vector<1x8x8xf32>
      %255 = vector.shape_cast %254 : vector<1x8x8xf32> to vector<8x8xf32>
      %c3_195 = arith.constant 3 : index
      %c0_196 = arith.constant 0 : index
      %c0_197 = arith.constant 0 : index
      %256 = vector.load %arg18[%c3_195, %c0_196, %c0_197] : memref<4x8x1xf32, #tpu.memory_space<vmem>>, vector<1x8x1xf32>
      %257 = vector.shape_cast %256 : vector<1x8x1xf32> to vector<8x1xf32>
      %258 = tpu.reciprocal %257 {approx = true} : vector<8x1xf32> -> vector<8x1xf32>
      %259 = vector.broadcast %258 : vector<8x1xf32> to vector<8x8xf32>
      %260 = arith.mulf %255, %259 : vector<8x8xf32>
      %261 = arith.truncf %260 : vector<8x8xf32> to vector<8x8xbf16>
      %c3_198 = arith.constant 3 : index
      %c0_199 = arith.constant 0 : index
      %c0_200 = arith.constant 0 : index
      %262 = vector.load %arg11[%c3_198, %c0_199, %c0_200] : memref<4x8x32xbf16, #tpu.memory_space<vmem>>, vector<1x8x32xbf16>
      %263 = vector.shape_cast %262 : vector<1x8x32xbf16> to vector<8x32xbf16>
      %cst_201 = arith.constant dense<0.000000e+00> : vector<8x32xf32>
      %264 = tpu.matmul %261, %263, %cst_201 {dimension_numbers = #tpu.dot_dimension_numbers<[1], [0], [0], [1], [0, 0, 1, 1], [], []>} : vector<8x8xbf16>, vector<8x32xbf16>, vector<8x32xf32> -> vector<8x32xf32>
      %265 = arith.addf %253, %264 : vector<8x32xf32>
      %cst_202 = arith.constant dense<0.000000e+00> : vector<8xf32>
      %266 = vector.multi_reduction <add>, %265, %cst_202 [1] : vector<8x32xf32> to vector<8xf32>
      %267 = vector.shape_cast %266 : vector<8xf32> to vector<8x1xf32>
      %cst_203 = arith.constant 3.200000e+01 : f32
      %268 = vector.broadcast %cst_203 : f32 to vector<8x1xf32>
      %269 = arith.divf %267, %268 : vector<8x1xf32>
      %270 = vector.broadcast %269 : vector<8x1xf32> to vector<8x32xf32>
      %271 = arith.subf %265, %270 : vector<8x32xf32>
      %272 = arith.mulf %271, %271 : vector<8x32xf32>
      %cst_204 = arith.constant dense<0.000000e+00> : vector<8xf32>
      %273 = vector.multi_reduction <add>, %272, %cst_204 [1] : vector<8x32xf32> to vector<8xf32>
      %274 = vector.shape_cast %273 : vector<8xf32> to vector<8x1xf32>
      %cst_205 = arith.constant 3.200000e+01 : f32
      %275 = vector.broadcast %cst_205 : f32 to vector<8x1xf32>
      %276 = arith.divf %274, %275 : vector<8x1xf32>
      %277 = vector.broadcast %269 : vector<8x1xf32> to vector<8x32xf32>
      %278 = arith.subf %265, %277 : vector<8x32xf32>
      %cst_206 = arith.constant 9.99999974E-6 : f32
      %279 = vector.broadcast %cst_206 : f32 to vector<8x1xf32>
      %280 = arith.addf %276, %279 : vector<8x1xf32>
      %281 = math.rsqrt %280 : vector<8x1xf32>
      %282 = vector.broadcast %281 : vector<8x1xf32> to vector<8x32xf32>
      %283 = arith.mulf %278, %282 : vector<8x32xf32>
      %c0_207 = arith.constant 0 : index
      %c0_208 = arith.constant 0 : index
      %284 = vector.load %arg13[%c0_207, %c0_208] : memref<1x32xf32, #tpu.memory_space<vmem>>, vector<1x32xf32>
      %285 = vector.broadcast %284 : vector<1x32xf32> to vector<8x32xf32>
      %286 = arith.mulf %283, %285 : vector<8x32xf32>
      %c0_209 = arith.constant 0 : index
      %c0_210 = arith.constant 0 : index
      %287 = vector.load %arg14[%c0_209, %c0_210] : memref<1x32xf32, #tpu.memory_space<vmem>>, vector<1x32xf32>
      %288 = vector.broadcast %287 : vector<1x32xf32> to vector<8x32xf32>
      %289 = arith.addf %286, %288 : vector<8x32xf32>
      %c0_211 = arith.constant 0 : index
      %c0_212 = arith.constant 0 : index
      %c0_213 = arith.constant 0 : index
      %290 = vector.load %arg15[%c0_211, %c0_212, %c0_213] : memref<1x8x32xf32, #tpu.memory_space<vmem>>, vector<1x8x32xf32>
      %291 = vector.shape_cast %290 : vector<1x8x32xf32> to vector<8x32xf32>
      %292 = vector.shape_cast %289 : vector<8x32xf32> to vector<1x8x32xf32>
      tpu.vector_store %arg15[%c0_211, %c0_212, %c0_213], %292 {strides = array<i32>} : memref<1x8x32xf32, #tpu.memory_space<vmem>>, vector<1x8x32xf32>,
    } else {
    }
    return
  }
  func.func @transform_0(%arg0: i32, %arg1: i32, %arg2: i32) -> (i32, i32, i32) {
    %c0_i32 = arith.constant 0 : i32
    %c0_i32_0 = arith.constant 0 : i32
    return %arg0, %arg1, %c0_i32 : i32, i32, i32
  }
  func.func @transform_1(%arg0: i32, %arg1: i32, %arg2: i32) -> (i32, i32, i32) {
    %c0_i32 = arith.constant 0 : i32
    %c0_i32_0 = arith.constant 0 : i32
    return %arg0, %arg2, %c0_i32 : i32, i32, i32
  }
  func.func @transform_2(%arg0: i32, %arg1: i32, %arg2: i32) -> (i32, i32, i32) {
    %c0_i32 = arith.constant 0 : i32
    %c0_i32_0 = arith.constant 0 : i32
    %c0_i32_1 = arith.constant 0 : i32
    %c0_i32_2 = arith.constant 0 : i32
    return %c0_i32, %c0_i32_0, %c0_i32_1 : i32, i32, i32
  }
  func.func @transform_3(%arg0: i32, %arg1: i32, %arg2: i32) -> (i32, i32, i32) {
    %c0_i32 = arith.constant 0 : i32
    %c0_i32_0 = arith.constant 0 : i32
    %c0_i32_1 = arith.constant 0 : i32
    %c0_i32_2 = arith.constant 0 : i32
    return %c0_i32, %c0_i32_0, %c0_i32_1 : i32, i32, i32
  }
  func.func @transform_4(%arg0: i32, %arg1: i32, %arg2: i32) -> (i32, i32, i32) {
    %c0_i32 = arith.constant 0 : i32
    %c0_i32_0 = arith.constant 0 : i32
    %c0_i32_1 = arith.constant 0 : i32
    %c0_i32_2 = arith.constant 0 : i32
    return %c0_i32, %c0_i32_0, %c0_i32_1 : i32, i32, i32
  }
  func.func @transform_5(%arg0: i32, %arg1: i32, %arg2: i32) -> (i32, i32, i32) {
    %c0_i32 = arith.constant 0 : i32
    %c0_i32_0 = arith.constant 0 : i32
    %c0_i32_1 = arith.constant 0 : i32
    %c0_i32_2 = arith.constant 0 : i32
    return %c0_i32, %c0_i32_0, %c0_i32_1 : i32, i32, i32
  }
  func.func @transform_6(%arg0: i32, %arg1: i32, %arg2: i32) -> (i32, i32, i32) {
    %c0_i32 = arith.constant 0 : i32
    %c0_i32_0 = arith.constant 0 : i32
    %c0_i32_1 = arith.constant 0 : i32
    %c0_i32_2 = arith.constant 0 : i32
    return %c0_i32, %c0_i32_0, %c0_i32_1 : i32, i32, i32
  }
  func.func @transform_7(%arg0: i32, %arg1: i32, %arg2: i32) -> (i32, i32, i32) {
    %c0_i32 = arith.constant 0 : i32
    %c0_i32_0 = arith.constant 0 : i32
    %c0_i32_1 = arith.constant 0 : i32
    %c0_i32_2 = arith.constant 0 : i32
    return %c0_i32, %c0_i32_0, %c0_i32_1 : i32, i32, i32
  }
  func.func @transform_8(%arg0: i32, %arg1: i32, %arg2: i32) -> (i32, i32, i32) {
    %c0_i32 = arith.constant 0 : i32
    %c0_i32_0 = arith.constant 0 : i32
    %c0_i32_1 = arith.constant 0 : i32
    %c0_i32_2 = arith.constant 0 : i32
    return %c0_i32, %c0_i32_0, %c0_i32_1 : i32, i32, i32
  }
  func.func @transform_9(%arg0: i32, %arg1: i32, %arg2: i32) -> (i32, i32) {
    %c0_i32 = arith.constant 0 : i32
    %c0_i32_0 = arith.constant 0 : i32
    %c0_i32_1 = arith.constant 0 : i32
    return %c0_i32, %c0_i32_0 : i32, i32
  }
  func.func @transform_10(%arg0: i32, %arg1: i32, %arg2: i32) -> (i32, i32) {
    %c0_i32 = arith.constant 0 : i32
    %c0_i32_0 = arith.constant 0 : i32
    %c0_i32_1 = arith.constant 0 : i32
    return %c0_i32, %c0_i32_0 : i32, i32
  }
  func.func @transform_11(%arg0: i32, %arg1: i32, %arg2: i32) -> (i32, i32) {
    %c0_i32 = arith.constant 0 : i32
    %c0_i32_0 = arith.constant 0 : i32
    %c0_i32_1 = arith.constant 0 : i32
    return %c0_i32, %c0_i32_0 : i32, i32
  }
  func.func @transform_12(%arg0: i32, %arg1: i32, %arg2: i32) -> (i32, i32, i32) {
    %c0_i32 = arith.constant 0 : i32
    %c0_i32_0 = arith.constant 0 : i32
    return %arg0, %arg1, %c0_i32 : i32, i32, i32
  }
}

module attributes {stable_mosaic.version = 11 : i64} {
  func.func @ffn_ln_kernel(%arg0: i32, %arg1: i32, %arg2: memref<8x32xf32, #tpu.memory_space<vmem>>, %arg3: memref<32x64xbf16, #tpu.memory_space<vmem>>, %arg4: memref<1x64xf32, #tpu.memory_space<vmem>>, %arg5: memref<64x32xbf16, #tpu.memory_space<vmem>>, %arg6: memref<1x32xf32, #tpu.memory_space<vmem>>, %arg7: memref<1x32xf32, #tpu.memory_space<vmem>>, %arg8: memref<1x32xf32, #tpu.memory_space<vmem>>, %arg9: memref<8x32xf32, #tpu.memory_space<vmem>>, %arg10: memref<8x32xf32, #tpu.memory_space<vmem>>) attributes {dimension_semantics = [#tpu.dimension_semantics<parallel>, #tpu.dimension_semantics<arbitrary>], iteration_bounds = array<i64: 2, 1>, scalar_prefetch = 0 : i64, scratch_operands = 1 : i64, tpu.core_type = #tpu.core_type<tc>, window_params = [{transform_indices = @transform_0, window_bounds = array<i64: 8, 32>}, {transform_indices = @transform_1, window_bounds = array<i64: 32, 64>}, {transform_indices = @transform_2, window_bounds = array<i64: 1, 64>}, {transform_indices = @transform_3, window_bounds = array<i64: 64, 32>}, {pipeline_mode = #tpu.pipeline_mode<synchronous>, transform_indices = @transform_4, window_bounds = array<i64: 1, 32>}, {pipeline_mode = #tpu.pipeline_mode<synchronous>, transform_indices = @transform_5, window_bounds = array<i64: 1, 32>}, {pipeline_mode = #tpu.pipeline_mode<synchronous>, transform_indices = @transform_6, window_bounds = array<i64: 1, 32>}, {transform_indices = @transform_7, window_bounds = array<i64: 8, 32>}]} {
    %c0_i32 = arith.constant 0 : i32
    %0 = arith.cmpi eq, %arg1, %c0_i32 : i32
    %1 = arith.extui %0 : i1 to i32
    %c0_i32_0 = arith.constant 0 : i32
    %2 = arith.cmpi ne, %1, %c0_i32_0 : i32
    scf.if %2 {
      %cst_16 = arith.constant 0.000000e+00 : f32
      %21 = vector.broadcast %cst_16 : f32 to vector<8x32xf32>
      %c0_17 = arith.constant 0 : index
      %c0_18 = arith.constant 0 : index
      %22 = vector.load %arg10[%c0_17, %c0_18] : memref<8x32xf32, #tpu.memory_space<vmem>>, vector<8x32xf32>
      tpu.vector_store %arg10[%c0_17, %c0_18], %21 {strides = array<i32>} : memref<8x32xf32, #tpu.memory_space<vmem>>, vector<8x32xf32>,
    } else {
    }
    %c0 = arith.constant 0 : index
    %c0_1 = arith.constant 0 : index
    %3 = vector.load %arg2[%c0, %c0_1] : memref<8x32xf32, #tpu.memory_space<vmem>>, vector<8x32xf32>
    %4 = arith.truncf %3 : vector<8x32xf32> to vector<8x32xbf16>
    %c0_2 = arith.constant 0 : index
    %c0_3 = arith.constant 0 : index
    %5 = vector.load %arg3[%c0_2, %c0_3] : memref<32x64xbf16, #tpu.memory_space<vmem>>, vector<32x64xbf16>
    %cst = arith.constant dense<0.000000e+00> : vector<8x64xf32>
    %6 = tpu.matmul %4, %5, %cst {dimension_numbers = #tpu.dot_dimension_numbers<[1], [0], [0], [1], [0, 0, 1, 1], [], []>} : vector<8x32xbf16>, vector<32x64xbf16>, vector<8x64xf32> -> vector<8x64xf32>
    %c0_4 = arith.constant 0 : index
    %c0_5 = arith.constant 0 : index
    %7 = vector.load %arg4[%c0_4, %c0_5] : memref<1x64xf32, #tpu.memory_space<vmem>>, vector<1x64xf32>
    %8 = vector.broadcast %7 : vector<1x64xf32> to vector<8x64xf32>
    %9 = arith.addf %6, %8 : vector<8x64xf32>
    %cst_6 = arith.constant 0.000000e+00 : f32
    %10 = vector.broadcast %cst_6 : f32 to vector<8x64xf32>
    %11 = arith.maximumf %9, %10 : vector<8x64xf32>
    %12 = arith.truncf %11 : vector<8x64xf32> to vector<8x64xbf16>
    %c0_7 = arith.constant 0 : index
    %c0_8 = arith.constant 0 : index
    %13 = vector.load %arg10[%c0_7, %c0_8] : memref<8x32xf32, #tpu.memory_space<vmem>>, vector<8x32xf32>
    %c0_9 = arith.constant 0 : index
    %c0_10 = arith.constant 0 : index
    %14 = vector.load %arg5[%c0_9, %c0_10] : memref<64x32xbf16, #tpu.memory_space<vmem>>, vector<64x32xbf16>
    %cst_11 = arith.constant dense<0.000000e+00> : vector<8x32xf32>
    %15 = tpu.matmul %12, %14, %cst_11 {dimension_numbers = #tpu.dot_dimension_numbers<[1], [0], [0], [1], [0, 0, 1, 1], [], []>} : vector<8x64xbf16>, vector<64x32xbf16>, vector<8x32xf32> -> vector<8x32xf32>
    %16 = arith.addf %13, %15 : vector<8x32xf32>
    %c0_12 = arith.constant 0 : index
    %c0_13 = arith.constant 0 : index
    %17 = vector.load %arg10[%c0_12, %c0_13] : memref<8x32xf32, #tpu.memory_space<vmem>>, vector<8x32xf32>
    tpu.vector_store %arg10[%c0_12, %c0_13], %16 {strides = array<i32>} : memref<8x32xf32, #tpu.memory_space<vmem>>, vector<8x32xf32>,
    %c0_i32_14 = arith.constant 0 : i32
    %18 = arith.cmpi eq, %arg1, %c0_i32_14 : i32
    %19 = arith.extui %18 : i1 to i32
    %c0_i32_15 = arith.constant 0 : i32
    %20 = arith.cmpi ne, %19, %c0_i32_15 : i32
    scf.if %20 {
      %c0_16 = arith.constant 0 : index
      %c0_17 = arith.constant 0 : index
      %21 = vector.load %arg2[%c0_16, %c0_17] : memref<8x32xf32, #tpu.memory_space<vmem>>, vector<8x32xf32>
      %c0_18 = arith.constant 0 : index
      %c0_19 = arith.constant 0 : index
      %22 = vector.load %arg10[%c0_18, %c0_19] : memref<8x32xf32, #tpu.memory_space<vmem>>, vector<8x32xf32>
      %23 = arith.addf %21, %22 : vector<8x32xf32>
      %c0_20 = arith.constant 0 : index
      %c0_21 = arith.constant 0 : index
      %24 = vector.load %arg6[%c0_20, %c0_21] : memref<1x32xf32, #tpu.memory_space<vmem>>, vector<1x32xf32>
      %25 = vector.broadcast %24 : vector<1x32xf32> to vector<8x32xf32>
      %26 = arith.addf %23, %25 : vector<8x32xf32>
      %cst_22 = arith.constant dense<0.000000e+00> : vector<8xf32>
      %27 = vector.multi_reduction <add>, %26, %cst_22 [1] : vector<8x32xf32> to vector<8xf32>
      %28 = vector.shape_cast %27 : vector<8xf32> to vector<8x1xf32>
      %cst_23 = arith.constant 3.200000e+01 : f32
      %29 = vector.broadcast %cst_23 : f32 to vector<8x1xf32>
      %30 = arith.divf %28, %29 : vector<8x1xf32>
      %31 = vector.broadcast %30 : vector<8x1xf32> to vector<8x32xf32>
      %32 = arith.subf %26, %31 : vector<8x32xf32>
      %33 = arith.mulf %32, %32 : vector<8x32xf32>
      %cst_24 = arith.constant dense<0.000000e+00> : vector<8xf32>
      %34 = vector.multi_reduction <add>, %33, %cst_24 [1] : vector<8x32xf32> to vector<8xf32>
      %35 = vector.shape_cast %34 : vector<8xf32> to vector<8x1xf32>
      %cst_25 = arith.constant 3.200000e+01 : f32
      %36 = vector.broadcast %cst_25 : f32 to vector<8x1xf32>
      %37 = arith.divf %35, %36 : vector<8x1xf32>
      %38 = vector.broadcast %30 : vector<8x1xf32> to vector<8x32xf32>
      %39 = arith.subf %26, %38 : vector<8x32xf32>
      %cst_26 = arith.constant 9.99999974E-6 : f32
      %40 = vector.broadcast %cst_26 : f32 to vector<8x1xf32>
      %41 = arith.addf %37, %40 : vector<8x1xf32>
      %42 = math.rsqrt %41 : vector<8x1xf32>
      %43 = vector.broadcast %42 : vector<8x1xf32> to vector<8x32xf32>
      %44 = arith.mulf %39, %43 : vector<8x32xf32>
      %c0_27 = arith.constant 0 : index
      %c0_28 = arith.constant 0 : index
      %45 = vector.load %arg7[%c0_27, %c0_28] : memref<1x32xf32, #tpu.memory_space<vmem>>, vector<1x32xf32>
      %46 = vector.broadcast %45 : vector<1x32xf32> to vector<8x32xf32>
      %47 = arith.mulf %44, %46 : vector<8x32xf32>
      %c0_29 = arith.constant 0 : index
      %c0_30 = arith.constant 0 : index
      %48 = vector.load %arg8[%c0_29, %c0_30] : memref<1x32xf32, #tpu.memory_space<vmem>>, vector<1x32xf32>
      %49 = vector.broadcast %48 : vector<1x32xf32> to vector<8x32xf32>
      %50 = arith.addf %47, %49 : vector<8x32xf32>
      %c0_31 = arith.constant 0 : index
      %c0_32 = arith.constant 0 : index
      %51 = vector.load %arg9[%c0_31, %c0_32] : memref<8x32xf32, #tpu.memory_space<vmem>>, vector<8x32xf32>
      tpu.vector_store %arg9[%c0_31, %c0_32], %50 {strides = array<i32>} : memref<8x32xf32, #tpu.memory_space<vmem>>, vector<8x32xf32>,
    } else {
    }
    return
  }
  func.func @transform_0(%arg0: i32, %arg1: i32) -> (i32, i32) {
    %c0_i32 = arith.constant 0 : i32
    %c0_i32_0 = arith.constant 0 : i32
    return %arg0, %c0_i32 : i32, i32
  }
  func.func @transform_1(%arg0: i32, %arg1: i32) -> (i32, i32) {
    %c0_i32 = arith.constant 0 : i32
    %c0_i32_0 = arith.constant 0 : i32
    return %c0_i32, %arg1 : i32, i32
  }
  func.func @transform_2(%arg0: i32, %arg1: i32) -> (i32, i32) {
    %c0_i32 = arith.constant 0 : i32
    %c0_i32_0 = arith.constant 0 : i32
    return %c0_i32, %arg1 : i32, i32
  }
  func.func @transform_3(%arg0: i32, %arg1: i32) -> (i32, i32) {
    %c0_i32 = arith.constant 0 : i32
    %c0_i32_0 = arith.constant 0 : i32
    return %arg1, %c0_i32 : i32, i32
  }
  func.func @transform_4(%arg0: i32, %arg1: i32) -> (i32, i32) {
    %c0_i32 = arith.constant 0 : i32
    %c0_i32_0 = arith.constant 0 : i32
    %c0_i32_1 = arith.constant 0 : i32
    return %c0_i32, %c0_i32_0 : i32, i32
  }
  func.func @transform_5(%arg0: i32, %arg1: i32) -> (i32, i32) {
    %c0_i32 = arith.constant 0 : i32
    %c0_i32_0 = arith.constant 0 : i32
    %c0_i32_1 = arith.constant 0 : i32
    return %c0_i32, %c0_i32_0 : i32, i32
  }
  func.func @transform_6(%arg0: i32, %arg1: i32) -> (i32, i32) {
    %c0_i32 = arith.constant 0 : i32
    %c0_i32_0 = arith.constant 0 : i32
    %c0_i32_1 = arith.constant 0 : i32
    return %c0_i32, %c0_i32_0 : i32, i32
  }
  func.func @transform_7(%arg0: i32, %arg1: i32) -> (i32, i32) {
    %c0_i32 = arith.constant 0 : i32
    %c0_i32_0 = arith.constant 0 : i32
    return %arg0, %c0_i32 : i32, i32
  }
}

</mosaic_0001>

<llo_original>
// kernel: transformer_decoder_layer.5
$region0: #{transformer_decoder_layer.5}
  #allocation0 [shape = 'u32[]', space=smem, size = 0x4, offset = 0x4, fixed_abs, tag = 'smem constant byte address 0x4 - core index']
  #allocation1 [shape = 'u32[144,128]{1,0:T(1,128)}', space=vmem, size = 0x12000, scoped, tag = 'internal scratch']
  #allocation2 [shape = 'f32[8,32]{1,0:T(8,128)}', space=vmem, size = 0x1000, scoped, tag = 'scratch operand']
  %s0 = inlined_call_operand.vmem [shape: f32[16,32], index: 0, kind: input, shape index: {}]
  %s1 = inlined_call_operand.vmem [shape: bf16[32,64], index: 1, kind: input, shape index: {}]
  %s2 = inlined_call_operand.vmem [shape: f32[1,64], index: 2, kind: input, shape index: {}]
  %s3 = inlined_call_operand.vmem [shape: bf16[64,32], index: 3, kind: input, shape index: {}]
  %s4 = inlined_call_operand.vmem [shape: f32[1,32], index: 4, kind: input, shape index: {}]
  %s5 = inlined_call_operand.vmem [shape: f32[1,32], index: 5, kind: input, shape index: {}]
  %s6 = inlined_call_operand.vmem [shape: f32[1,32], index: 6, kind: input, shape index: {}]
  %s7 = inlined_call_operand.vmem [shape: f32[16,32], index: 7, kind: output, shape index: {}]
  %s8 = sld [smem:[#allocation0]]
  $region69: #{transformer_decoder_layer.5} parent=0
    _
  %s10 = ssub.s32 1, %s8
  %s11 = scalar_select 0, %s10, %s8
  loop: start=0, step=1, limit=4
  $region2: #{transformer_decoder_layer.5} parent=0 // loop_pre_header
    _
  $region3: #{transformer_decoder_layer.5} parent=0 // loop_header
    %s13 = sphi 0, %s17
    %p14 = scmp.ge.s32.totalorder %s13, 4
    %s20 = sphi 0, %s32
    %s21 = sphi 0, %s28
    %s22 = sphi 0, %s20
    %s23 = sphi 0, %s21
    %s24 = sphi 0, %s22
    %s25 = sphi 0, %s23
    %s35 = sphi 0, %s37
    %s38 = sphi 0, %s35
    %s39 = sphi 0, %s38
    %s55 = sphi 0, %s39
    %s61 = sphi 0, %s63
    %s64 = sphi 0, %s61
    %s65 = sphi 0, %s64
    %s81 = sphi 0, %s65
    %s87 = sphi 0, %s89
    %s90 = sphi 0, %s87
    %s91 = sphi 0, %s90
    %s107 = sphi 0, %s91
    %s113 = sphi 0, %s115
    %s116 = sphi 0, %s113
    %s117 = sphi 0, %s116
    %s133 = sphi 0, %s117
    %s137 = sphi 0, %s137
    %s139 = sphi 0, %s137
    %s140 = sphi 0, %s139
    %s154 = sphi 0, %s140
    %s158 = sphi 0, %s158
    %s160 = sphi 0, %s158
    %s161 = sphi 0, %s160
    %s175 = sphi 0, %s161
    %s179 = sphi 0, %s179
    %s181 = sphi 0, %s179
    %s182 = sphi 0, %s181
    %s196 = sphi 0, %s182
    %s202 = sphi 0, %s204
    %s205 = sphi 0, %s202
    %s206 = sphi 0, %s205
    %s222 = sphi 0, %s206
  $region4: #{transformer_decoder_layer.5} parent=0 // loop_header_branch
    %16 = sbr.rel (%p14) target = $region8
  $region5: #{transformer_decoder_layer.5} parent=0 // loop_body
    %s18 = ssub.s32 %s13, 1
    %s19 = ssub.s32 %s13, 2
    %s26 = sadd.s32 1, %s21
    %p27 = scmp.ge.s32.totalorder %s26, 1
    %s28 = scalar_select %p27, 0, %s26
    %s29 = sadd.s32 1, %s20
    %s30 = scalar_select %p27, %s29, %s20
    %p31 = scmp.ge.s32.totalorder %s30, 2
    %s32 = scalar_select %p31, 0, %s30
    %s33 = ssub.s32 %s20, %s32
    %p34 = scmp.eq.s32.totalorder %s33, 0
    %s36 = sadd.s32 %s35, 1
    %s37 = scalar_select %p34, %s35, %s36
    %p40 = pneg %p34
    %p41 = scmp.eq.s32.totalorder %s13, 1
    %p42 = por %p40, %p41
    %p43 = scmp.ne.s32.totalorder %s35, %s38
    %p44 = scmp.eq.s32.totalorder %s13, 0
    %p45 = por %p43, %p44
    %p46 = scmp.ne.s32.totalorder %s35, %s38
    %p47 = scmp.eq.s32.totalorder %s18, 1
    %p48 = por %p46, %p47
    %p49 = scmp.ne.s32.totalorder %s38, %s39
    %p50 = scmp.eq.s32.totalorder %s18, 0
    %p51 = por %p49, %p50
    %p52 = scmp.ne.s32.totalorder %s38, %s39
    %p53 = scmp.eq.s32.totalorder %s19, 1
    %p54 = por %p52, %p53
    %p56 = scmp.ne.s32.totalorder %s39, %s55
    %p57 = scmp.eq.s32.totalorder %s19, 0
    %p58 = por %p56, %p57
    %s59 = ssub.s32 %s21, %s28
    %p60 = scmp.eq.s32.totalorder %s59, 0
    %s62 = sadd.s32 %s61, 1
    %s63 = scalar_select %p60, %s61, %s62
    %p66 = pneg %p60
    %p67 = scmp.eq.s32.totalorder %s13, 1
    %p68 = por %p66, %p67
    %p69 = scmp.ne.s32.totalorder %s61, %s64
    %p70 = scmp.eq.s32.totalorder %s13, 0
    %p71 = por %p69, %p70
    %p72 = scmp.ne.s32.totalorder %s61, %s64
    %p73 = scmp.eq.s32.totalorder %s18, 1
    %p74 = por %p72, %p73
    %p75 = scmp.ne.s32.totalorder %s64, %s65
    %p76 = scmp.eq.s32.totalorder %s18, 0
    %p77 = por %p75, %p76
    %p78 = scmp.ne.s32.totalorder %s64, %s65
    %p79 = scmp.eq.s32.totalorder %s19, 1
    %p80 = por %p78, %p79
    %p82 = scmp.ne.s32.totalorder %s65, %s81
    %p83 = scmp.eq.s32.totalorder %s19, 0
    %p84 = por %p82, %p83
    %s85 = ssub.s32 %s21, %s28
    %p86 = scmp.eq.s32.totalorder %s85, 0
    %s88 = sadd.s32 %s87, 1
    %s89 = scalar_select %p86, %s87, %s88
    %p92 = pneg %p86
    %p93 = scmp.eq.s32.totalorder %s13, 1
    %p94 = por %p92, %p93
    %p95 = scmp.ne.s32.totalorder %s87, %s90
    %p96 = scmp.eq.s32.totalorder %s13, 0
    %p97 = por %p95, %p96
    %p98 = scmp.ne.s32.totalorder %s87, %s90
    %p99 = scmp.eq.s32.totalorder %s18, 1
    %p100 = por %p98, %p99
    %p101 = scmp.ne.s32.totalorder %s90, %s91
    %p102 = scmp.eq.s32.totalorder %s18, 0
    %p103 = por %p101, %p102
    %p104 = scmp.ne.s32.totalorder %s90, %s91
    %p105 = scmp.eq.s32.totalorder %s19, 1
    %p106 = por %p104, %p105
    %p108 = scmp.ne.s32.totalorder %s91, %s107
    %p109 = scmp.eq.s32.totalorder %s19, 0
    %p110 = por %p108, %p109
    %s111 = ssub.s32 %s21, %s28
    %p112 = scmp.eq.s32.totalorder %s111, 0
    %s114 = sadd.s32 %s113, 1
    %s115 = scalar_select %p112, %s113, %s114
    %p118 = pneg %p112
    %p119 = scmp.eq.s32.totalorder %s13, 1
    %p120 = por %p118, %p119
    %p121 = scmp.ne.s32.totalorder %s113, %s116
    %p122 = scmp.eq.s32.totalorder %s13, 0
    %p123 = por %p121, %p122
    %p124 = scmp.ne.s32.totalorder %s113, %s116
    %p125 = scmp.eq.s32.totalorder %s18, 1
    %p126 = por %p124, %p125
    %p127 = scmp.ne.s32.totalorder %s116, %s117
    %p128 = scmp.eq.s32.totalorder %s18, 0
    %p129 = por %p127, %p128
    %p130 = scmp.ne.s32.totalorder %s116, %s117
    %p131 = scmp.eq.s32.totalorder %s19, 1
    %p132 = por %p130, %p131
    %p134 = scmp.ne.s32.totalorder %s117, %s133
    %p135 = scmp.eq.s32.totalorder %s19, 0
    %p136 = por %p134, %p135
    %s138 = sadd.s32 %s137, 1
    %p141 = scmp.eq.s32.totalorder %s13, 1
    %p142 = scmp.ne.s32.totalorder %s137, %s139
    %p143 = scmp.eq.s32.totalorder %s13, 0
    %p144 = por %p142, %p143
    %p145 = scmp.ne.s32.totalorder %s137, %s139
    %p146 = scmp.eq.s32.totalorder %s18, 1
    %p147 = por %p145, %p146
    %p148 = scmp.ne.s32.totalorder %s139, %s140
    %p149 = scmp.eq.s32.totalorder %s18, 0
    %p150 = por %p148, %p149
    %p151 = scmp.ne.s32.totalorder %s139, %s140
    %p152 = scmp.eq.s32.totalorder %s19, 1
    %p153 = por %p151, %p152
    %p155 = scmp.ne.s32.totalorder %s140, %s154
    %p156 = scmp.eq.s32.totalorder %s19, 0
    %p157 = por %p155, %p156
    %s159 = sadd.s32 %s158, 1
    %p162 = scmp.eq.s32.totalorder %s13, 1
    %p163 = scmp.ne.s32.totalorder %s158, %s160
    %p164 = scmp.eq.s32.totalorder %s13, 0
    %p165 = por %p163, %p164
    %p166 = scmp.ne.s32.totalorder %s158, %s160
    %p167 = scmp.eq.s32.totalorder %s18, 1
    %p168 = por %p166, %p167
    %p169 = scmp.ne.s32.totalorder %s160, %s161
    %p170 = scmp.eq.s32.totalorder %s18, 0
    %p171 = por %p169, %p170
    %p172 = scmp.ne.s32.totalorder %s160, %s161
    %p173 = scmp.eq.s32.totalorder %s19, 1
    %p174 = por %p172, %p173
    %p176 = scmp.ne.s32.totalorder %s161, %s175
    %p177 = scmp.eq.s32.totalorder %s19, 0
    %p178 = por %p176, %p177
    %s180 = sadd.s32 %s179, 1
    %p183 = scmp.eq.s32.totalorder %s13, 1
    %p184 = scmp.ne.s32.totalorder %s179, %s181
    %p185 = scmp.eq.s32.totalorder %s13, 0
    %p186 = por %p184, %p185
    %p187 = scmp.ne.s32.totalorder %s179, %s181
    %p188 = scmp.eq.s32.totalorder %s18, 1
    %p189 = por %p187, %p188
    %p190 = scmp.ne.s32.totalorder %s181, %s182
    %p191 = scmp.eq.s32.totalorder %s18, 0
    %p192 = por %p190, %p191
    %p193 = scmp.ne.s32.totalorder %s181, %s182
    %p194 = scmp.eq.s32.totalorder %s19, 1
    %p195 = por %p193, %p194
    %p197 = scmp.ne.s32.totalorder %s182, %s196
    %p198 = scmp.eq.s32.totalorder %s19, 0
    %p199 = por %p197, %p198
    %s200 = ssub.s32 %s20, %s32
    %p201 = scmp.eq.s32.totalorder %s200, 0
    %s203 = sadd.s32 %s202, 1
    %s204 = scalar_select %p201, %s202, %s203
    %p207 = pneg %p201
    %p208 = scmp.eq.s32.totalorder %s13, 1
    %p209 = por %p207, %p208
    %p210 = scmp.ne.s32.totalorder %s202, %s205
    %p211 = scmp.eq.s32.totalorder %s13, 0
    %p212 = por %p210, %p211
    %p213 = scmp.ne.s32.totalorder %s202, %s205
    %p214 = scmp.eq.s32.totalorder %s18, 1
    %p215 = por %p213, %p214
    %p216 = scmp.ne.s32.totalorder %s205, %s206
    %p217 = scmp.eq.s32.totalorder %s18, 0
    %p218 = por %p216, %p217
    %p219 = scmp.ne.s32.totalorder %s205, %s206
    %p220 = scmp.eq.s32.totalorder %s19, 1
    %p221 = por %p219, %p220
    %p223 = scmp.ne.s32.totalorder %s206, %s222
    %p224 = scmp.eq.s32.totalorder %s19, 0
    %p225 = por %p223, %p224
    %p226 = scmp.le.s32.totalorder 1, %s13
    %p227 = scmp.lt.s32.totalorder %s13, 3
    %p228 = pnand %p226, %p227
    %p229 = pneg %p228
    // Predicated region
    $region9: #{transformer_decoder_layer.5} parent=5 // pred_check
      _
    $region10: #{transformer_decoder_layer.5} parent=5 // pred_check_branch
      %231 = sbr.rel (%p228) target = $region12
    $region11: #{transformer_decoder_layer.5} parent=5 // pred_region
      %s232 = ssub.s32 %s13, 1
      // Predicated region
      $region13: #{transformer_decoder_layer.5} parent=11 // pred_check
        %p233 = pneg %p77
      $region14: #{transformer_decoder_layer.5} parent=11 // pred_check_branch
        %235 = sbr.rel (%p233) target = $region16
      $region15: #{transformer_decoder_layer.5} parent=11 // pred_region
        %p236 = scmp.lt.s32.totalorder %s23, 0
        %s237 = scalar_select %p236, %s23, 0
        %s238 = smul.addr %s237, 4
        %s239 = scalar_lea.vmem %s1, %s238
      $region16: #{transformer_decoder_layer.5} parent=11 // pred_fallthru
        _
      // Predicated region
      $region17: #{transformer_decoder_layer.5} parent=11 // pred_check
        %p240 = pneg %p103
      $region18: #{transformer_decoder_layer.5} parent=11 // pred_check_branch
        %242 = sbr.rel (%p240) target = $region20
      $region19: #{transformer_decoder_layer.5} parent=11 // pred_region
        %p243 = scmp.lt.s32.totalorder %s23, 0
        %s244 = scalar_select %p243, %s23, 0
        %s245 = scalar_lea.vmem %s2, %s244
      $region20: #{transformer_decoder_layer.5} parent=11 // pred_fallthru
        _
      // Predicated region
      $region21: #{transformer_decoder_layer.5} parent=11 // pred_check
        %p246 = pneg %p129
      $region22: #{transformer_decoder_layer.5} parent=11 // pred_check_branch
        %248 = sbr.rel (%p246) target = $region24
      $region23: #{transformer_decoder_layer.5} parent=11 // pred_region
        %s249 = smul.u32 8, %s23
        %p250 = scmp.lt.s32.totalorder %s249, 7
        %s251 = scalar_select %p250, %s249, 7
        %s252 = smul.addr %s251, 4
        %s253 = scalar_lea.vmem %s3, %s252
        %s254 = smul.u32 8, %s23
      $region24: #{transformer_decoder_layer.5} parent=11 // pred_fallthru
        _
      // Predicated region
      $region25: #{transformer_decoder_layer.5} parent=11 // pred_check
        %p255 = pneg %p150
      $region26: #{transformer_decoder_layer.5} parent=11 // pred_check_branch
        %257 = sbr.rel (%p255) target = $region28
      $region27: #{transformer_decoder_layer.5} parent=11 // pred_region
        _
      $region28: #{transformer_decoder_layer.5} parent=11 // pred_fallthru
        _
      // Predicated region
      $region29: #{transformer_decoder_layer.5} parent=11 // pred_check
        %p258 = pneg %p171
      $region30: #{transformer_decoder_layer.5} parent=11 // pred_check_branch
        %260 = sbr.rel (%p258) target = $region32
      $region31: #{transformer_decoder_layer.5} parent=11 // pred_region
        _
      $region32: #{transformer_decoder_layer.5} parent=11 // pred_fallthru
        _
      // Predicated region
      $region33: #{transformer_decoder_layer.5} parent=11 // pred_check
        %p261 = pneg %p192
      $region34: #{transformer_decoder_layer.5} parent=11 // pred_check_branch
        %263 = sbr.rel (%p261) target = $region36
      $region35: #{transformer_decoder_layer.5} parent=11 // pred_region
        _
      $region36: #{transformer_decoder_layer.5} parent=11 // pred_fallthru
        _
    $region12: #{transformer_decoder_layer.5} parent=5 // pred_fallthru
      _
    %p264 = scmp.lt.s32.totalorder %s13, 2
    // Predicated region
    $region37: #{transformer_decoder_layer.5} parent=5 // pred_check
      %p265 = pneg %p264
    $region38: #{transformer_decoder_layer.5} parent=5 // pred_check_branch
      %267 = sbr.rel (%p265) target = $region40
    $region39: #{transformer_decoder_layer.5} parent=5 // pred_region
      // Predicated region
      $region41: #{transformer_decoder_layer.5} parent=39 // pred_check
        %p268 = pneg %p45
      $region42: #{transformer_decoder_layer.5} parent=39 // pred_check_branch
        %270 = sbr.rel (%p268) target = $region44
      $region43: #{transformer_decoder_layer.5} parent=39 // pred_region
        %p271 = scmp.lt.s32.totalorder %s20, 1
        %s272 = scalar_select %p271, %s20, 1
        %s273 = smul.addr %s272, 8
        %s274 = scalar_lea.vmem %s0, %s273
      $region44: #{transformer_decoder_layer.5} parent=39 // pred_fallthru
        _
    $region40: #{transformer_decoder_layer.5} parent=5 // pred_fallthru
      _
    %p275 = scmp.le.s32.totalorder 1, %s13
    %p276 = scmp.lt.s32.totalorder %s13, 3
    %p277 = pnand %p275, %p276
    %p278 = pneg %p277
    // Predicated region
    $region45: #{transformer_decoder_layer.5} parent=5 // pred_check
      _
    $region46: #{transformer_decoder_layer.5} parent=5 // pred_check_branch
      %280 = sbr.rel (%p277) target = $region48
    $region47: #{transformer_decoder_layer.5} parent=5 // pred_region
      %s281 = ssub.s32 %s13, 1
      %p282 = scmp.lt.s32.totalorder %s22, 1
      %s283 = scalar_select %p282, %s22, 1
      %s284 = smul.addr %s283, 8
      %s285 = scalar_lea.vmem %s0, %s284
      %p286 = pneg %p51
      %p287 = pneg %p48
      %p288 = scmp.lt.s32.totalorder %s23, 0
      %s289 = scalar_select %p288, %s23, 0
      %s290 = smul.addr %s289, 4
      %s291 = scalar_lea.vmem %s1, %s290
      %p292 = pneg %p77
      %p293 = pneg %p74
      %p294 = scmp.lt.s32.totalorder %s23, 0
      %s295 = scalar_select %p294, %s23, 0
      %s296 = scalar_lea.vmem %s2, %s295
      %p297 = pneg %p103
      %p298 = pneg %p100
      %s299 = smul.u32 8, %s23
      %p300 = scmp.lt.s32.totalorder %s299, 7
      %s301 = scalar_select %p300, %s299, 7
      %s302 = smul.addr %s301, 4
      %s303 = scalar_lea.vmem %s3, %s302
      %p304 = pneg %p129
      %p305 = pneg %p126
      %p306 = pneg %p150
      %p307 = pneg %p147
      %p308 = pneg %p171
      %p309 = pneg %p168
      %p310 = pneg %p192
      %p311 = pneg %p189
      %p312 = pneg %p218
      %p313 = pneg %p215
      %p314 = scmp.lt.s32.totalorder %s22, 1
      %s315 = scalar_select %p314, %s22, 1
      %s316 = smul.addr %s315, 8
      %s317 = scalar_lea.vmem %s7, %s316
      %p318 = scmp.lt.s32.totalorder %s22, 1
      %s319 = scalar_select %p318, %s22, 1
      %s320 = smul.addr %s319, 8
      %s321 = scalar_lea.vmem %s0, %s320
      %p322 = scmp.lt.s32.totalorder %s23, 0
      %s323 = scalar_select %p322, %s23, 0
      %s324 = smul.addr %s323, 4
      %s325 = scalar_lea.vmem %s1, %s324
      %p326 = scmp.lt.s32.totalorder %s23, 0
      %s327 = scalar_select %p326, %s23, 0
      %s328 = scalar_lea.vmem %s2, %s327
      %s329 = smul.u32 8, %s23
      %p330 = scmp.lt.s32.totalorder %s329, 7
      %s331 = scalar_select %p330, %s329, 7
      %s332 = smul.addr %s331, 4
      %s333 = scalar_lea.vmem %s3, %s332
      %s334 = smul.u32 8, %s23
      %p335 = scmp.lt.s32.totalorder %s22, 1
      %s336 = scalar_select %p335, %s22, 1
      %s337 = smul.addr %s336, 8
      %s338 = scalar_lea.vmem %s7, %s337
      %p340 = scmp.eq.s32.totalorder %s23, 0
      // Predicated region
      $region49: #{transformer_decoder_layer.5} parent=47 // pred_check
        %p341 = pneg %p340
      $region50: #{transformer_decoder_layer.5} parent=47 // pred_check_branch
        %343 = sbr.rel (%p341) target = $region52
      $region51: #{transformer_decoder_layer.5} parent=47 // pred_region
        %vm344 = vcmask 261120
        %345 = vst.msk [vmem:[#allocation2] sm:$0xff] %vm344, 0.0
      $region52: #{transformer_decoder_layer.5} parent=47 // pred_fallthru
        _
      %v346 = vld [vmem:[%s321] sm:$0xff]
      %v347 = vpack.c.bf16 %v346, %v346
      %v348 = vld [vmem:[%s325] sm:$0xf]
      %v349 = vld [vmem:[%s325 + $0x4] sm:$0xf]
      %v350 = vld [vmem:[%s325 + $0x8] sm:$0xf]
      %v351 = vld [vmem:[%s325 + $0xc] sm:$0xf]
      %v352 = vld [vmem:[%s328] sm:$0x1]
      %v354 = vlaneseq
      %v355 = vshrl.u32 %v354, 7
      %v356 = vsub.s32 0, %v355
      %v357 = vrot.slane %v352, %v356
      %v363 = vunpack.c.l.b16 %v348
      %v364 = vunpack.c.l.b16 %v349
      %v365 = vunpack.c.l.b16 %v350
      %v366 = vunpack.c.l.b16 %v351
      %v367 = vpack.c.b16 %v364, %v363
      %v368 = vpack.c.b16 %v366, %v365
      %vm371 = vcmask 261120
      %v373 = vsel %vm371, %v347, 0
      %375 = vmatprep.subr.bf16.mxu0 0
      %376 = vmatpush1.bf16.msra.mxu0 %v367
      %377 = vmatprep.subr.bf16.mxu0 0
      %378 = vmatpush1.bf16.msra.mxu0 %v368
      %379 = vmatprep.subr.bf16.mxu0 0
      %380 = vmatpush1.bf16.msra.mxu0 0
      %381 = vmatprep.subr.bf16.mxu0 0
      %382 = vmatpush1.bf16.msra.mxu0 0
      %383 = vmatprep.subr.bf16.mxu0 0
      %384 = vmatpush1.bf16.msra.mxu0 0
      %385 = vmatprep.subr.bf16.mxu0 0
      %386 = vmatpush1.bf16.msra.mxu0 0
      %387 = vmatprep.subr.bf16.mxu0 0
      %388 = vmatpush1.bf16.msra.mxu0 0
      %389 = vmatprep.subr.bf16.mxu0 0
      %390 = vmatpush1.bf16.msra.mxu0 0
      %391 = vmatprep.subr.bf16.mxu0 0
      %392 = vmatpush1.bf16.msra.mxu0 0
      %393 = vmatprep.subr.bf16.mxu0 0
      %394 = vmatpush1.bf16.msra.mxu0 0
      %395 = vmatprep.subr.bf16.mxu0 0
      %396 = vmatpush1.bf16.msra.mxu0 0
      %397 = vmatprep.subr.bf16.mxu0 0
      %398 = vmatpush1.bf16.msra.mxu0 0
      %399 = vmatprep.subr.bf16.mxu0 0
      %400 = vmatpush1.bf16.msra.mxu0 0
      %401 = vmatprep.subr.bf16.mxu0 0
      %402 = vmatpush1.bf16.msra.mxu0 0
      %403 = vmatprep.subr.bf16.mxu0 0
      %404 = vmatpush1.bf16.msra.mxu0 0
      %405 = vmatprep.subr.bf16.mxu0 0
      %406 = vmatpush1.bf16.msra.mxu0 0
      %407 = vmatprep.mubr.bf16.mxu0 0
      %408 = vmatmul.mubr.bf16.gmra.mrb[0].mxu0 %v373
      %v409 = vpop.f32.mrb[0].mxu0
      %v410 = vadd.f32 %v357, %v409
      %v411 = vpop.f32.mrb[0].mxu0
      %v412 = vpop.f32.mrb[0].mxu0
      %v413 = vpop.f32.mrb[0].mxu0
      %414 = vdwg.mxu0
      %v415 = vmax.f32 %v410, 0.0
      %v416 = vpack.c.bf16 %v415, %v415
      %v417 = vld [vmem:[#allocation2] sm:$0xff]
      %v418 = vld [vmem:[%s333] sm:$0xf]
      %v419 = vld [vmem:[%s333 + $0x4] sm:$0xf]
      %v420 = vld [vmem:[%s333 + $0x8] sm:$0xf]
      %v421 = vld [vmem:[%s333 + $0xc] sm:$0xf]
      %v422 = vld [vmem:[%s333 + $0x10] sm:$0xf]
      %v423 = vld [vmem:[%s333 + $0x14] sm:$0xf]
      %v424 = vld [vmem:[%s333 + $0x18] sm:$0xf]
      %v425 = vld [vmem:[%s333 + $0x1c] sm:$0xf]
      %v434 = vunpack.c.l.b16 %v418
      %v435 = vunpack.c.l.b16 %v419
      %v436 = vunpack.c.l.b16 %v420
      %v437 = vunpack.c.l.b16 %v421
      %v438 = vunpack.c.l.b16 %v422
      %v439 = vunpack.c.l.b16 %v423
      %v440 = vunpack.c.l.b16 %v424
      %v441 = vunpack.c.l.b16 %v425
      %v442 = vpack.c.b16 %v435, %v434
      %v443 = vpack.c.b16 %v437, %v436
      %v444 = vpack.c.b16 %v439, %v438
      %v445 = vpack.c.b16 %v441, %v440
      %vm450 = vcmask 523264
      %v452 = vsel %vm450, %v416, 0
      %454 = vmatprep.subr.bf16.mxu0 0
      %455 = vmatpush1.bf16.msra.mxu0 %v442
      %456 = vmatprep.subr.bf16.mxu0 0
      %457 = vmatpush1.bf16.msra.mxu0 %v443
      %458 = vmatprep.subr.bf16.mxu0 0
      %459 = vmatpush1.bf16.msra.mxu0 %v444
      %460 = vmatprep.subr.bf16.mxu0 0
      %461 = vmatpush1.bf16.msra.mxu0 %v445
      %462 = vmatprep.subr.bf16.mxu0 0
      %463 = vmatpush1.bf16.msra.mxu0 0
      %464 = vmatprep.subr.bf16.mxu0 0
      %465 = vmatpush1.bf16.msra.mxu0 0
      %466 = vmatprep.subr.bf16.mxu0 0
      %467 = vmatpush1.bf16.msra.mxu0 0
      %468 = vmatprep.subr.bf16.mxu0 0
      %469 = vmatpush1.bf16.msra.mxu0 0
      %470 = vmatprep.subr.bf16.mxu0 0
      %471 = vmatpush1.bf16.msra.mxu0 0
      %472 = vmatprep.subr.bf16.mxu0 0
      %473 = vmatpush1.bf16.msra.mxu0 0
      %474 = vmatprep.subr.bf16.mxu0 0
      %475 = vmatpush1.bf16.msra.mxu0 0
      %476 = vmatprep.subr.bf16.mxu0 0
      %477 = vmatpush1.bf16.msra.mxu0 0
      %478 = vmatprep.subr.bf16.mxu0 0
      %479 = vmatpush1.bf16.msra.mxu0 0
      %480 = vmatprep.subr.bf16.mxu0 0
      %481 = vmatpush1.bf16.msra.mxu0 0
      %482 = vmatprep.subr.bf16.mxu0 0
      %483 = vmatpush1.bf16.msra.mxu0 0
      %484 = vmatprep.subr.bf16.mxu0 0
      %485 = vmatpush1.bf16.msra.mxu0 0
      %486 = vmatprep.mubr.bf16.mxu0 0
      %487 = vmatmul.mubr.bf16.gmra.mrb[0].mxu0 %v452
      %v488 = vpop.f32.mrb[0].mxu0
      %v489 = vadd.f32 0.0, %v488
      %v490 = vpop.f32.mrb[0].mxu0
      %v491 = vpop.f32.mrb[0].mxu0
      %v492 = vpop.f32.mrb[0].mxu0
      %493 = vdwg.mxu0
      %v494 = vadd.f32 %v417, %v489
      %495 = vst.msk [vmem:[#allocation2] sm:$0xff] %vm371, %v494
      // Predicated region
      $region53: #{transformer_decoder_layer.5} parent=47 // pred_check
        %p496 = pneg %p340
      $region54: #{transformer_decoder_layer.5} parent=47 // pred_check_branch
        %498 = sbr.rel (%p496) target = $region56
      $region55: #{transformer_decoder_layer.5} parent=47 // pred_region
        %v499 = vld [vmem:[%s321] sm:$0xff]
        %v500 = vld [vmem:[#allocation2] sm:$0xff]
        %v501 = vadd.f32 %v499, %v500
        %v502 = vld [vmem:[%s4] sm:$0x1]
        %v504 = vlaneseq
        %v505 = vshrl.u32 %v504, 7
        %v506 = vsub.s32 0, %v505
        %v507 = vrot.slane %v502, %v506
        %v509 = vadd.f32 %v501, %v507
        %v510 = vsel %vm371, %v509, 0.0
        %511 = vadd.xlane.f32.xlu0 %v510
        %v512 = vpop.xlane.xlu0 %511
        %v513 = vrcp.pop 32.0
        %v514 = vmul.f32 %v512, %v513
        %v515 = vsub.f32 %v509, %v514
        %v516 = vmul.f32 %v515, %v515
        %v517 = vsel %vm371, %v516, 0.0
        %518 = vadd.xlane.f32.xlu0 %v517
        %v519 = vpop.xlane.xlu0 %518
        %v520 = vmul.f32 %v519, %v513
        %v521 = vadd.f32 %v520, 1e-05
        %v522 = vrsqrt.pop %v521
        %v523 = vmul.f32 %v515, %v522
        %v524 = vld [vmem:[%s5] sm:$0x1]
        %v526 = vlaneseq
        %v527 = vshrl.u32 %v526, 7
        %v528 = vsub.s32 0, %v527
        %v529 = vrot.slane %v524, %v528
        %v531 = vmul.f32 %v523, %v529
        %v532 = vld [vmem:[%s6] sm:$0x1]
        %v534 = vlaneseq
        %v535 = vshrl.u32 %v534, 7
        %v536 = vsub.s32 0, %v535
        %v537 = vrot.slane %v532, %v536
        %v539 = vadd.f32 %v531, %v537
        %540 = vst.msk [vmem:[%s338] sm:$0xff] %vm371, %v539
      $region56: #{transformer_decoder_layer.5} parent=47 // pred_fallthru
        _
      %p541 = scmp.lt.s32.totalorder %s22, 1
      %s542 = scalar_select %p541, %s22, 1
      %s543 = smul.addr %s542, 8
      %s544 = scalar_lea.vmem %s7, %s543
      // Predicated region
      $region57: #{transformer_decoder_layer.5} parent=47 // pred_check
        %p545 = pneg %p215
      $region58: #{transformer_decoder_layer.5} parent=47 // pred_check_branch
        %547 = sbr.rel (%p545) target = $region60
      $region59: #{transformer_decoder_layer.5} parent=47 // pred_region
        _
      $region60: #{transformer_decoder_layer.5} parent=47 // pred_fallthru
        _
    $region48: #{transformer_decoder_layer.5} parent=5 // pred_fallthru
      _
    %p548 = scmp.le.s32.totalorder 2, %s13
    // Predicated region
    $region61: #{transformer_decoder_layer.5} parent=5 // pred_check
      %p549 = pneg %p548
    $region62: #{transformer_decoder_layer.5} parent=5 // pred_check_branch
      %551 = sbr.rel (%p549) target = $region64
    $region63: #{transformer_decoder_layer.5} parent=5 // pred_region
      %s552 = ssub.s32 %s13, 2
      // Predicated region
      $region65: #{transformer_decoder_layer.5} parent=63 // pred_check
        %p553 = pneg %p221
      $region66: #{transformer_decoder_layer.5} parent=63 // pred_check_branch
        %555 = sbr.rel (%p553) target = $region68
      $region67: #{transformer_decoder_layer.5} parent=63 // pred_region
        %p556 = scmp.lt.s32.totalorder %s24, 1
        %s557 = scalar_select %p556, %s24, 1
        %s558 = smul.addr %s557, 8
        %s559 = scalar_lea.vmem %s7, %s558
      $region68: #{transformer_decoder_layer.5} parent=63 // pred_fallthru
        _
    $region64: #{transformer_decoder_layer.5} parent=5 // pred_fallthru
      _
  $region6: #{transformer_decoder_layer.5} parent=0 // loop_footer
    %s17 = sadd.s32 1, %s13
  $region7: #{transformer_decoder_layer.5} parent=0 // loop_footer_branch
    %12 = sbr.rel target = $region3
  $region8: #{transformer_decoder_layer.5} parent=0 // loop_exit
    _

// kernel: transformer_decoder_layer.3
$region0: #{transformer_decoder_layer.3}
  #allocation0 [shape = 'u32[]', space=smem, size = 0x4, offset = 0x4, fixed_abs, tag = 'smem constant byte address 0x4 - core index']
  #allocation1 [shape = 'u32[144,128]{1,0:T(1,128)}', space=vmem, size = 0x12000, scoped, tag = 'internal scratch']
  #allocation2 [shape = 'bf16[4,8,8]{2,1,0:T(8,128)(2,1)}', space=vmem, size = 0x2000, scoped, tag = 'scratch operand']
  #allocation3 [shape = 'f32[4,8,1]{2,1,0:T(8,128)}', space=vmem, size = 0x4000, scoped, tag = 'scratch operand']
  #allocation4 [shape = 'f32[4,8,1]{2,1,0:T(8,128)}', space=vmem, size = 0x4000, scoped, tag = 'scratch operand']
  #allocation5 [shape = 'f32[4,8,8]{2,1,0:T(8,128)}', space=vmem, size = 0x4000, scoped, tag = 'scratch operand']
  %s0 = inlined_call_operand.vmem [shape: f32[2,8,32], index: 0, kind: input, shape index: {}, may-alias: {0,1}]
  %s1 = inlined_call_operand.vmem [shape: f32[2,8,32], index: 1, kind: input, shape index: {}, may-alias: {0,1}]
  %s2 = inlined_call_operand.vmem [shape: bf16[4,32,8], index: 2, kind: input, shape index: {}]
  %s3 = inlined_call_operand.vmem [shape: f32[4,1,8], index: 3, kind: input, shape index: {}]
  %s4 = inlined_call_operand.vmem [shape: bf16[4,32,8], index: 4, kind: input, shape index: {}]
  %s5 = inlined_call_operand.vmem [shape: f32[4,1,8], index: 5, kind: input, shape index: {}]
  %s6 = inlined_call_operand.vmem [shape: bf16[4,32,8], index: 6, kind: input, shape index: {}]
  %s7 = inlined_call_operand.vmem [shape: f32[4,1,8], index: 7, kind: input, shape index: {}]
  %s8 = inlined_call_operand.vmem [shape: bf16[4,8,32], index: 8, kind: input, shape index: {}]
  %s9 = inlined_call_operand.vmem [shape: f32[1,32], index: 9, kind: input, shape index: {}]
  %s10 = inlined_call_operand.vmem [shape: f32[1,32], index: 10, kind: input, shape index: {}]
  %s11 = inlined_call_operand.vmem [shape: f32[1,32], index: 11, kind: input, shape index: {}]
  %s12 = inlined_call_operand.vmem [shape: f32[2,8,32], index: 12, kind: output, shape index: {}]
  %s13 = sld [smem:[#allocation0]]
  $region89: #{transformer_decoder_layer.3} parent=0
    _
  %s15 = ssub.s32 1, %s13
  %s16 = scalar_select 0, %s15, %s13
  loop: start=0, step=1, limit=4
  $region2: #{transformer_decoder_layer.3} parent=0 // loop_pre_header
    _
  $region3: #{transformer_decoder_layer.3} parent=0 // loop_header
    %s18 = sphi 0, %s22
    %p19 = scmp.ge.s32.totalorder %s18, 4
    %s25 = sphi 0, %s44
    %s26 = sphi 0, %s40
    %s27 = sphi 0, %s36
    %s28 = sphi 0, %s25
    %s29 = sphi 0, %s26
    %s30 = sphi 0, %s27
    %s31 = sphi 0, %s28
    %s32 = sphi 0, %s29
    %s33 = sphi 0, %s30
    %s49 = sphi 0, %s51
    %s52 = sphi 0, %s49
    %s53 = sphi 0, %s52
    %s69 = sphi 0, %s53
    %s77 = sphi 0, %s79
    %s80 = sphi 0, %s77
    %s81 = sphi 0, %s80
    %s97 = sphi 0, %s81
    %s101 = sphi 0, %s101
    %s103 = sphi 0, %s101
    %s104 = sphi 0, %s103
    %s118 = sphi 0, %s104
    %s122 = sphi 0, %s122
    %s124 = sphi 0, %s122
    %s125 = sphi 0, %s124
    %s139 = sphi 0, %s125
    %s143 = sphi 0, %s143
    %s145 = sphi 0, %s143
    %s146 = sphi 0, %s145
    %s160 = sphi 0, %s146
    %s164 = sphi 0, %s164
    %s166 = sphi 0, %s164
    %s167 = sphi 0, %s166
    %s181 = sphi 0, %s167
    %s185 = sphi 0, %s185
    %s187 = sphi 0, %s185
    %s188 = sphi 0, %s187
    %s202 = sphi 0, %s188
    %s206 = sphi 0, %s206
    %s208 = sphi 0, %s206
    %s209 = sphi 0, %s208
    %s223 = sphi 0, %s209
    %s227 = sphi 0, %s227
    %s229 = sphi 0, %s227
    %s230 = sphi 0, %s229
    %s244 = sphi 0, %s230
    %s248 = sphi 0, %s248
    %s250 = sphi 0, %s248
    %s251 = sphi 0, %s250
    %s265 = sphi 0, %s251
    %s269 = sphi 0, %s269
    %s271 = sphi 0, %s269
    %s272 = sphi 0, %s271
    %s286 = sphi 0, %s272
    %s290 = sphi 0, %s290
    %s292 = sphi 0, %s290
    %s293 = sphi 0, %s292
    %s307 = sphi 0, %s293
    %s315 = sphi 0, %s317
    %s318 = sphi 0, %s315
    %s319 = sphi 0, %s318
    %s335 = sphi 0, %s319
  $region4: #{transformer_decoder_layer.3} parent=0 // loop_header_branch
    %21 = sbr.rel (%p19) target = $region8
  $region5: #{transformer_decoder_layer.3} parent=0 // loop_body
    %s23 = ssub.s32 %s18, 1
    %s24 = ssub.s32 %s18, 2
    %s34 = sadd.s32 1, %s27
    %p35 = scmp.ge.s32.totalorder %s34, 1
    %s36 = scalar_select %p35, 0, %s34
    %s37 = sadd.s32 1, %s26
    %s38 = scalar_select %p35, %s37, %s26
    %p39 = scmp.ge.s32.totalorder %s38, 1
    %s40 = scalar_select %p39, 0, %s38
    %s41 = sadd.s32 1, %s25
    %s42 = scalar_select %p39, %s41, %s25
    %p43 = scmp.ge.s32.totalorder %s42, 2
    %s44 = scalar_select %p43, 0, %s42
    %s45 = ssub.s32 %s25, %s44
    %s46 = ssub.s32 %s26, %s40
    %s47 = sor.u32 %s45, %s46
    %p48 = scmp.eq.s32.totalorder %s47, 0
    %s50 = sadd.s32 %s49, 1
    %s51 = scalar_select %p48, %s49, %s50
    %p54 = pneg %p48
    %p55 = scmp.eq.s32.totalorder %s18, 1
    %p56 = por %p54, %p55
    %p57 = scmp.ne.s32.totalorder %s49, %s52
    %p58 = scmp.eq.s32.totalorder %s18, 0
    %p59 = por %p57, %p58
    %p60 = scmp.ne.s32.totalorder %s49, %s52
    %p61 = scmp.eq.s32.totalorder %s23, 1
    %p62 = por %p60, %p61
    %p63 = scmp.ne.s32.totalorder %s52, %s53
    %p64 = scmp.eq.s32.totalorder %s23, 0
    %p65 = por %p63, %p64
    %p66 = scmp.ne.s32.totalorder %s52, %s53
    %p67 = scmp.eq.s32.totalorder %s24, 1
    %p68 = por %p66, %p67
    %p70 = scmp.ne.s32.totalorder %s53, %s69
    %p71 = scmp.eq.s32.totalorder %s24, 0
    %p72 = por %p70, %p71
    %s73 = ssub.s32 %s25, %s44
    %s74 = ssub.s32 %s27, %s36
    %s75 = sor.u32 %s73, %s74
    %p76 = scmp.eq.s32.totalorder %s75, 0
    %s78 = sadd.s32 %s77, 1
    %s79 = scalar_select %p76, %s77, %s78
    %p82 = pneg %p76
    %p83 = scmp.eq.s32.totalorder %s18, 1
    %p84 = por %p82, %p83
    %p85 = scmp.ne.s32.totalorder %s77, %s80
    %p86 = scmp.eq.s32.totalorder %s18, 0
    %p87 = por %p85, %p86
    %p88 = scmp.ne.s32.totalorder %s77, %s80
    %p89 = scmp.eq.s32.totalorder %s23, 1
    %p90 = por %p88, %p89
    %p91 = scmp.ne.s32.totalorder %s80, %s81
    %p92 = scmp.eq.s32.totalorder %s23, 0
    %p93 = por %p91, %p92
    %p94 = scmp.ne.s32.totalorder %s80, %s81
    %p95 = scmp.eq.s32.totalorder %s24, 1
    %p96 = por %p94, %p95
    %p98 = scmp.ne.s32.totalorder %s81, %s97
    %p99 = scmp.eq.s32.totalorder %s24, 0
    %p100 = por %p98, %p99
    %s102 = sadd.s32 %s101, 1
    %p105 = scmp.eq.s32.totalorder %s18, 1
    %p106 = scmp.ne.s32.totalorder %s101, %s103
    %p107 = scmp.eq.s32.totalorder %s18, 0
    %p108 = por %p106, %p107
    %p109 = scmp.ne.s32.totalorder %s101, %s103
    %p110 = scmp.eq.s32.totalorder %s23, 1
    %p111 = por %p109, %p110
    %p112 = scmp.ne.s32.totalorder %s103, %s104
    %p113 = scmp.eq.s32.totalorder %s23, 0
    %p114 = por %p112, %p113
    %p115 = scmp.ne.s32.totalorder %s103, %s104
    %p116 = scmp.eq.s32.totalorder %s24, 1
    %p117 = por %p115, %p116
    %p119 = scmp.ne.s32.totalorder %s104, %s118
    %p120 = scmp.eq.s32.totalorder %s24, 0
    %p121 = por %p119, %p120
    %s123 = sadd.s32 %s122, 1
    %p126 = scmp.eq.s32.totalorder %s18, 1
    %p127 = scmp.ne.s32.totalorder %s122, %s124
    %p128 = scmp.eq.s32.totalorder %s18, 0
    %p129 = por %p127, %p128
    %p130 = scmp.ne.s32.totalorder %s122, %s124
    %p131 = scmp.eq.s32.totalorder %s23, 1
    %p132 = por %p130, %p131
    %p133 = scmp.ne.s32.totalorder %s124, %s125
    %p134 = scmp.eq.s32.totalorder %s23, 0
    %p135 = por %p133, %p134
    %p136 = scmp.ne.s32.totalorder %s124, %s125
    %p137 = scmp.eq.s32.totalorder %s24, 1
    %p138 = por %p136, %p137
    %p140 = scmp.ne.s32.totalorder %s125, %s139
    %p141 = scmp.eq.s32.totalorder %s24, 0
    %p142 = por %p140, %p141
    %s144 = sadd.s32 %s143, 1
    %p147 = scmp.eq.s32.totalorder %s18, 1
    %p148 = scmp.ne.s32.totalorder %s143, %s145
    %p149 = scmp.eq.s32.totalorder %s18, 0
    %p150 = por %p148, %p149
    %p151 = scmp.ne.s32.totalorder %s143, %s145
    %p152 = scmp.eq.s32.totalorder %s23, 1
    %p153 = por %p151, %p152
    %p154 = scmp.ne.s32.totalorder %s145, %s146
    %p155 = scmp.eq.s32.totalorder %s23, 0
    %p156 = por %p154, %p155
    %p157 = scmp.ne.s32.totalorder %s145, %s146
    %p158 = scmp.eq.s32.totalorder %s24, 1
    %p159 = por %p157, %p158
    %p161 = scmp.ne.s32.totalorder %s146, %s160
    %p162 = scmp.eq.s32.totalorder %s24, 0
    %p163 = por %p161, %p162
    %s165 = sadd.s32 %s164, 1
    %p168 = scmp.eq.s32.totalorder %s18, 1
    %p169 = scmp.ne.s32.totalorder %s164, %s166
    %p170 = scmp.eq.s32.totalorder %s18, 0
    %p171 = por %p169, %p170
    %p172 = scmp.ne.s32.totalorder %s164, %s166
    %p173 = scmp.eq.s32.totalorder %s23, 1
    %p174 = por %p172, %p173
    %p175 = scmp.ne.s32.totalorder %s166, %s167
    %p176 = scmp.eq.s32.totalorder %s23, 0
    %p177 = por %p175, %p176
    %p178 = scmp.ne.s32.totalorder %s166, %s167
    %p179 = scmp.eq.s32.totalorder %s24, 1
    %p180 = por %p178, %p179
    %p182 = scmp.ne.s32.totalorder %s167, %s181
    %p183 = scmp.eq.s32.totalorder %s24, 0
    %p184 = por %p182, %p183
    %s186 = sadd.s32 %s185, 1
    %p189 = scmp.eq.s32.totalorder %s18, 1
    %p190 = scmp.ne.s32.totalorder %s185, %s187
    %p191 = scmp.eq.s32.totalorder %s18, 0
    %p192 = por %p190, %p191
    %p193 = scmp.ne.s32.totalorder %s185, %s187
    %p194 = scmp.eq.s32.totalorder %s23, 1
    %p195 = por %p193, %p194
    %p196 = scmp.ne.s32.totalorder %s187, %s188
    %p197 = scmp.eq.s32.totalorder %s23, 0
    %p198 = por %p196, %p197
    %p199 = scmp.ne.s32.totalorder %s187, %s188
    %p200 = scmp.eq.s32.totalorder %s24, 1
    %p201 = por %p199, %p200
    %p203 = scmp.ne.s32.totalorder %s188, %s202
    %p204 = scmp.eq.s32.totalorder %s24, 0
    %p205 = por %p203, %p204
    %s207 = sadd.s32 %s206, 1
    %p210 = scmp.eq.s32.totalorder %s18, 1
    %p211 = scmp.ne.s32.totalorder %s206, %s208
    %p212 = scmp.eq.s32.totalorder %s18, 0
    %p213 = por %p211, %p212
    %p214 = scmp.ne.s32.totalorder %s206, %s208
    %p215 = scmp.eq.s32.totalorder %s23, 1
    %p216 = por %p214, %p215
    %p217 = scmp.ne.s32.totalorder %s208, %s209
    %p218 = scmp.eq.s32.totalorder %s23, 0
    %p219 = por %p217, %p218
    %p220 = scmp.ne.s32.totalorder %s208, %s209
    %p221 = scmp.eq.s32.totalorder %s24, 1
    %p222 = por %p220, %p221
    %p224 = scmp.ne.s32.totalorder %s209, %s223
    %p225 = scmp.eq.s32.totalorder %s24, 0
    %p226 = por %p224, %p225
    %s228 = sadd.s32 %s227, 1
    %p231 = scmp.eq.s32.totalorder %s18, 1
    %p232 = scmp.ne.s32.totalorder %s227, %s229
    %p233 = scmp.eq.s32.totalorder %s18, 0
    %p234 = por %p232, %p233
    %p235 = scmp.ne.s32.totalorder %s227, %s229
    %p236 = scmp.eq.s32.totalorder %s23, 1
    %p237 = por %p235, %p236
    %p238 = scmp.ne.s32.totalorder %s229, %s230
    %p239 = scmp.eq.s32.totalorder %s23, 0
    %p240 = por %p238, %p239
    %p241 = scmp.ne.s32.totalorder %s229, %s230
    %p242 = scmp.eq.s32.totalorder %s24, 1
    %p243 = por %p241, %p242
    %p245 = scmp.ne.s32.totalorder %s230, %s244
    %p246 = scmp.eq.s32.totalorder %s24, 0
    %p247 = por %p245, %p246
    %s249 = sadd.s32 %s248, 1
    %p252 = scmp.eq.s32.totalorder %s18, 1
    %p253 = scmp.ne.s32.totalorder %s248, %s250
    %p254 = scmp.eq.s32.totalorder %s18, 0
    %p255 = por %p253, %p254
    %p256 = scmp.ne.s32.totalorder %s248, %s250
    %p257 = scmp.eq.s32.totalorder %s23, 1
    %p258 = por %p256, %p257
    %p259 = scmp.ne.s32.totalorder %s250, %s251
    %p260 = scmp.eq.s32.totalorder %s23, 0
    %p261 = por %p259, %p260
    %p262 = scmp.ne.s32.totalorder %s250, %s251
    %p263 = scmp.eq.s32.totalorder %s24, 1
    %p264 = por %p262, %p263
    %p266 = scmp.ne.s32.totalorder %s251, %s265
    %p267 = scmp.eq.s32.totalorder %s24, 0
    %p268 = por %p266, %p267
    %s270 = sadd.s32 %s269, 1
    %p273 = scmp.eq.s32.totalorder %s18, 1
    %p274 = scmp.ne.s32.totalorder %s269, %s271
    %p275 = scmp.eq.s32.totalorder %s18, 0
    %p276 = por %p274, %p275
    %p277 = scmp.ne.s32.totalorder %s269, %s271
    %p278 = scmp.eq.s32.totalorder %s23, 1
    %p279 = por %p277, %p278
    %p280 = scmp.ne.s32.totalorder %s271, %s272
    %p281 = scmp.eq.s32.totalorder %s23, 0
    %p282 = por %p280, %p281
    %p283 = scmp.ne.s32.totalorder %s271, %s272
    %p284 = scmp.eq.s32.totalorder %s24, 1
    %p285 = por %p283, %p284
    %p287 = scmp.ne.s32.totalorder %s272, %s286
    %p288 = scmp.eq.s32.totalorder %s24, 0
    %p289 = por %p287, %p288
    %s291 = sadd.s32 %s290, 1
    %p294 = scmp.eq.s32.totalorder %s18, 1
    %p295 = scmp.ne.s32.totalorder %s290, %s292
    %p296 = scmp.eq.s32.totalorder %s18, 0
    %p297 = por %p295, %p296
    %p298 = scmp.ne.s32.totalorder %s290, %s292
    %p299 = scmp.eq.s32.totalorder %s23, 1
    %p300 = por %p298, %p299
    %p301 = scmp.ne.s32.totalorder %s292, %s293
    %p302 = scmp.eq.s32.totalorder %s23, 0
    %p303 = por %p301, %p302
    %p304 = scmp.ne.s32.totalorder %s292, %s293
    %p305 = scmp.eq.s32.totalorder %s24, 1
    %p306 = por %p304, %p305
    %p308 = scmp.ne.s32.totalorder %s293, %s307
    %p309 = scmp.eq.s32.totalorder %s24, 0
    %p310 = por %p308, %p309
    %s311 = ssub.s32 %s25, %s44
    %s312 = ssub.s32 %s26, %s40
    %s313 = sor.u32 %s311, %s312
    %p314 = scmp.eq.s32.totalorder %s313, 0
    %s316 = sadd.s32 %s315, 1
    %s317 = scalar_select %p314, %s315, %s316
    %p320 = pneg %p314
    %p321 = scmp.eq.s32.totalorder %s18, 1
    %p322 = por %p320, %p321
    %p323 = scmp.ne.s32.totalorder %s315, %s318
    %p324 = scmp.eq.s32.totalorder %s18, 0
    %p325 = por %p323, %p324
    %p326 = scmp.ne.s32.totalorder %s315, %s318
    %p327 = scmp.eq.s32.totalorder %s23, 1
    %p328 = por %p326, %p327
    %p329 = scmp.ne.s32.totalorder %s318, %s319
    %p330 = scmp.eq.s32.totalorder %s23, 0
    %p331 = por %p329, %p330
    %p332 = scmp.ne.s32.totalorder %s318, %s319
    %p333 = scmp.eq.s32.totalorder %s24, 1
    %p334 = por %p332, %p333
    %p336 = scmp.ne.s32.totalorder %s319, %s335
    %p337 = scmp.eq.s32.totalorder %s24, 0
    %p338 = por %p336, %p337
    %p339 = scmp.le.s32.totalorder 1, %s18
    %p340 = scmp.lt.s32.totalorder %s18, 3
    %p341 = pnand %p339, %p340
    %p342 = pneg %p341
    // Predicated region
    $region9: #{transformer_decoder_layer.3} parent=5 // pred_check
      _
    $region10: #{transformer_decoder_layer.3} parent=5 // pred_check_branch
      %344 = sbr.rel (%p341) target = $region12
    $region11: #{transformer_decoder_layer.3} parent=5 // pred_region
      %s345 = ssub.s32 %s18, 1
      // Predicated region
      $region13: #{transformer_decoder_layer.3} parent=11 // pred_check
        %p346 = pneg %p114
      $region14: #{transformer_decoder_layer.3} parent=11 // pred_check_branch
        %348 = sbr.rel (%p346) target = $region16
      $region15: #{transformer_decoder_layer.3} parent=11 // pred_region
        _
      $region16: #{transformer_decoder_layer.3} parent=11 // pred_fallthru
        _
      // Predicated region
      $region17: #{transformer_decoder_layer.3} parent=11 // pred_check
        %p349 = pneg %p135
      $region18: #{transformer_decoder_layer.3} parent=11 // pred_check_branch
        %351 = sbr.rel (%p349) target = $region20
      $region19: #{transformer_decoder_layer.3} parent=11 // pred_region
        _
      $region20: #{transformer_decoder_layer.3} parent=11 // pred_fallthru
        _
      // Predicated region
      $region21: #{transformer_decoder_layer.3} parent=11 // pred_check
        %p352 = pneg %p156
      $region22: #{transformer_decoder_layer.3} parent=11 // pred_check_branch
        %354 = sbr.rel (%p352) target = $region24
      $region23: #{transformer_decoder_layer.3} parent=11 // pred_region
        _
      $region24: #{transformer_decoder_layer.3} parent=11 // pred_fallthru
        _
      // Predicated region
      $region25: #{transformer_decoder_layer.3} parent=11 // pred_check
        %p355 = pneg %p177
      $region26: #{transformer_decoder_layer.3} parent=11 // pred_check_branch
        %357 = sbr.rel (%p355) target = $region28
      $region27: #{transformer_decoder_layer.3} parent=11 // pred_region
        _
      $region28: #{transformer_decoder_layer.3} parent=11 // pred_fallthru
        _
      // Predicated region
      $region29: #{transformer_decoder_layer.3} parent=11 // pred_check
        %p358 = pneg %p198
      $region30: #{transformer_decoder_layer.3} parent=11 // pred_check_branch
        %360 = sbr.rel (%p358) target = $region32
      $region31: #{transformer_decoder_layer.3} parent=11 // pred_region
        _
      $region32: #{transformer_decoder_layer.3} parent=11 // pred_fallthru
        _
      // Predicated region
      $region33: #{transformer_decoder_layer.3} parent=11 // pred_check
        %p361 = pneg %p219
      $region34: #{transformer_decoder_layer.3} parent=11 // pred_check_branch
        %363 = sbr.rel (%p361) target = $region36
      $region35: #{transformer_decoder_layer.3} parent=11 // pred_region
        _
      $region36: #{transformer_decoder_layer.3} parent=11 // pred_fallthru
        _
      // Predicated region
      $region37: #{transformer_decoder_layer.3} parent=11 // pred_check
        %p364 = pneg %p240
      $region38: #{transformer_decoder_layer.3} parent=11 // pred_check_branch
        %366 = sbr.rel (%p364) target = $region40
      $region39: #{transformer_decoder_layer.3} parent=11 // pred_region
        _
      $region40: #{transformer_decoder_layer.3} parent=11 // pred_fallthru
        _
      // Predicated region
      $region41: #{transformer_decoder_layer.3} parent=11 // pred_check
        %p367 = pneg %p261
      $region42: #{transformer_decoder_layer.3} parent=11 // pred_check_branch
        %369 = sbr.rel (%p367) target = $region44
      $region43: #{transformer_decoder_layer.3} parent=11 // pred_region
        _
      $region44: #{transformer_decoder_layer.3} parent=11 // pred_fallthru
        _
      // Predicated region
      $region45: #{transformer_decoder_layer.3} parent=11 // pred_check
        %p370 = pneg %p282
      $region46: #{transformer_decoder_layer.3} parent=11 // pred_check_branch
        %372 = sbr.rel (%p370) target = $region48
      $region47: #{transformer_decoder_layer.3} parent=11 // pred_region
        _
      $region48: #{transformer_decoder_layer.3} parent=11 // pred_fallthru
        _
      // Predicated region
      $region49: #{transformer_decoder_layer.3} parent=11 // pred_check
        %p373 = pneg %p303
      $region50: #{transformer_decoder_layer.3} parent=11 // pred_check_branch
        %375 = sbr.rel (%p373) target = $region52
      $region51: #{transformer_decoder_layer.3} parent=11 // pred_region
        _
      $region52: #{transformer_decoder_layer.3} parent=11 // pred_fallthru
        _
    $region12: #{transformer_decoder_layer.3} parent=5 // pred_fallthru
      _
    %p376 = scmp.lt.s32.totalorder %s18, 2
    // Predicated region
    $region53: #{transformer_decoder_layer.3} parent=5 // pred_check
      %p377 = pneg %p376
    $region54: #{transformer_decoder_layer.3} parent=5 // pred_check_branch
      %379 = sbr.rel (%p377) target = $region56
    $region55: #{transformer_decoder_layer.3} parent=5 // pred_region
      // Predicated region
      $region57: #{transformer_decoder_layer.3} parent=55 // pred_check
        %p380 = pneg %p59
      $region58: #{transformer_decoder_layer.3} parent=55 // pred_check_branch
        %382 = sbr.rel (%p380) target = $region60
      $region59: #{transformer_decoder_layer.3} parent=55 // pred_region
        %p383 = scmp.lt.s32.totalorder %s25, 1
        %s384 = scalar_select %p383, %s25, 1
        %p385 = scmp.lt.s32.totalorder %s26, 0
        %s386 = scalar_select %p385, %s26, 0
        %s387 = sadd.s32 %s386, %s384
        %s388 = smul.addr %s387, 8
        %s389 = scalar_lea.vmem %s0, %s388
      $region60: #{transformer_decoder_layer.3} parent=55 // pred_fallthru
        _
      // Predicated region
      $region61: #{transformer_decoder_layer.3} parent=55 // pred_check
        %p390 = pneg %p87
      $region62: #{transformer_decoder_layer.3} parent=55 // pred_check_branch
        %392 = sbr.rel (%p390) target = $region64
      $region63: #{transformer_decoder_layer.3} parent=55 // pred_region
        %p393 = scmp.lt.s32.totalorder %s25, 1
        %s394 = scalar_select %p393, %s25, 1
        %p395 = scmp.lt.s32.totalorder %s27, 0
        %s396 = scalar_select %p395, %s27, 0
        %s397 = sadd.s32 %s396, %s394
        %s398 = smul.addr %s397, 8
        %s399 = scalar_lea.vmem %s1, %s398
      $region64: #{transformer_decoder_layer.3} parent=55 // pred_fallthru
        _
    $region56: #{transformer_decoder_layer.3} parent=5 // pred_fallthru
      _
    %p400 = scmp.le.s32.totalorder 1, %s18
    %p401 = scmp.lt.s32.totalorder %s18, 3
    %p402 = pnand %p400, %p401
    %p403 = pneg %p402
    // Predicated region
    $region65: #{transformer_decoder_layer.3} parent=5 // pred_check
      _
    $region66: #{transformer_decoder_layer.3} parent=5 // pred_check_branch
      %405 = sbr.rel (%p402) target = $region68
    $region67: #{transformer_decoder_layer.3} parent=5 // pred_region
      %s406 = ssub.s32 %s18, 1
      %p407 = scmp.lt.s32.totalorder %s28, 1
      %s408 = scalar_select %p407, %s28, 1
      %p409 = scmp.lt.s32.totalorder %s29, 0
      %s410 = scalar_select %p409, %s29, 0
      %s411 = sadd.s32 %s410, %s408
      %s412 = smul.addr %s411, 8
      %s413 = scalar_lea.vmem %s0, %s412
      %p414 = pneg %p65
      %p415 = pneg %p62
      %p416 = scmp.lt.s32.totalorder %s28, 1
      %s417 = scalar_select %p416, %s28, 1
      %p418 = scmp.lt.s32.totalorder %s30, 0
      %s419 = scalar_select %p418, %s30, 0
      %s420 = sadd.s32 %s419, %s417
      %s421 = smul.addr %s420, 8
      %s422 = scalar_lea.vmem %s1, %s421
      %p423 = pneg %p93
      %p424 = pneg %p90
      %p425 = pneg %p114
      %p426 = pneg %p111
      %p427 = pneg %p135
      %p428 = pneg %p132
      %p429 = pneg %p156
      %p430 = pneg %p153
      %p431 = pneg %p177
      %p432 = pneg %p174
      %p433 = pneg %p198
      %p434 = pneg %p195
      %p435 = pneg %p219
      %p436 = pneg %p216
      %p437 = pneg %p240
      %p438 = pneg %p237
      %p439 = pneg %p261
      %p440 = pneg %p258
      %p441 = pneg %p282
      %p442 = pneg %p279
      %p443 = pneg %p303
      %p444 = pneg %p300
      %p445 = pneg %p331
      %p446 = pneg %p328
      %p447 = scmp.lt.s32.totalorder %s28, 1
      %s448 = scalar_select %p447, %s28, 1
      %p449 = scmp.lt.s32.totalorder %s29, 0
      %s450 = scalar_select %p449, %s29, 0
      %s451 = sadd.s32 %s450, %s448
      %s452 = smul.addr %s451, 8
      %s453 = scalar_lea.vmem %s12, %s452
      %p454 = scmp.lt.s32.totalorder %s28, 1
      %s455 = scalar_select %p454, %s28, 1
      %p456 = scmp.lt.s32.totalorder %s29, 0
      %s457 = scalar_select %p456, %s29, 0
      %s458 = sadd.s32 %s457, %s455
      %s459 = smul.addr %s458, 8
      %s460 = scalar_lea.vmem %s0, %s459
      %p461 = scmp.lt.s32.totalorder %s28, 1
      %s462 = scalar_select %p461, %s28, 1
      %p463 = scmp.lt.s32.totalorder %s30, 0
      %s464 = scalar_select %p463, %s30, 0
      %s465 = sadd.s32 %s464, %s462
      %s466 = smul.addr %s465, 8
      %s467 = scalar_lea.vmem %s1, %s466
      %p468 = scmp.lt.s32.totalorder %s28, 1
      %s469 = scalar_select %p468, %s28, 1
      %p470 = scmp.lt.s32.totalorder %s29, 0
      %s471 = scalar_select %p470, %s29, 0
      %s472 = sadd.s32 %s471, %s469
      %s473 = smul.addr %s472, 8
      %s474 = scalar_lea.vmem %s12, %s473
      %p476 = scmp.eq.s32.totalorder %s30, 0
      // Predicated region
      $region69: #{transformer_decoder_layer.3} parent=67 // pred_check
        %p477 = pneg %p476
      $region70: #{transformer_decoder_layer.3} parent=67 // pred_check_branch
        %479 = sbr.rel (%p477) target = $region72
      $region71: #{transformer_decoder_layer.3} parent=67 // pred_region
        %v480 = vld [vmem:[%s460] sm:$0xff]
        %v481 = vpack.c.bf16 %v480, %v480
        %v482 = vld [vmem:[%s2] sm:$0xf]
        %v483 = vld [vmem:[%s2 + $0x4] sm:$0xf]
        %v484 = vld [vmem:[%s2 + $0x8] sm:$0xf]
        %v485 = vld [vmem:[%s2 + $0xc] sm:$0xf]
        %v486 = vld [vmem:[%s3] sm:$0x1]
        %v488 = vlaneseq
        %v489 = vshrl.u32 %v488, 7
        %v490 = vsub.s32 0, %v489
        %v491 = vrot.slane %v486, %v490
        %v497 = vunpack.c.l.b16 %v482
        %v498 = vunpack.c.l.b16 %v483
        %v499 = vunpack.c.l.b16 %v484
        %v500 = vunpack.c.l.b16 %v485
        %v501 = vpack.c.b16 %v498, %v497
        %v502 = vpack.c.b16 %v500, %v499
        %vm505 = vcmask 261120
        %v507 = vsel %vm505, %v481, 0
        %509 = vmatprep.subr.bf16.mxu0 0
        %510 = vmatpush1.bf16.msra.mxu0 %v501
        %511 = vmatprep.subr.bf16.mxu0 0
        %512 = vmatpush1.bf16.msra.mxu0 %v502
        %513 = vmatprep.subr.bf16.mxu0 0
        %514 = vmatpush1.bf16.msra.mxu0 0
        %515 = vmatprep.subr.bf16.mxu0 0
        %516 = vmatpush1.bf16.msra.mxu0 0
        %517 = vmatprep.subr.bf16.mxu0 0
        %518 = vmatpush1.bf16.msra.mxu0 0
        %519 = vmatprep.subr.bf16.mxu0 0
        %520 = vmatpush1.bf16.msra.mxu0 0
        %521 = vmatprep.subr.bf16.mxu0 0
        %522 = vmatpush1.bf16.msra.mxu0 0
        %523 = vmatprep.subr.bf16.mxu0 0
        %524 = vmatpush1.bf16.msra.mxu0 0
        %525 = vmatprep.subr.bf16.mxu0 0
        %526 = vmatpush1.bf16.msra.mxu0 0
        %527 = vmatprep.subr.bf16.mxu0 0
        %528 = vmatpush1.bf16.msra.mxu0 0
        %529 = vmatprep.subr.bf16.mxu0 0
        %530 = vmatpush1.bf16.msra.mxu0 0
        %531 = vmatprep.subr.bf16.mxu0 0
        %532 = vmatpush1.bf16.msra.mxu0 0
        %533 = vmatprep.subr.bf16.mxu0 0
        %534 = vmatpush1.bf16.msra.mxu0 0
        %535 = vmatprep.subr.bf16.mxu0 0
        %536 = vmatpush1.bf16.msra.mxu0 0
        %537 = vmatprep.subr.bf16.mxu0 0
        %538 = vmatpush1.bf16.msra.mxu0 0
        %539 = vmatprep.subr.bf16.mxu0 0
        %540 = vmatpush1.bf16.msra.mxu0 0
        %541 = vmatprep.mubr.bf16.mxu0 0
        %542 = vmatmul.mubr.bf16.gmra.mrb[0].mxu0 %v507
        %v543 = vpop.f32.mrb[0].mxu0
        %v544 = vadd.f32 %v491, %v543
        %v545 = vpop.f32.mrb[0].mxu0
        %v546 = vpop.f32.mrb[0].mxu0
        %v547 = vpop.f32.mrb[0].mxu0
        %548 = vdwg.mxu0
        %v549 = vpack.c.bf16 %v544, %v544
        %vm550 = vcmask 60416
        %551 = vst.msk [vmem:[#allocation2] sm:$0xf] %vm550, %v549
        %s552 = scalar_lea.vmem %s2, 16
        %v553 = vld [vmem:[%s552] sm:$0xf]
        %v554 = vld [vmem:[%s552 + $0x4] sm:$0xf]
        %v555 = vld [vmem:[%s552 + $0x8] sm:$0xf]
        %v556 = vld [vmem:[%s552 + $0xc] sm:$0xf]
        %s557 = scalar_lea.vmem %s3, 1
        %v558 = vld [vmem:[%s557] sm:$0x1]
        %v560 = vlaneseq
        %v561 = vshrl.u32 %v560, 7
        %v562 = vsub.s32 0, %v561
        %v563 = vrot.slane %v558, %v562
        %v569 = vunpack.c.l.b16 %v553
        %v570 = vunpack.c.l.b16 %v554
        %v571 = vunpack.c.l.b16 %v555
        %v572 = vunpack.c.l.b16 %v556
        %v573 = vpack.c.b16 %v570, %v569
        %v574 = vpack.c.b16 %v572, %v571
        %577 = vmatprep.subr.bf16.mxu0 0
        %578 = vmatpush1.bf16.msra.mxu0 %v573
        %579 = vmatprep.subr.bf16.mxu0 0
        %580 = vmatpush1.bf16.msra.mxu0 %v574
        %581 = vmatprep.subr.bf16.mxu0 0
        %582 = vmatpush1.bf16.msra.mxu0 0
        %583 = vmatprep.subr.bf16.mxu0 0
        %584 = vmatpush1.bf16.msra.mxu0 0
        %585 = vmatprep.subr.bf16.mxu0 0
        %586 = vmatpush1.bf16.msra.mxu0 0
        %587 = vmatprep.subr.bf16.mxu0 0
        %588 = vmatpush1.bf16.msra.mxu0 0
        %589 = vmatprep.subr.bf16.mxu0 0
        %590 = vmatpush1.bf16.msra.mxu0 0
        %591 = vmatprep.subr.bf16.mxu0 0
        %592 = vmatpush1.bf16.msra.mxu0 0
        %593 = vmatprep.subr.bf16.mxu0 0
        %594 = vmatpush1.bf16.msra.mxu0 0
        %595 = vmatprep.subr.bf16.mxu0 0
        %596 = vmatpush1.bf16.msra.mxu0 0
        %597 = vmatprep.subr.bf16.mxu0 0
        %598 = vmatpush1.bf16.msra.mxu0 0
        %599 = vmatprep.subr.bf16.mxu0 0
        %600 = vmatpush1.bf16.msra.mxu0 0
        %601 = vmatprep.subr.bf16.mxu0 0
        %602 = vmatpush1.bf16.msra.mxu0 0
        %603 = vmatprep.subr.bf16.mxu0 0
        %604 = vmatpush1.bf16.msra.mxu0 0
        %605 = vmatprep.subr.bf16.mxu0 0
        %606 = vmatpush1.bf16.msra.mxu0 0
        %607 = vmatprep.subr.bf16.mxu0 0
        %608 = vmatpush1.bf16.msra.mxu0 0
        %609 = vmatprep.mubr.bf16.mxu0 0
        %610 = vmatmul.mubr.bf16.gmra.mrb[0].mxu0 %v507
        %v611 = vpop.f32.mrb[0].mxu0
        %v612 = vadd.f32 %v563, %v611
        %v613 = vpop.f32.mrb[0].mxu0
        %v614 = vpop.f32.mrb[0].mxu0
        %v615 = vpop.f32.mrb[0].mxu0
        %616 = vdwg.mxu0
        %v617 = vpack.c.bf16 %v612, %v612
        %s618 = scalar_lea.vmem [#allocation2], 4
        %619 = vst.msk [vmem:[%s618] sm:$0xf] %vm550, %v617
        %s620 = scalar_lea.vmem %s2, 32
        %v621 = vld [vmem:[%s620] sm:$0xf]
        %v622 = vld [vmem:[%s620 + $0x4] sm:$0xf]
        %v623 = vld [vmem:[%s620 + $0x8] sm:$0xf]
        %v624 = vld [vmem:[%s620 + $0xc] sm:$0xf]
        %s625 = scalar_lea.vmem %s3, 2
        %v626 = vld [vmem:[%s625] sm:$0x1]
        %v628 = vlaneseq
        %v629 = vshrl.u32 %v628, 7
        %v630 = vsub.s32 0, %v629
        %v631 = vrot.slane %v626, %v630
        %v637 = vunpack.c.l.b16 %v621
        %v638 = vunpack.c.l.b16 %v622
        %v639 = vunpack.c.l.b16 %v623
        %v640 = vunpack.c.l.b16 %v624
        %v641 = vpack.c.b16 %v638, %v637
        %v642 = vpack.c.b16 %v640, %v639
        %645 = vmatprep.subr.bf16.mxu0 0
        %646 = vmatpush1.bf16.msra.mxu0 %v641
        %647 = vmatprep.subr.bf16.mxu0 0
        %648 = vmatpush1.bf16.msra.mxu0 %v642
        %649 = vmatprep.subr.bf16.mxu0 0
        %650 = vmatpush1.bf16.msra.mxu0 0
        %651 = vmatprep.subr.bf16.mxu0 0
        %652 = vmatpush1.bf16.msra.mxu0 0
        %653 = vmatprep.subr.bf16.mxu0 0
        %654 = vmatpush1.bf16.msra.mxu0 0
        %655 = vmatprep.subr.bf16.mxu0 0
        %656 = vmatpush1.bf16.msra.mxu0 0
        %657 = vmatprep.subr.bf16.mxu0 0
        %658 = vmatpush1.bf16.msra.mxu0 0
        %659 = vmatprep.subr.bf16.mxu0 0
        %660 = vmatpush1.bf16.msra.mxu0 0
        %661 = vmatprep.subr.bf16.mxu0 0
        %662 = vmatpush1.bf16.msra.mxu0 0
        %663 = vmatprep.subr.bf16.mxu0 0
        %664 = vmatpush1.bf16.msra.mxu0 0
        %665 = vmatprep.subr.bf16.mxu0 0
        %666 = vmatpush1.bf16.msra.mxu0 0
        %667 = vmatprep.subr.bf16.mxu0 0
        %668 = vmatpush1.bf16.msra.mxu0 0
        %669 = vmatprep.subr.bf16.mxu0 0
        %670 = vmatpush1.bf16.msra.mxu0 0
        %671 = vmatprep.subr.bf16.mxu0 0
        %672 = vmatpush1.bf16.msra.mxu0 0
        %673 = vmatprep.subr.bf16.mxu0 0
        %674 = vmatpush1.bf16.msra.mxu0 0
        %675 = vmatprep.subr.bf16.mxu0 0
        %676 = vmatpush1.bf16.msra.mxu0 0
        %677 = vmatprep.mubr.bf16.mxu0 0
        %678 = vmatmul.mubr.bf16.gmra.mrb[0].mxu0 %v507
        %v679 = vpop.f32.mrb[0].mxu0
        %v680 = vadd.f32 %v631, %v679
        %v681 = vpop.f32.mrb[0].mxu0
        %v682 = vpop.f32.mrb[0].mxu0
        %v683 = vpop.f32.mrb[0].mxu0
        %684 = vdwg.mxu0
        %v685 = vpack.c.bf16 %v680, %v680
        %s686 = scalar_lea.vmem [#allocation2], 8
        %687 = vst.msk [vmem:[%s686] sm:$0xf] %vm550, %v685
        %s688 = scalar_lea.vmem %s2, 48
        %v689 = vld [vmem:[%s688] sm:$0xf]
        %v690 = vld [vmem:[%s688 + $0x4] sm:$0xf]
        %v691 = vld [vmem:[%s688 + $0x8] sm:$0xf]
        %v692 = vld [vmem:[%s688 + $0xc] sm:$0xf]
        %s693 = scalar_lea.vmem %s3, 3
        %v694 = vld [vmem:[%s693] sm:$0x1]
        %v696 = vlaneseq
        %v697 = vshrl.u32 %v696, 7
        %v698 = vsub.s32 0, %v697
        %v699 = vrot.slane %v694, %v698
        %v705 = vunpack.c.l.b16 %v689
        %v706 = vunpack.c.l.b16 %v690
        %v707 = vunpack.c.l.b16 %v691
        %v708 = vunpack.c.l.b16 %v692
        %v709 = vpack.c.b16 %v706, %v705
        %v710 = vpack.c.b16 %v708, %v707
        %713 = vmatprep.subr.bf16.mxu0 0
        %714 = vmatpush1.bf16.msra.mxu0 %v709
        %715 = vmatprep.subr.bf16.mxu0 0
        %716 = vmatpush1.bf16.msra.mxu0 %v710
        %717 = vmatprep.subr.bf16.mxu0 0
        %718 = vmatpush1.bf16.msra.mxu0 0
        %719 = vmatprep.subr.bf16.mxu0 0
        %720 = vmatpush1.bf16.msra.mxu0 0
        %721 = vmatprep.subr.bf16.mxu0 0
        %722 = vmatpush1.bf16.msra.mxu0 0
        %723 = vmatprep.subr.bf16.mxu0 0
        %724 = vmatpush1.bf16.msra.mxu0 0
        %725 = vmatprep.subr.bf16.mxu0 0
        %726 = vmatpush1.bf16.msra.mxu0 0
        %727 = vmatprep.subr.bf16.mxu0 0
        %728 = vmatpush1.bf16.msra.mxu0 0
        %729 = vmatprep.subr.bf16.mxu0 0
        %730 = vmatpush1.bf16.msra.mxu0 0
        %731 = vmatprep.subr.bf16.mxu0 0
        %732 = vmatpush1.bf16.msra.mxu0 0
        %733 = vmatprep.subr.bf16.mxu0 0
        %734 = vmatpush1.bf16.msra.mxu0 0
        %735 = vmatprep.subr.bf16.mxu0 0
        %736 = vmatpush1.bf16.msra.mxu0 0
        %737 = vmatprep.subr.bf16.mxu0 0
        %738 = vmatpush1.bf16.msra.mxu0 0
        %739 = vmatprep.subr.bf16.mxu0 0
        %740 = vmatpush1.bf16.msra.mxu0 0
        %741 = vmatprep.subr.bf16.mxu0 0
        %742 = vmatpush1.bf16.msra.mxu0 0
        %743 = vmatprep.subr.bf16.mxu0 0
        %744 = vmatpush1.bf16.msra.mxu0 0
        %745 = vmatprep.mubr.bf16.mxu0 0
        %746 = vmatmul.mubr.bf16.gmra.mrb[0].mxu0 %v507
        %v747 = vpop.f32.mrb[0].mxu0
        %v748 = vadd.f32 %v699, %v747
        %v749 = vpop.f32.mrb[0].mxu0
        %v750 = vpop.f32.mrb[0].mxu0
        %v751 = vpop.f32.mrb[0].mxu0
        %752 = vdwg.mxu0
        %v753 = vpack.c.bf16 %v748, %v748
        %s754 = scalar_lea.vmem [#allocation2], 12
        %755 = vst.msk [vmem:[%s754] sm:$0xf] %vm550, %v753
        %vm756 = vcmask 7168
        %757 = vst.msk [vmem:[#allocation3] sm:$0xff] %vm756, -inf
        %758 = vst.msk [vmem:[#allocation3 + $0x8] sm:$0xff] %vm756, -inf
        %759 = vst.msk [vmem:[#allocation3 + $0x10] sm:$0xff] %vm756, -inf
        %760 = vst.msk [vmem:[#allocation3 + $0x18] sm:$0xff] %vm756, -inf
        %761 = vst.msk [vmem:[#allocation4] sm:$0xff] %vm756, 0.0
        %762 = vst.msk [vmem:[#allocation4 + $0x8] sm:$0xff] %vm756, 0.0
        %763 = vst.msk [vmem:[#allocation4 + $0x10] sm:$0xff] %vm756, 0.0
        %764 = vst.msk [vmem:[#allocation4 + $0x18] sm:$0xff] %vm756, 0.0
        %vm765 = vcmask 64512
        %766 = vst.msk [vmem:[#allocation5] sm:$0xff] %vm765, 0.0
        %767 = vst.msk [vmem:[#allocation5 + $0x8] sm:$0xff] %vm765, 0.0
        %768 = vst.msk [vmem:[#allocation5 + $0x10] sm:$0xff] %vm765, 0.0
        %769 = vst.msk [vmem:[#allocation5 + $0x18] sm:$0xff] %vm765, 0.0
      $region72: #{transformer_decoder_layer.3} parent=67 // pred_fallthru
        _
      %v770 = vld [vmem:[%s467] sm:$0xff]
      %v771 = vpack.c.bf16 %v770, %v770
      %v772 = vld [vmem:[%s4] sm:$0xf]
      %v773 = vld [vmem:[%s4 + $0x4] sm:$0xf]
      %v774 = vld [vmem:[%s4 + $0x8] sm:$0xf]
      %v775 = vld [vmem:[%s4 + $0xc] sm:$0xf]
      %v776 = vld [vmem:[%s5] sm:$0x1]
      %v778 = vlaneseq
      %v779 = vshrl.u32 %v778, 7
      %v780 = vsub.s32 0, %v779
      %v781 = vrot.slane %v776, %v780
      %v787 = vunpack.c.l.b16 %v772
      %v788 = vunpack.c.l.b16 %v773
      %v789 = vunpack.c.l.b16 %v774
      %v790 = vunpack.c.l.b16 %v775
      %v791 = vpack.c.b16 %v788, %v787
      %v792 = vpack.c.b16 %v790, %v789
      %vm795 = vcmask 261120
      %v797 = vsel %vm795, %v771, 0
      %799 = vmatprep.subr.bf16.mxu0 0
      %800 = vmatpush1.bf16.msra.mxu0 %v791
      %801 = vmatprep.subr.bf16.mxu0 0
      %802 = vmatpush1.bf16.msra.mxu0 %v792
      %803 = vmatprep.subr.bf16.mxu0 0
      %804 = vmatpush1.bf16.msra.mxu0 0
      %805 = vmatprep.subr.bf16.mxu0 0
      %806 = vmatpush1.bf16.msra.mxu0 0
      %807 = vmatprep.subr.bf16.mxu0 0
      %808 = vmatpush1.bf16.msra.mxu0 0
      %809 = vmatprep.subr.bf16.mxu0 0
      %810 = vmatpush1.bf16.msra.mxu0 0
      %811 = vmatprep.subr.bf16.mxu0 0
      %812 = vmatpush1.bf16.msra.mxu0 0
      %813 = vmatprep.subr.bf16.mxu0 0
      %814 = vmatpush1.bf16.msra.mxu0 0
      %815 = vmatprep.subr.bf16.mxu0 0
      %816 = vmatpush1.bf16.msra.mxu0 0
      %817 = vmatprep.subr.bf16.mxu0 0
      %818 = vmatpush1.bf16.msra.mxu0 0
      %819 = vmatprep.subr.bf16.mxu0 0
      %820 = vmatpush1.bf16.msra.mxu0 0
      %821 = vmatprep.subr.bf16.mxu0 0
      %822 = vmatpush1.bf16.msra.mxu0 0
      %823 = vmatprep.subr.bf16.mxu0 0
      %824 = vmatpush1.bf16.msra.mxu0 0
      %825 = vmatprep.subr.bf16.mxu0 0
      %826 = vmatpush1.bf16.msra.mxu0 0
      %827 = vmatprep.subr.bf16.mxu0 0
      %828 = vmatpush1.bf16.msra.mxu0 0
      %829 = vmatprep.subr.bf16.mxu0 0
      %830 = vmatpush1.bf16.msra.mxu0 0
      %831 = vmatprep.mubr.bf16.mxu0 0
      %832 = vmatmul.mubr.bf16.gmra.mrb[0].mxu0 %v797
      %v833 = vpop.f32.mrb[0].mxu0
      %v834 = vadd.f32 %v781, %v833
      %v835 = vpop.f32.mrb[0].mxu0
      %v836 = vpop.f32.mrb[0].mxu0
      %v837 = vpop.f32.mrb[0].mxu0
      %838 = vdwg.mxu0
      %v839 = vpack.c.bf16 %v834, %v834
      %v840 = vld [vmem:[%s6] sm:$0xf]
      %v841 = vld [vmem:[%s6 + $0x4] sm:$0xf]
      %v842 = vld [vmem:[%s6 + $0x8] sm:$0xf]
      %v843 = vld [vmem:[%s6 + $0xc] sm:$0xf]
      %v844 = vld [vmem:[%s7] sm:$0x1]
      %v846 = vlaneseq
      %v847 = vshrl.u32 %v846, 7
      %v848 = vsub.s32 0, %v847
      %v849 = vrot.slane %v844, %v848
      %v855 = vunpack.c.l.b16 %v840
      %v856 = vunpack.c.l.b16 %v841
      %v857 = vunpack.c.l.b16 %v842
      %v858 = vunpack.c.l.b16 %v843
      %v859 = vpack.c.b16 %v856, %v855
      %v860 = vpack.c.b16 %v858, %v857
      %863 = vmatprep.subr.bf16.mxu0 0
      %864 = vmatpush1.bf16.msra.mxu0 %v859
      %865 = vmatprep.subr.bf16.mxu0 0
      %866 = vmatpush1.bf16.msra.mxu0 %v860
      %867 = vmatprep.subr.bf16.mxu0 0
      %868 = vmatpush1.bf16.msra.mxu0 0
      %869 = vmatprep.subr.bf16.mxu0 0
      %870 = vmatpush1.bf16.msra.mxu0 0
      %871 = vmatprep.subr.bf16.mxu0 0
      %872 = vmatpush1.bf16.msra.mxu0 0
      %873 = vmatprep.subr.bf16.mxu0 0
      %874 = vmatpush1.bf16.msra.mxu0 0
      %875 = vmatprep.subr.bf16.mxu0 0
      %876 = vmatpush1.bf16.msra.mxu0 0
      %877 = vmatprep.subr.bf16.mxu0 0
      %878 = vmatpush1.bf16.msra.mxu0 0
      %879 = vmatprep.subr.bf16.mxu0 0
      %880 = vmatpush1.bf16.msra.mxu0 0
      %881 = vmatprep.subr.bf16.mxu0 0
      %882 = vmatpush1.bf16.msra.mxu0 0
      %883 = vmatprep.subr.bf16.mxu0 0
      %884 = vmatpush1.bf16.msra.mxu0 0
      %885 = vmatprep.subr.bf16.mxu0 0
      %886 = vmatpush1.bf16.msra.mxu0 0
      %887 = vmatprep.subr.bf16.mxu0 0
      %888 = vmatpush1.bf16.msra.mxu0 0
      %889 = vmatprep.subr.bf16.mxu0 0
      %890 = vmatpush1.bf16.msra.mxu0 0
      %891 = vmatprep.subr.bf16.mxu0 0
      %892 = vmatpush1.bf16.msra.mxu0 0
      %893 = vmatprep.subr.bf16.mxu0 0
      %894 = vmatpush1.bf16.msra.mxu0 0
      %895 = vmatprep.mubr.bf16.mxu0 0
      %896 = vmatmul.mubr.bf16.gmra.mrb[0].mxu0 %v797
      %v897 = vpop.f32.mrb[0].mxu0
      %v898 = vadd.f32 %v849, %v897
      %v899 = vpop.f32.mrb[0].mxu0
      %v900 = vpop.f32.mrb[0].mxu0
      %v901 = vpop.f32.mrb[0].mxu0
      %902 = vdwg.mxu0
      %v903 = vpack.c.bf16 %v898, %v898
      %v904 = vld [vmem:[#allocation2] sm:$0xf]
      %vm905 = vcmask 64512
      %v907 = vsel %vm905, %v904, 0
      %v910 = vsel %vm905, %v839, 0
      %912 = vmatprep.subr.bf16.mxu0 0
      %913 = vmatpush1.bf16.xpose.msra.mxu0 %v910
      %914 = vmatprep.subr.bf16.mxu0 0
      %915 = vmatpush1.bf16.xpose.msra.mxu0 0
      %916 = vmatprep.subr.bf16.mxu0 0
      %917 = vmatpush1.bf16.xpose.msra.mxu0 0
      %918 = vmatprep.subr.bf16.mxu0 0
      %919 = vmatpush1.bf16.xpose.msra.mxu0 0
      %920 = vmatprep.subr.bf16.mxu0 0
      %921 = vmatpush1.bf16.xpose.msra.mxu0 0
      %922 = vmatprep.subr.bf16.mxu0 0
      %923 = vmatpush1.bf16.xpose.msra.mxu0 0
      %924 = vmatprep.subr.bf16.mxu0 0
      %925 = vmatpush1.bf16.xpose.msra.mxu0 0
      %926 = vmatprep.subr.bf16.mxu0 0
      %927 = vmatpush1.bf16.xpose.msra.mxu0 0
      %928 = vmatprep.subr.bf16.mxu0 0
      %929 = vmatpush1.bf16.xpose.msra.mxu0 0
      %930 = vmatprep.subr.bf16.mxu0 0
      %931 = vmatpush1.bf16.xpose.msra.mxu0 0
      %932 = vmatprep.subr.bf16.mxu0 0
      %933 = vmatpush1.bf16.xpose.msra.mxu0 0
      %934 = vmatprep.subr.bf16.mxu0 0
      %935 = vmatpush1.bf16.xpose.msra.mxu0 0
      %936 = vmatprep.subr.bf16.mxu0 0
      %937 = vmatpush1.bf16.xpose.msra.mxu0 0
      %938 = vmatprep.subr.bf16.mxu0 0
      %939 = vmatpush1.bf16.xpose.msra.mxu0 0
      %940 = vmatprep.subr.bf16.mxu0 0
      %941 = vmatpush1.bf16.xpose.msra.mxu0 0
      %942 = vmatprep.subr.bf16.mxu0 0
      %943 = vmatpush1.bf16.xpose.msra.mxu0 0
      %944 = vmatprep.mubr.bf16.mxu0 0
      %945 = vmatmul.mubr.bf16.gmra.mrb[0].mxu0 %v907
      %v946 = vpop.f32.mrb[0].mxu0
      %v947 = vadd.f32 0.0, %v946
      %v948 = vpop.f32.mrb[0].mxu0
      %v949 = vpop.f32.mrb[0].mxu0
      %v950 = vpop.f32.mrb[0].mxu0
      %951 = vdwg.mxu0
      %v952 = vld [vmem:[#allocation3] sm:$0xff]
      %v953 = vsel %vm905, %v947, -inf
      %954 = vmax.xlane.f32.xlu0 %v953
      %v955 = vpop.xlane.xlu0 %954
      %v956 = vmax.f32 %v952, %v955
      %v957 = vsub.f32 %v952, %v956
      %v958 = vmul.f32 %v957, 1.442695
      %v959 = vpow.pop %v958
      %961 = vset.pattern.permute.xlu0 0
      %962 = vperm.xlu0 %961, %v956
      %v963 = vpop.permute.xlu0 %962
      %v965 = vsub.f32 %v947, %v963
      %v966 = vmul.f32 %v965, 1.442695
      %v967 = vpow.pop %v966
      %v968 = vld [vmem:[#allocation4] sm:$0xff]
      %v969 = vmul.f32 %v959, %v968
      %v970 = vsel %vm905, %v967, 0.0
      %971 = vadd.xlane.f32.xlu0 %v970
      %v972 = vpop.xlane.xlu0 %971
      %v973 = vadd.f32 %v969, %v972
      %vm974 = vcmask 7168
      %975 = vst.msk [vmem:[#allocation4] sm:$0xff] %vm974, %v973
      %v976 = vld [vmem:[#allocation5] sm:$0xff]
      %978 = vset.pattern.permute.xlu0 0
      %979 = vperm.xlu0 %978, %v959
      %v980 = vpop.permute.xlu0 %979
      %v982 = vmul.f32 %v980, %v976
      %v983 = vpack.c.bf16 %v967, %v967
      %v985 = vsel %vm905, %v983, 0
      %vm987 = vcmask 1043456
      %v989 = vsel %vm987, %v903, 0
      %991 = vmatprep.subr.bf16.mxu0 0
      %992 = vmatpush1.bf16.msra.mxu0 %v989
      %993 = vmatprep.subr.bf16.mxu0 0
      %994 = vmatpush1.bf16.msra.mxu0 0
      %995 = vmatprep.subr.bf16.mxu0 0
      %996 = vmatpush1.bf16.msra.mxu0 0
      %997 = vmatprep.subr.bf16.mxu0 0
      %998 = vmatpush1.bf16.msra.mxu0 0
      %999 = vmatprep.subr.bf16.mxu0 0
      %1000 = vmatpush1.bf16.msra.mxu0 0
      %1001 = vmatprep.subr.bf16.mxu0 0
      %1002 = vmatpush1.bf16.msra.mxu0 0
      %1003 = vmatprep.subr.bf16.mxu0 0
      %1004 = vmatpush1.bf16.msra.mxu0 0
      %1005 = vmatprep.subr.bf16.mxu0 0
      %1006 = vmatpush1.bf16.msra.mxu0 0
      %1007 = vmatprep.subr.bf16.mxu0 0
      %1008 = vmatpush1.bf16.msra.mxu0 0
      %1009 = vmatprep.subr.bf16.mxu0 0
      %1010 = vmatpush1.bf16.msra.mxu0 0
      %1011 = vmatprep.subr.bf16.mxu0 0
      %1012 = vmatpush1.bf16.msra.mxu0 0
      %1013 = vmatprep.subr.bf16.mxu0 0
      %1014 = vmatpush1.bf16.msra.mxu0 0
      %1015 = vmatprep.subr.bf16.mxu0 0
      %1016 = vmatpush1.bf16.msra.mxu0 0
      %1017 = vmatprep.subr.bf16.mxu0 0
      %1018 = vmatpush1.bf16.msra.mxu0 0
      %1019 = vmatprep.subr.bf16.mxu0 0
      %1020 = vmatpush1.bf16.msra.mxu0 0
      %1021 = vmatprep.subr.bf16.mxu0 0
      %1022 = vmatpush1.bf16.msra.mxu0 0
      %1023 = vmatprep.mubr.bf16.mxu0 0
      %1024 = vmatmul.mubr.bf16.gmra.mrb[0].mxu0 %v985
      %v1025 = vpop.f32.mrb[0].mxu0
      %v1026 = vadd.f32 0.0, %v1025
      %v1027 = vpop.f32.mrb[0].mxu0
      %v1028 = vpop.f32.mrb[0].mxu0
      %v1029 = vpop.f32.mrb[0].mxu0
      %1030 = vdwg.mxu0
      %v1031 = vadd.f32 %v982, %v1026
      %1032 = vst.msk [vmem:[#allocation5] sm:$0xff] %vm905, %v1031
      %1033 = vst.msk [vmem:[#allocation3] sm:$0xff] %vm974, %v956
      %s1034 = scalar_lea.vmem %s4, 16
      %v1035 = vld [vmem:[%s1034] sm:$0xf]
      %v1036 = vld [vmem:[%s1034 + $0x4] sm:$0xf]
      %v1037 = vld [vmem:[%s1034 + $0x8] sm:$0xf]
      %v1038 = vld [vmem:[%s1034 + $0xc] sm:$0xf]
      %s1039 = scalar_lea.vmem %s5, 1
      %v1040 = vld [vmem:[%s1039] sm:$0x1]
      %v1042 = vlaneseq
      %v1043 = vshrl.u32 %v1042, 7
      %v1044 = vsub.s32 0, %v1043
      %v1045 = vrot.slane %v1040, %v1044
      %v1051 = vunpack.c.l.b16 %v1035
      %v1052 = vunpack.c.l.b16 %v1036
      %v1053 = vunpack.c.l.b16 %v1037
      %v1054 = vunpack.c.l.b16 %v1038
      %v1055 = vpack.c.b16 %v1052, %v1051
      %v1056 = vpack.c.b16 %v1054, %v1053
      %1059 = vmatprep.subr.bf16.mxu0 0
      %1060 = vmatpush1.bf16.msra.mxu0 %v1055
      %1061 = vmatprep.subr.bf16.mxu0 0
      %1062 = vmatpush1.bf16.msra.mxu0 %v1056
      %1063 = vmatprep.subr.bf16.mxu0 0
      %1064 = vmatpush1.bf16.msra.mxu0 0
      %1065 = vmatprep.subr.bf16.mxu0 0
      %1066 = vmatpush1.bf16.msra.mxu0 0
      %1067 = vmatprep.subr.bf16.mxu0 0
      %1068 = vmatpush1.bf16.msra.mxu0 0
      %1069 = vmatprep.subr.bf16.mxu0 0
      %1070 = vmatpush1.bf16.msra.mxu0 0
      %1071 = vmatprep.subr.bf16.mxu0 0
      %1072 = vmatpush1.bf16.msra.mxu0 0
      %1073 = vmatprep.subr.bf16.mxu0 0
      %1074 = vmatpush1.bf16.msra.mxu0 0
      %1075 = vmatprep.subr.bf16.mxu0 0
      %1076 = vmatpush1.bf16.msra.mxu0 0
      %1077 = vmatprep.subr.bf16.mxu0 0
      %1078 = vmatpush1.bf16.msra.mxu0 0
      %1079 = vmatprep.subr.bf16.mxu0 0
      %1080 = vmatpush1.bf16.msra.mxu0 0
      %1081 = vmatprep.subr.bf16.mxu0 0
      %1082 = vmatpush1.bf16.msra.mxu0 0
      %1083 = vmatprep.subr.bf16.mxu0 0
      %1084 = vmatpush1.bf16.msra.mxu0 0
      %1085 = vmatprep.subr.bf16.mxu0 0
      %1086 = vmatpush1.bf16.msra.mxu0 0
      %1087 = vmatprep.subr.bf16.mxu0 0
      %1088 = vmatpush1.bf16.msra.mxu0 0
      %1089 = vmatprep.subr.bf16.mxu0 0
      %1090 = vmatpush1.bf16.msra.mxu0 0
      %1091 = vmatprep.mubr.bf16.mxu0 0
      %1092 = vmatmul.mubr.bf16.gmra.mrb[0].mxu0 %v797
      %v1093 = vpop.f32.mrb[0].mxu0
      %v1094 = vadd.f32 %v1045, %v1093
      %v1095 = vpop.f32.mrb[0].mxu0
      %v1096 = vpop.f32.mrb[0].mxu0
      %v1097 = vpop.f32.mrb[0].mxu0
      %1098 = vdwg.mxu0
      %v1099 = vpack.c.bf16 %v1094, %v1094
      %s1100 = scalar_lea.vmem %s6, 16
      %v1101 = vld [vmem:[%s1100] sm:$0xf]
      %v1102 = vld [vmem:[%s1100 + $0x4] sm:$0xf]
      %v1103 = vld [vmem:[%s1100 + $0x8] sm:$0xf]
      %v1104 = vld [vmem:[%s1100 + $0xc] sm:$0xf]
      %s1105 = scalar_lea.vmem %s7, 1
      %v1106 = vld [vmem:[%s1105] sm:$0x1]
      %v1108 = vlaneseq
      %v1109 = vshrl.u32 %v1108, 7
      %v1110 = vsub.s32 0, %v1109
      %v1111 = vrot.slane %v1106, %v1110
      %v1117 = vunpack.c.l.b16 %v1101
      %v1118 = vunpack.c.l.b16 %v1102
      %v1119 = vunpack.c.l.b16 %v1103
      %v1120 = vunpack.c.l.b16 %v1104
      %v1121 = vpack.c.b16 %v1118, %v1117
      %v1122 = vpack.c.b16 %v1120, %v1119
      %1125 = vmatprep.subr.bf16.mxu0 0
      %1126 = vmatpush1.bf16.msra.mxu0 %v1121
      %1127 = vmatprep.subr.bf16.mxu0 0
      %1128 = vmatpush1.bf16.msra.mxu0 %v1122
      %1129 = vmatprep.subr.bf16.mxu0 0
      %1130 = vmatpush1.bf16.msra.mxu0 0
      %1131 = vmatprep.subr.bf16.mxu0 0
      %1132 = vmatpush1.bf16.msra.mxu0 0
      %1133 = vmatprep.subr.bf16.mxu0 0
      %1134 = vmatpush1.bf16.msra.mxu0 0
      %1135 = vmatprep.subr.bf16.mxu0 0
      %1136 = vmatpush1.bf16.msra.mxu0 0
      %1137 = vmatprep.subr.bf16.mxu0 0
      %1138 = vmatpush1.bf16.msra.mxu0 0
      %1139 = vmatprep.subr.bf16.mxu0 0
      %1140 = vmatpush1.bf16.msra.mxu0 0
      %1141 = vmatprep.subr.bf16.mxu0 0
      %1142 = vmatpush1.bf16.msra.mxu0 0
      %1143 = vmatprep.subr.bf16.mxu0 0
      %1144 = vmatpush1.bf16.msra.mxu0 0
      %1145 = vmatprep.subr.bf16.mxu0 0
      %1146 = vmatpush1.bf16.msra.mxu0 0
      %1147 = vmatprep.subr.bf16.mxu0 0
      %1148 = vmatpush1.bf16.msra.mxu0 0
      %1149 = vmatprep.subr.bf16.mxu0 0
      %1150 = vmatpush1.bf16.msra.mxu0 0
      %1151 = vmatprep.subr.bf16.mxu0 0
      %1152 = vmatpush1.bf16.msra.mxu0 0
      %1153 = vmatprep.subr.bf16.mxu0 0
      %1154 = vmatpush1.bf16.msra.mxu0 0
      %1155 = vmatprep.subr.bf16.mxu0 0
      %1156 = vmatpush1.bf16.msra.mxu0 0
      %1157 = vmatprep.mubr.bf16.mxu0 0
      %1158 = vmatmul.mubr.bf16.gmra.mrb[0].mxu0 %v797
      %v1159 = vpop.f32.mrb[0].mxu0
      %v1160 = vadd.f32 %v1111, %v1159
      %v1161 = vpop.f32.mrb[0].mxu0
      %v1162 = vpop.f32.mrb[0].mxu0
      %v1163 = vpop.f32.mrb[0].mxu0
      %1164 = vdwg.mxu0
      %v1165 = vpack.c.bf16 %v1160, %v1160
      %s1166 = scalar_lea.vmem [#allocation2], 4
      %v1167 = vld [vmem:[%s1166] sm:$0xf]
      %v1169 = vsel %vm905, %v1167, 0
      %v1172 = vsel %vm905, %v1099, 0
      %1174 = vmatprep.subr.bf16.mxu0 0
      %1175 = vmatpush1.bf16.xpose.msra.mxu0 %v1172
      %1176 = vmatprep.subr.bf16.mxu0 0
      %1177 = vmatpush1.bf16.xpose.msra.mxu0 0
      %1178 = vmatprep.subr.bf16.mxu0 0
      %1179 = vmatpush1.bf16.xpose.msra.mxu0 0
      %1180 = vmatprep.subr.bf16.mxu0 0
      %1181 = vmatpush1.bf16.xpose.msra.mxu0 0
      %1182 = vmatprep.subr.bf16.mxu0 0
      %1183 = vmatpush1.bf16.xpose.msra.mxu0 0
      %1184 = vmatprep.subr.bf16.mxu0 0
      %1185 = vmatpush1.bf16.xpose.msra.mxu0 0
      %1186 = vmatprep.subr.bf16.mxu0 0
      %1187 = vmatpush1.bf16.xpose.msra.mxu0 0
      %1188 = vmatprep.subr.bf16.mxu0 0
      %1189 = vmatpush1.bf16.xpose.msra.mxu0 0
      %1190 = vmatprep.subr.bf16.mxu0 0
      %1191 = vmatpush1.bf16.xpose.msra.mxu0 0
      %1192 = vmatprep.subr.bf16.mxu0 0
      %1193 = vmatpush1.bf16.xpose.msra.mxu0 0
      %1194 = vmatprep.subr.bf16.mxu0 0
      %1195 = vmatpush1.bf16.xpose.msra.mxu0 0
      %1196 = vmatprep.subr.bf16.mxu0 0
      %1197 = vmatpush1.bf16.xpose.msra.mxu0 0
      %1198 = vmatprep.subr.bf16.mxu0 0
      %1199 = vmatpush1.bf16.xpose.msra.mxu0 0
      %1200 = vmatprep.subr.bf16.mxu0 0
      %1201 = vmatpush1.bf16.xpose.msra.mxu0 0
      %1202 = vmatprep.subr.bf16.mxu0 0
      %1203 = vmatpush1.bf16.xpose.msra.mxu0 0
      %1204 = vmatprep.subr.bf16.mxu0 0
      %1205 = vmatpush1.bf16.xpose.msra.mxu0 0
      %1206 = vmatprep.mubr.bf16.mxu0 0
      %1207 = vmatmul.mubr.bf16.gmra.mrb[0].mxu0 %v1169
      %v1208 = vpop.f32.mrb[0].mxu0
      %v1209 = vadd.f32 0.0, %v1208
      %v1210 = vpop.f32.mrb[0].mxu0
      %v1211 = vpop.f32.mrb[0].mxu0
      %v1212 = vpop.f32.mrb[0].mxu0
      %1213 = vdwg.mxu0
      %s1214 = scalar_lea.vmem [#allocation3], 8
      %v1215 = vld [vmem:[%s1214] sm:$0xff]
      %v1216 = vsel %vm905, %v1209, -inf
      %1217 = vmax.xlane.f32.xlu0 %v1216
      %v1218 = vpop.xlane.xlu0 %1217
      %v1219 = vmax.f32 %v1215, %v1218
      %v1220 = vsub.f32 %v1215, %v1219
      %v1221 = vmul.f32 %v1220, 1.442695
      %v1222 = vpow.pop %v1221
      %1224 = vset.pattern.permute.xlu0 0
      %1225 = vperm.xlu0 %1224, %v1219
      %v1226 = vpop.permute.xlu0 %1225
      %v1228 = vsub.f32 %v1209, %v1226
      %v1229 = vmul.f32 %v1228, 1.442695
      %v1230 = vpow.pop %v1229
      %s1231 = scalar_lea.vmem [#allocation4], 8
      %v1232 = vld [vmem:[%s1231] sm:$0xff]
      %v1233 = vmul.f32 %v1222, %v1232
      %v1234 = vsel %vm905, %v1230, 0.0
      %1235 = vadd.xlane.f32.xlu0 %v1234
      %v1236 = vpop.xlane.xlu0 %1235
      %v1237 = vadd.f32 %v1233, %v1236
      %1238 = vst.msk [vmem:[%s1231] sm:$0xff] %vm974, %v1237
      %s1239 = scalar_lea.vmem [#allocation5], 8
      %v1240 = vld [vmem:[%s1239] sm:$0xff]
      %1242 = vset.pattern.permute.xlu0 0
      %1243 = vperm.xlu0 %1242, %v1222
      %v1244 = vpop.permute.xlu0 %1243
      %v1246 = vmul.f32 %v1244, %v1240
      %v1247 = vpack.c.bf16 %v1230, %v1230
      %v1249 = vsel %vm905, %v1247, 0
      %v1252 = vsel %vm987, %v1165, 0
      %1254 = vmatprep.subr.bf16.mxu0 0
      %1255 = vmatpush1.bf16.msra.mxu0 %v1252
      %1256 = vmatprep.subr.bf16.mxu0 0
      %1257 = vmatpush1.bf16.msra.mxu0 0
      %1258 = vmatprep.subr.bf16.mxu0 0
      %1259 = vmatpush1.bf16.msra.mxu0 0
      %1260 = vmatprep.subr.bf16.mxu0 0
      %1261 = vmatpush1.bf16.msra.mxu0 0
      %1262 = vmatprep.subr.bf16.mxu0 0
      %1263 = vmatpush1.bf16.msra.mxu0 0
      %1264 = vmatprep.subr.bf16.mxu0 0
      %1265 = vmatpush1.bf16.msra.mxu0 0
      %1266 = vmatprep.subr.bf16.mxu0 0
      %1267 = vmatpush1.bf16.msra.mxu0 0
      %1268 = vmatprep.subr.bf16.mxu0 0
      %1269 = vmatpush1.bf16.msra.mxu0 0
      %1270 = vmatprep.subr.bf16.mxu0 0
      %1271 = vmatpush1.bf16.msra.mxu0 0
      %1272 = vmatprep.subr.bf16.mxu0 0
      %1273 = vmatpush1.bf16.msra.mxu0 0
      %1274 = vmatprep.subr.bf16.mxu0 0
      %1275 = vmatpush1.bf16.msra.mxu0 0
      %1276 = vmatprep.subr.bf16.mxu0 0
      %1277 = vmatpush1.bf16.msra.mxu0 0
      %1278 = vmatprep.subr.bf16.mxu0 0
      %1279 = vmatpush1.bf16.msra.mxu0 0
      %1280 = vmatprep.subr.bf16.mxu0 0
      %1281 = vmatpush1.bf16.msra.mxu0 0
      %1282 = vmatprep.subr.bf16.mxu0 0
      %1283 = vmatpush1.bf16.msra.mxu0 0
      %1284 = vmatprep.subr.bf16.mxu0 0
      %1285 = vmatpush1.bf16.msra.mxu0 0
      %1286 = vmatprep.mubr.bf16.mxu0 0
      %1287 = vmatmul.mubr.bf16.gmra.mrb[0].mxu0 %v1249
      %v1288 = vpop.f32.mrb[0].mxu0
      %v1289 = vadd.f32 0.0, %v1288
      %v1290 = vpop.f32.mrb[0].mxu0
      %v1291 = vpop.f32.mrb[0].mxu0
      %v1292 = vpop.f32.mrb[0].mxu0
      %1293 = vdwg.mxu0
      %v1294 = vadd.f32 %v1246, %v1289
      %1295 = vst.msk [vmem:[%s1239] sm:$0xff] %vm905, %v1294
      %1296 = vst.msk [vmem:[%s1214] sm:$0xff] %vm974, %v1219
      %s1297 = scalar_lea.vmem %s4, 32
      %v1298 = vld [vmem:[%s1297] sm:$0xf]
      %v1299 = vld [vmem:[%s1297 + $0x4] sm:$0xf]
      %v1300 = vld [vmem:[%s1297 + $0x8] sm:$0xf]
      %v1301 = vld [vmem:[%s1297 + $0xc] sm:$0xf]
      %s1302 = scalar_lea.vmem %s5, 2
      %v1303 = vld [vmem:[%s1302] sm:$0x1]
      %v1305 = vlaneseq
      %v1306 = vshrl.u32 %v1305, 7
      %v1307 = vsub.s32 0, %v1306
      %v1308 = vrot.slane %v1303, %v1307
      %v1314 = vunpack.c.l.b16 %v1298
      %v1315 = vunpack.c.l.b16 %v1299
      %v1316 = vunpack.c.l.b16 %v1300
      %v1317 = vunpack.c.l.b16 %v1301
      %v1318 = vpack.c.b16 %v1315, %v1314
      %v1319 = vpack.c.b16 %v1317, %v1316
      %1322 = vmatprep.subr.bf16.mxu0 0
      %1323 = vmatpush1.bf16.msra.mxu0 %v1318
      %1324 = vmatprep.subr.bf16.mxu0 0
      %1325 = vmatpush1.bf16.msra.mxu0 %v1319
      %1326 = vmatprep.subr.bf16.mxu0 0
      %1327 = vmatpush1.bf16.msra.mxu0 0
      %1328 = vmatprep.subr.bf16.mxu0 0
      %1329 = vmatpush1.bf16.msra.mxu0 0
      %1330 = vmatprep.subr.bf16.mxu0 0
      %1331 = vmatpush1.bf16.msra.mxu0 0
      %1332 = vmatprep.subr.bf16.mxu0 0
      %1333 = vmatpush1.bf16.msra.mxu0 0
      %1334 = vmatprep.subr.bf16.mxu0 0
      %1335 = vmatpush1.bf16.msra.mxu0 0
      %1336 = vmatprep.subr.bf16.mxu0 0
      %1337 = vmatpush1.bf16.msra.mxu0 0
      %1338 = vmatprep.subr.bf16.mxu0 0
      %1339 = vmatpush1.bf16.msra.mxu0 0
      %1340 = vmatprep.subr.bf16.mxu0 0
      %1341 = vmatpush1.bf16.msra.mxu0 0
      %1342 = vmatprep.subr.bf16.mxu0 0
      %1343 = vmatpush1.bf16.msra.mxu0 0
      %1344 = vmatprep.subr.bf16.mxu0 0
      %1345 = vmatpush1.bf16.msra.mxu0 0
      %1346 = vmatprep.subr.bf16.mxu0 0
      %1347 = vmatpush1.bf16.msra.mxu0 0
      %1348 = vmatprep.subr.bf16.mxu0 0
      %1349 = vmatpush1.bf16.msra.mxu0 0
      %1350 = vmatprep.subr.bf16.mxu0 0
      %1351 = vmatpush1.bf16.msra.mxu0 0
      %1352 = vmatprep.subr.bf16.mxu0 0
      %1353 = vmatpush1.bf16.msra.mxu0 0
      %1354 = vmatprep.mubr.bf16.mxu0 0
      %1355 = vmatmul.mubr.bf16.gmra.mrb[0].mxu0 %v797
      %v1356 = vpop.f32.mrb[0].mxu0
      %v1357 = vadd.f32 %v1308, %v1356
      %v1358 = vpop.f32.mrb[0].mxu0
      %v1359 = vpop.f32.mrb[0].mxu0
      %v1360 = vpop.f32.mrb[0].mxu0
      %1361 = vdwg.mxu0
      %v1362 = vpack.c.bf16 %v1357, %v1357
      %s1363 = scalar_lea.vmem %s6, 32
      %v1364 = vld [vmem:[%s1363] sm:$0xf]
      %v1365 = vld [vmem:[%s1363 + $0x4] sm:$0xf]
      %v1366 = vld [vmem:[%s1363 + $0x8] sm:$0xf]
      %v1367 = vld [vmem:[%s1363 + $0xc] sm:$0xf]
      %s1368 = scalar_lea.vmem %s7, 2
      %v1369 = vld [vmem:[%s1368] sm:$0x1]
      %v1371 = vlaneseq
      %v1372 = vshrl.u32 %v1371, 7
      %v1373 = vsub.s32 0, %v1372
      %v1374 = vrot.slane %v1369, %v1373
      %v1380 = vunpack.c.l.b16 %v1364
      %v1381 = vunpack.c.l.b16 %v1365
      %v1382 = vunpack.c.l.b16 %v1366
      %v1383 = vunpack.c.l.b16 %v1367
      %v1384 = vpack.c.b16 %v1381, %v1380
      %v1385 = vpack.c.b16 %v1383, %v1382
      %1388 = vmatprep.subr.bf16.mxu0 0
      %1389 = vmatpush1.bf16.msra.mxu0 %v1384
      %1390 = vmatprep.subr.bf16.mxu0 0
      %1391 = vmatpush1.bf16.msra.mxu0 %v1385
      %1392 = vmatprep.subr.bf16.mxu0 0
      %1393 = vmatpush1.bf16.msra.mxu0 0
      %1394 = vmatprep.subr.bf16.mxu0 0
      %1395 = vmatpush1.bf16.msra.mxu0 0
      %1396 = vmatprep.subr.bf16.mxu0 0
      %1397 = vmatpush1.bf16.msra.mxu0 0
      %1398 = vmatprep.subr.bf16.mxu0 0
      %1399 = vmatpush1.bf16.msra.mxu0 0
      %1400 = vmatprep.subr.bf16.mxu0 0
      %1401 = vmatpush1.bf16.msra.mxu0 0
      %1402 = vmatprep.subr.bf16.mxu0 0
      %1403 = vmatpush1.bf16.msra.mxu0 0
      %1404 = vmatprep.subr.bf16.mxu0 0
      %1405 = vmatpush1.bf16.msra.mxu0 0
      %1406 = vmatprep.subr.bf16.mxu0 0
      %1407 = vmatpush1.bf16.msra.mxu0 0
      %1408 = vmatprep.subr.bf16.mxu0 0
      %1409 = vmatpush1.bf16.msra.mxu0 0
      %1410 = vmatprep.subr.bf16.mxu0 0
      %1411 = vmatpush1.bf16.msra.mxu0 0
      %1412 = vmatprep.subr.bf16.mxu0 0
      %1413 = vmatpush1.bf16.msra.mxu0 0
      %1414 = vmatprep.subr.bf16.mxu0 0
      %1415 = vmatpush1.bf16.msra.mxu0 0
      %1416 = vmatprep.subr.bf16.mxu0 0
      %1417 = vmatpush1.bf16.msra.mxu0 0
      %1418 = vmatprep.subr.bf16.mxu0 0
      %1419 = vmatpush1.bf16.msra.mxu0 0
      %1420 = vmatprep.mubr.bf16.mxu0 0
      %1421 = vmatmul.mubr.bf16.gmra.mrb[0].mxu0 %v797
      %v1422 = vpop.f32.mrb[0].mxu0
      %v1423 = vadd.f32 %v1374, %v1422
      %v1424 = vpop.f32.mrb[0].mxu0
      %v1425 = vpop.f32.mrb[0].mxu0
      %v1426 = vpop.f32.mrb[0].mxu0
      %1427 = vdwg.mxu0
      %v1428 = vpack.c.bf16 %v1423, %v1423
      %s1429 = scalar_lea.vmem [#allocation2], 8
      %v1430 = vld [vmem:[%s1429] sm:$0xf]
      %v1432 = vsel %vm905, %v1430, 0
      %v1435 = vsel %vm905, %v1362, 0
      %1437 = vmatprep.subr.bf16.mxu0 0
      %1438 = vmatpush1.bf16.xpose.msra.mxu0 %v1435
      %1439 = vmatprep.subr.bf16.mxu0 0
      %1440 = vmatpush1.bf16.xpose.msra.mxu0 0
      %1441 = vmatprep.subr.bf16.mxu0 0
      %1442 = vmatpush1.bf16.xpose.msra.mxu0 0
      %1443 = vmatprep.subr.bf16.mxu0 0
      %1444 = vmatpush1.bf16.xpose.msra.mxu0 0
      %1445 = vmatprep.subr.bf16.mxu0 0
      %1446 = vmatpush1.bf16.xpose.msra.mxu0 0
      %1447 = vmatprep.subr.bf16.mxu0 0
      %1448 = vmatpush1.bf16.xpose.msra.mxu0 0
      %1449 = vmatprep.subr.bf16.mxu0 0
      %1450 = vmatpush1.bf16.xpose.msra.mxu0 0
      %1451 = vmatprep.subr.bf16.mxu0 0
      %1452 = vmatpush1.bf16.xpose.msra.mxu0 0
      %1453 = vmatprep.subr.bf16.mxu0 0
      %1454 = vmatpush1.bf16.xpose.msra.mxu0 0
      %1455 = vmatprep.subr.bf16.mxu0 0
      %1456 = vmatpush1.bf16.xpose.msra.mxu0 0
      %1457 = vmatprep.subr.bf16.mxu0 0
      %1458 = vmatpush1.bf16.xpose.msra.mxu0 0
      %1459 = vmatprep.subr.bf16.mxu0 0
      %1460 = vmatpush1.bf16.xpose.msra.mxu0 0
      %1461 = vmatprep.subr.bf16.mxu0 0
      %1462 = vmatpush1.bf16.xpose.msra.mxu0 0
      %1463 = vmatprep.subr.bf16.mxu0 0
      %1464 = vmatpush1.bf16.xpose.msra.mxu0 0
      %1465 = vmatprep.subr.bf16.mxu0 0
      %1466 = vmatpush1.bf16.xpose.msra.mxu0 0
      %1467 = vmatprep.subr.bf16.mxu0 0
      %1468 = vmatpush1.bf16.xpose.msra.mxu0 0
      %1469 = vmatprep.mubr.bf16.mxu0 0
      %1470 = vmatmul.mubr.bf16.gmra.mrb[0].mxu0 %v1432
      %v1471 = vpop.f32.mrb[0].mxu0
      %v1472 = vadd.f32 0.0, %v1471
      %v1473 = vpop.f32.mrb[0].mxu0
      %v1474 = vpop.f32.mrb[0].mxu0
      %v1475 = vpop.f32.mrb[0].mxu0
      %1476 = vdwg.mxu0
      %s1477 = scalar_lea.vmem [#allocation3], 16
      %v1478 = vld [vmem:[%s1477] sm:$0xff]
      %v1479 = vsel %vm905, %v1472, -inf
      %1480 = vmax.xlane.f32.xlu0 %v1479
      %v1481 = vpop.xlane.xlu0 %1480
      %v1482 = vmax.f32 %v1478, %v1481
      %v1483 = vsub.f32 %v1478, %v1482
      %v1484 = vmul.f32 %v1483, 1.442695
      %v1485 = vpow.pop %v1484
      %1487 = vset.pattern.permute.xlu0 0
      %1488 = vperm.xlu0 %1487, %v1482
      %v1489 = vpop.permute.xlu0 %1488
      %v1491 = vsub.f32 %v1472, %v1489
      %v1492 = vmul.f32 %v1491, 1.442695
      %v1493 = vpow.pop %v1492
      %s1494 = scalar_lea.vmem [#allocation4], 16
      %v1495 = vld [vmem:[%s1494] sm:$0xff]
      %v1496 = vmul.f32 %v1485, %v1495
      %v1497 = vsel %vm905, %v1493, 0.0
      %1498 = vadd.xlane.f32.xlu0 %v1497
      %v1499 = vpop.xlane.xlu0 %1498
      %v1500 = vadd.f32 %v1496, %v1499
      %1501 = vst.msk [vmem:[%s1494] sm:$0xff] %vm974, %v1500
      %s1502 = scalar_lea.vmem [#allocation5], 16
      %v1503 = vld [vmem:[%s1502] sm:$0xff]
      %1505 = vset.pattern.permute.xlu0 0
      %1506 = vperm.xlu0 %1505, %v1485
      %v1507 = vpop.permute.xlu0 %1506
      %v1509 = vmul.f32 %v1507, %v1503
      %v1510 = vpack.c.bf16 %v1493, %v1493
      %v1512 = vsel %vm905, %v1510, 0
      %v1515 = vsel %vm987, %v1428, 0
      %1517 = vmatprep.subr.bf16.mxu0 0
      %1518 = vmatpush1.bf16.msra.mxu0 %v1515
      %1519 = vmatprep.subr.bf16.mxu0 0
      %1520 = vmatpush1.bf16.msra.mxu0 0
      %1521 = vmatprep.subr.bf16.mxu0 0
      %1522 = vmatpush1.bf16.msra.mxu0 0
      %1523 = vmatprep.subr.bf16.mxu0 0
      %1524 = vmatpush1.bf16.msra.mxu0 0
      %1525 = vmatprep.subr.bf16.mxu0 0
      %1526 = vmatpush1.bf16.msra.mxu0 0
      %1527 = vmatprep.subr.bf16.mxu0 0
      %1528 = vmatpush1.bf16.msra.mxu0 0
      %1529 = vmatprep.subr.bf16.mxu0 0
      %1530 = vmatpush1.bf16.msra.mxu0 0
      %1531 = vmatprep.subr.bf16.mxu0 0
      %1532 = vmatpush1.bf16.msra.mxu0 0
      %1533 = vmatprep.subr.bf16.mxu0 0
      %1534 = vmatpush1.bf16.msra.mxu0 0
      %1535 = vmatprep.subr.bf16.mxu0 0
      %1536 = vmatpush1.bf16.msra.mxu0 0
      %1537 = vmatprep.subr.bf16.mxu0 0
      %1538 = vmatpush1.bf16.msra.mxu0 0
      %1539 = vmatprep.subr.bf16.mxu0 0
      %1540 = vmatpush1.bf16.msra.mxu0 0
      %1541 = vmatprep.subr.bf16.mxu0 0
      %1542 = vmatpush1.bf16.msra.mxu0 0
      %1543 = vmatprep.subr.bf16.mxu0 0
      %1544 = vmatpush1.bf16.msra.mxu0 0
      %1545 = vmatprep.subr.bf16.mxu0 0
      %1546 = vmatpush1.bf16.msra.mxu0 0
      %1547 = vmatprep.subr.bf16.mxu0 0
      %1548 = vmatpush1.bf16.msra.mxu0 0
      %1549 = vmatprep.mubr.bf16.mxu0 0
      %1550 = vmatmul.mubr.bf16.gmra.mrb[0].mxu0 %v1512
      %v1551 = vpop.f32.mrb[0].mxu0
      %v1552 = vadd.f32 0.0, %v1551
      %v1553 = vpop.f32.mrb[0].mxu0
      %v1554 = vpop.f32.mrb[0].mxu0
      %v1555 = vpop.f32.mrb[0].mxu0
      %1556 = vdwg.mxu0
      %v1557 = vadd.f32 %v1509, %v1552
      %1558 = vst.msk [vmem:[%s1502] sm:$0xff] %vm905, %v1557
      %1559 = vst.msk [vmem:[%s1477] sm:$0xff] %vm974, %v1482
      %s1560 = scalar_lea.vmem %s4, 48
      %v1561 = vld [vmem:[%s1560] sm:$0xf]
      %v1562 = vld [vmem:[%s1560 + $0x4] sm:$0xf]
      %v1563 = vld [vmem:[%s1560 + $0x8] sm:$0xf]
      %v1564 = vld [vmem:[%s1560 + $0xc] sm:$0xf]
      %s1565 = scalar_lea.vmem %s5, 3
      %v1566 = vld [vmem:[%s1565] sm:$0x1]
      %v1568 = vlaneseq
      %v1569 = vshrl.u32 %v1568, 7
      %v1570 = vsub.s32 0, %v1569
      %v1571 = vrot.slane %v1566, %v1570
      %v1577 = vunpack.c.l.b16 %v1561
      %v1578 = vunpack.c.l.b16 %v1562
      %v1579 = vunpack.c.l.b16 %v1563
      %v1580 = vunpack.c.l.b16 %v1564
      %v1581 = vpack.c.b16 %v1578, %v1577
      %v1582 = vpack.c.b16 %v1580, %v1579
      %1585 = vmatprep.subr.bf16.mxu0 0
      %1586 = vmatpush1.bf16.msra.mxu0 %v1581
      %1587 = vmatprep.subr.bf16.mxu0 0
      %1588 = vmatpush1.bf16.msra.mxu0 %v1582
      %1589 = vmatprep.subr.bf16.mxu0 0
      %1590 = vmatpush1.bf16.msra.mxu0 0
      %1591 = vmatprep.subr.bf16.mxu0 0
      %1592 = vmatpush1.bf16.msra.mxu0 0
      %1593 = vmatprep.subr.bf16.mxu0 0
      %1594 = vmatpush1.bf16.msra.mxu0 0
      %1595 = vmatprep.subr.bf16.mxu0 0
      %1596 = vmatpush1.bf16.msra.mxu0 0
      %1597 = vmatprep.subr.bf16.mxu0 0
      %1598 = vmatpush1.bf16.msra.mxu0 0
      %1599 = vmatprep.subr.bf16.mxu0 0
      %1600 = vmatpush1.bf16.msra.mxu0 0
      %1601 = vmatprep.subr.bf16.mxu0 0
      %1602 = vmatpush1.bf16.msra.mxu0 0
      %1603 = vmatprep.subr.bf16.mxu0 0
      %1604 = vmatpush1.bf16.msra.mxu0 0
      %1605 = vmatprep.subr.bf16.mxu0 0
      %1606 = vmatpush1.bf16.msra.mxu0 0
      %1607 = vmatprep.subr.bf16.mxu0 0
      %1608 = vmatpush1.bf16.msra.mxu0 0
      %1609 = vmatprep.subr.bf16.mxu0 0
      %1610 = vmatpush1.bf16.msra.mxu0 0
      %1611 = vmatprep.subr.bf16.mxu0 0
      %1612 = vmatpush1.bf16.msra.mxu0 0
      %1613 = vmatprep.subr.bf16.mxu0 0
      %1614 = vmatpush1.bf16.msra.mxu0 0
      %1615 = vmatprep.subr.bf16.mxu0 0
      %1616 = vmatpush1.bf16.msra.mxu0 0
      %1617 = vmatprep.mubr.bf16.mxu0 0
      %1618 = vmatmul.mubr.bf16.gmra.mrb[0].mxu0 %v797
      %v1619 = vpop.f32.mrb[0].mxu0
      %v1620 = vadd.f32 %v1571, %v1619
      %v1621 = vpop.f32.mrb[0].mxu0
      %v1622 = vpop.f32.mrb[0].mxu0
      %v1623 = vpop.f32.mrb[0].mxu0
      %1624 = vdwg.mxu0
      %v1625 = vpack.c.bf16 %v1620, %v1620
      %s1626 = scalar_lea.vmem %s6, 48
      %v1627 = vld [vmem:[%s1626] sm:$0xf]
      %v1628 = vld [vmem:[%s1626 + $0x4] sm:$0xf]
      %v1629 = vld [vmem:[%s1626 + $0x8] sm:$0xf]
      %v1630 = vld [vmem:[%s1626 + $0xc] sm:$0xf]
      %s1631 = scalar_lea.vmem %s7, 3
      %v1632 = vld [vmem:[%s1631] sm:$0x1]
      %v1634 = vlaneseq
      %v1635 = vshrl.u32 %v1634, 7
      %v1636 = vsub.s32 0, %v1635
      %v1637 = vrot.slane %v1632, %v1636
      %v1643 = vunpack.c.l.b16 %v1627
      %v1644 = vunpack.c.l.b16 %v1628
      %v1645 = vunpack.c.l.b16 %v1629
      %v1646 = vunpack.c.l.b16 %v1630
      %v1647 = vpack.c.b16 %v1644, %v1643
      %v1648 = vpack.c.b16 %v1646, %v1645
      %1651 = vmatprep.subr.bf16.mxu0 0
      %1652 = vmatpush1.bf16.msra.mxu0 %v1647
      %1653 = vmatprep.subr.bf16.mxu0 0
      %1654 = vmatpush1.bf16.msra.mxu0 %v1648
      %1655 = vmatprep.subr.bf16.mxu0 0
      %1656 = vmatpush1.bf16.msra.mxu0 0
      %1657 = vmatprep.subr.bf16.mxu0 0
      %1658 = vmatpush1.bf16.msra.mxu0 0
      %1659 = vmatprep.subr.bf16.mxu0 0
      %1660 = vmatpush1.bf16.msra.mxu0 0
      %1661 = vmatprep.subr.bf16.mxu0 0
      %1662 = vmatpush1.bf16.msra.mxu0 0
      %1663 = vmatprep.subr.bf16.mxu0 0
      %1664 = vmatpush1.bf16.msra.mxu0 0
      %1665 = vmatprep.subr.bf16.mxu0 0
      %1666 = vmatpush1.bf16.msra.mxu0 0
      %1667 = vmatprep.subr.bf16.mxu0 0
      %1668 = vmatpush1.bf16.msra.mxu0 0
      %1669 = vmatprep.subr.bf16.mxu0 0
      %1670 = vmatpush1.bf16.msra.mxu0 0
      %1671 = vmatprep.subr.bf16.mxu0 0
      %1672 = vmatpush1.bf16.msra.mxu0 0
      %1673 = vmatprep.subr.bf16.mxu0 0
      %1674 = vmatpush1.bf16.msra.mxu0 0
      %1675 = vmatprep.subr.bf16.mxu0 0
      %1676 = vmatpush1.bf16.msra.mxu0 0
      %1677 = vmatprep.subr.bf16.mxu0 0
      %1678 = vmatpush1.bf16.msra.mxu0 0
      %1679 = vmatprep.subr.bf16.mxu0 0
      %1680 = vmatpush1.bf16.msra.mxu0 0
      %1681 = vmatprep.subr.bf16.mxu0 0
      %1682 = vmatpush1.bf16.msra.mxu0 0
      %1683 = vmatprep.mubr.bf16.mxu0 0
      %1684 = vmatmul.mubr.bf16.gmra.mrb[0].mxu0 %v797
      %v1685 = vpop.f32.mrb[0].mxu0
      %v1686 = vadd.f32 %v1637, %v1685
      %v1687 = vpop.f32.mrb[0].mxu0
      %v1688 = vpop.f32.mrb[0].mxu0
      %v1689 = vpop.f32.mrb[0].mxu0
      %1690 = vdwg.mxu0
      %v1691 = vpack.c.bf16 %v1686, %v1686
      %s1692 = scalar_lea.vmem [#allocation2], 12
      %v1693 = vld [vmem:[%s1692] sm:$0xf]
      %v1695 = vsel %vm905, %v1693, 0
      %v1698 = vsel %vm905, %v1625, 0
      %1700 = vmatprep.subr.bf16.mxu0 0
      %1701 = vmatpush1.bf16.xpose.msra.mxu0 %v1698
      %1702 = vmatprep.subr.bf16.mxu0 0
      %1703 = vmatpush1.bf16.xpose.msra.mxu0 0
      %1704 = vmatprep.subr.bf16.mxu0 0
      %1705 = vmatpush1.bf16.xpose.msra.mxu0 0
      %1706 = vmatprep.subr.bf16.mxu0 0
      %1707 = vmatpush1.bf16.xpose.msra.mxu0 0
      %1708 = vmatprep.subr.bf16.mxu0 0
      %1709 = vmatpush1.bf16.xpose.msra.mxu0 0
      %1710 = vmatprep.subr.bf16.mxu0 0
      %1711 = vmatpush1.bf16.xpose.msra.mxu0 0
      %1712 = vmatprep.subr.bf16.mxu0 0
      %1713 = vmatpush1.bf16.xpose.msra.mxu0 0
      %1714 = vmatprep.subr.bf16.mxu0 0
      %1715 = vmatpush1.bf16.xpose.msra.mxu0 0
      %1716 = vmatprep.subr.bf16.mxu0 0
      %1717 = vmatpush1.bf16.xpose.msra.mxu0 0
      %1718 = vmatprep.subr.bf16.mxu0 0
      %1719 = vmatpush1.bf16.xpose.msra.mxu0 0
      %1720 = vmatprep.subr.bf16.mxu0 0
      %1721 = vmatpush1.bf16.xpose.msra.mxu0 0
      %1722 = vmatprep.subr.bf16.mxu0 0
      %1723 = vmatpush1.bf16.xpose.msra.mxu0 0
      %1724 = vmatprep.subr.bf16.mxu0 0
      %1725 = vmatpush1.bf16.xpose.msra.mxu0 0
      %1726 = vmatprep.subr.bf16.mxu0 0
      %1727 = vmatpush1.bf16.xpose.msra.mxu0 0
      %1728 = vmatprep.subr.bf16.mxu0 0
      %1729 = vmatpush1.bf16.xpose.msra.mxu0 0
      %1730 = vmatprep.subr.bf16.mxu0 0
      %1731 = vmatpush1.bf16.xpose.msra.mxu0 0
      %1732 = vmatprep.mubr.bf16.mxu0 0
      %1733 = vmatmul.mubr.bf16.gmra.mrb[0].mxu0 %v1695
      %v1734 = vpop.f32.mrb[0].mxu0
      %v1735 = vadd.f32 0.0, %v1734
      %v1736 = vpop.f32.mrb[0].mxu0
      %v1737 = vpop.f32.mrb[0].mxu0
      %v1738 = vpop.f32.mrb[0].mxu0
      %1739 = vdwg.mxu0
      %s1740 = scalar_lea.vmem [#allocation3], 24
      %v1741 = vld [vmem:[%s1740] sm:$0xff]
      %v1742 = vsel %vm905, %v1735, -inf
      %1743 = vmax.xlane.f32.xlu0 %v1742
      %v1744 = vpop.xlane.xlu0 %1743
      %v1745 = vmax.f32 %v1741, %v1744
      %v1746 = vsub.f32 %v1741, %v1745
      %v1747 = vmul.f32 %v1746, 1.442695
      %v1748 = vpow.pop %v1747
      %1750 = vset.pattern.permute.xlu0 0
      %1751 = vperm.xlu0 %1750, %v1745
      %v1752 = vpop.permute.xlu0 %1751
      %v1754 = vsub.f32 %v1735, %v1752
      %v1755 = vmul.f32 %v1754, 1.442695
      %v1756 = vpow.pop %v1755
      %s1757 = scalar_lea.vmem [#allocation4], 24
      %v1758 = vld [vmem:[%s1757] sm:$0xff]
      %v1759 = vmul.f32 %v1748, %v1758
      %v1760 = vsel %vm905, %v1756, 0.0
      %1761 = vadd.xlane.f32.xlu0 %v1760
      %v1762 = vpop.xlane.xlu0 %1761
      %v1763 = vadd.f32 %v1759, %v1762
      %1764 = vst.msk [vmem:[%s1757] sm:$0xff] %vm974, %v1763
      %s1765 = scalar_lea.vmem [#allocation5], 24
      %v1766 = vld [vmem:[%s1765] sm:$0xff]
      %1768 = vset.pattern.permute.xlu0 0
      %1769 = vperm.xlu0 %1768, %v1748
      %v1770 = vpop.permute.xlu0 %1769
      %v1772 = vmul.f32 %v1770, %v1766
      %v1773 = vpack.c.bf16 %v1756, %v1756
      %v1775 = vsel %vm905, %v1773, 0
      %v1778 = vsel %vm987, %v1691, 0
      %1780 = vmatprep.subr.bf16.mxu0 0
      %1781 = vmatpush1.bf16.msra.mxu0 %v1778
      %1782 = vmatprep.subr.bf16.mxu0 0
      %1783 = vmatpush1.bf16.msra.mxu0 0
      %1784 = vmatprep.subr.bf16.mxu0 0
      %1785 = vmatpush1.bf16.msra.mxu0 0
      %1786 = vmatprep.subr.bf16.mxu0 0
      %1787 = vmatpush1.bf16.msra.mxu0 0
      %1788 = vmatprep.subr.bf16.mxu0 0
      %1789 = vmatpush1.bf16.msra.mxu0 0
      %1790 = vmatprep.subr.bf16.mxu0 0
      %1791 = vmatpush1.bf16.msra.mxu0 0
      %1792 = vmatprep.subr.bf16.mxu0 0
      %1793 = vmatpush1.bf16.msra.mxu0 0
      %1794 = vmatprep.subr.bf16.mxu0 0
      %1795 = vmatpush1.bf16.msra.mxu0 0
      %1796 = vmatprep.subr.bf16.mxu0 0
      %1797 = vmatpush1.bf16.msra.mxu0 0
      %1798 = vmatprep.subr.bf16.mxu0 0
      %1799 = vmatpush1.bf16.msra.mxu0 0
      %1800 = vmatprep.subr.bf16.mxu0 0
      %1801 = vmatpush1.bf16.msra.mxu0 0
      %1802 = vmatprep.subr.bf16.mxu0 0
      %1803 = vmatpush1.bf16.msra.mxu0 0
      %1804 = vmatprep.subr.bf16.mxu0 0
      %1805 = vmatpush1.bf16.msra.mxu0 0
      %1806 = vmatprep.subr.bf16.mxu0 0
      %1807 = vmatpush1.bf16.msra.mxu0 0
      %1808 = vmatprep.subr.bf16.mxu0 0
      %1809 = vmatpush1.bf16.msra.mxu0 0
      %1810 = vmatprep.subr.bf16.mxu0 0
      %1811 = vmatpush1.bf16.msra.mxu0 0
      %1812 = vmatprep.mubr.bf16.mxu0 0
      %1813 = vmatmul.mubr.bf16.gmra.mrb[0].mxu0 %v1775
      %v1814 = vpop.f32.mrb[0].mxu0
      %v1815 = vadd.f32 0.0, %v1814
      %v1816 = vpop.f32.mrb[0].mxu0
      %v1817 = vpop.f32.mrb[0].mxu0
      %v1818 = vpop.f32.mrb[0].mxu0
      %1819 = vdwg.mxu0
      %v1820 = vadd.f32 %v1772, %v1815
      %1821 = vst.msk [vmem:[%s1765] sm:$0xff] %vm905, %v1820
      %1822 = vst.msk [vmem:[%s1740] sm:$0xff] %vm974, %v1745
      // Predicated region
      $region73: #{transformer_decoder_layer.3} parent=67 // pred_check
        %p1823 = pneg %p476
      $region74: #{transformer_decoder_layer.3} parent=67 // pred_check_branch
        %1825 = sbr.rel (%p1823) target = $region76
      $region75: #{transformer_decoder_layer.3} parent=67 // pred_region
        %v1826 = vld [vmem:[%s460] sm:$0xff]
        %v1827 = vld [vmem:[%s9] sm:$0x1]
        %v1829 = vlaneseq
        %v1830 = vshrl.u32 %v1829, 7
        %v1831 = vsub.s32 0, %v1830
        %v1832 = vrot.slane %v1827, %v1831
        %v1834 = vadd.f32 %v1826, %v1832
        %v1835 = vld [vmem:[#allocation5] sm:$0xff]
        %v1836 = vld [vmem:[#allocation4] sm:$0xff]
        %v1837 = vrcp.pop %v1836
        %1839 = vset.pattern.permute.xlu0 0
        %1840 = vperm.xlu0 %1839, %v1837
        %v1841 = vpop.permute.xlu0 %1840
        %v1843 = vmul.f32 %v1835, %v1841
        %v1844 = vpack.c.bf16 %v1843, %v1843
        %v1845 = vld [vmem:[%s8] sm:$0xf]
        %v1847 = vsel %vm905, %v1844, 0
        %v1850 = vsel %vm987, %v1845, 0
        %1852 = vmatprep.subr.bf16.mxu0 0
        %1853 = vmatpush1.bf16.msra.mxu0 %v1850
        %1854 = vmatprep.subr.bf16.mxu0 0
        %1855 = vmatpush1.bf16.msra.mxu0 0
        %1856 = vmatprep.subr.bf16.mxu0 0
        %1857 = vmatpush1.bf16.msra.mxu0 0
        %1858 = vmatprep.subr.bf16.mxu0 0
        %1859 = vmatpush1.bf16.msra.mxu0 0
        %1860 = vmatprep.subr.bf16.mxu0 0
        %1861 = vmatpush1.bf16.msra.mxu0 0
        %1862 = vmatprep.subr.bf16.mxu0 0
        %1863 = vmatpush1.bf16.msra.mxu0 0
        %1864 = vmatprep.subr.bf16.mxu0 0
        %1865 = vmatpush1.bf16.msra.mxu0 0
        %1866 = vmatprep.subr.bf16.mxu0 0
        %1867 = vmatpush1.bf16.msra.mxu0 0
        %1868 = vmatprep.subr.bf16.mxu0 0
        %1869 = vmatpush1.bf16.msra.mxu0 0
        %1870 = vmatprep.subr.bf16.mxu0 0
        %1871 = vmatpush1.bf16.msra.mxu0 0
        %1872 = vmatprep.subr.bf16.mxu0 0
        %1873 = vmatpush1.bf16.msra.mxu0 0
        %1874 = vmatprep.subr.bf16.mxu0 0
        %1875 = vmatpush1.bf16.msra.mxu0 0
        %1876 = vmatprep.subr.bf16.mxu0 0
        %1877 = vmatpush1.bf16.msra.mxu0 0
        %1878 = vmatprep.subr.bf16.mxu0 0
        %1879 = vmatpush1.bf16.msra.mxu0 0
        %1880 = vmatprep.subr.bf16.mxu0 0
        %1881 = vmatpush1.bf16.msra.mxu0 0
        %1882 = vmatprep.subr.bf16.mxu0 0
        %1883 = vmatpush1.bf16.msra.mxu0 0
        %1884 = vmatprep.mubr.bf16.mxu0 0
        %1885 = vmatmul.mubr.bf16.gmra.mrb[0].mxu0 %v1847
        %v1886 = vpop.f32.mrb[0].mxu0
        %v1887 = vadd.f32 0.0, %v1886
        %v1888 = vpop.f32.mrb[0].mxu0
        %v1889 = vpop.f32.mrb[0].mxu0
        %v1890 = vpop.f32.mrb[0].mxu0
        %1891 = vdwg.mxu0
        %v1892 = vadd.f32 %v1834, %v1887
        %v1893 = vld [vmem:[%s1239] sm:$0xff]
        %v1894 = vld [vmem:[%s1231] sm:$0xff]
        %v1895 = vrcp.pop %v1894
        %1897 = vset.pattern.permute.xlu0 0
        %1898 = vperm.xlu0 %1897, %v1895
        %v1899 = vpop.permute.xlu0 %1898
        %v1901 = vmul.f32 %v1893, %v1899
        %v1902 = vpack.c.bf16 %v1901, %v1901
        %s1903 = scalar_lea.vmem %s8, 4
        %v1904 = vld [vmem:[%s1903] sm:$0xf]
        %v1906 = vsel %vm905, %v1902, 0
        %v1909 = vsel %vm987, %v1904, 0
        %1911 = vmatprep.subr.bf16.mxu0 0
        %1912 = vmatpush1.bf16.msra.mxu0 %v1909
        %1913 = vmatprep.subr.bf16.mxu0 0
        %1914 = vmatpush1.bf16.msra.mxu0 0
        %1915 = vmatprep.subr.bf16.mxu0 0
        %1916 = vmatpush1.bf16.msra.mxu0 0
        %1917 = vmatprep.subr.bf16.mxu0 0
        %1918 = vmatpush1.bf16.msra.mxu0 0
        %1919 = vmatprep.subr.bf16.mxu0 0
        %1920 = vmatpush1.bf16.msra.mxu0 0
        %1921 = vmatprep.subr.bf16.mxu0 0
        %1922 = vmatpush1.bf16.msra.mxu0 0
        %1923 = vmatprep.subr.bf16.mxu0 0
        %1924 = vmatpush1.bf16.msra.mxu0 0
        %1925 = vmatprep.subr.bf16.mxu0 0
        %1926 = vmatpush1.bf16.msra.mxu0 0
        %1927 = vmatprep.subr.bf16.mxu0 0
        %1928 = vmatpush1.bf16.msra.mxu0 0
        %1929 = vmatprep.subr.bf16.mxu0 0
        %1930 = vmatpush1.bf16.msra.mxu0 0
        %1931 = vmatprep.subr.bf16.mxu0 0
        %1932 = vmatpush1.bf16.msra.mxu0 0
        %1933 = vmatprep.subr.bf16.mxu0 0
        %1934 = vmatpush1.bf16.msra.mxu0 0
        %1935 = vmatprep.subr.bf16.mxu0 0
        %1936 = vmatpush1.bf16.msra.mxu0 0
        %1937 = vmatprep.subr.bf16.mxu0 0
        %1938 = vmatpush1.bf16.msra.mxu0 0
        %1939 = vmatprep.subr.bf16.mxu0 0
        %1940 = vmatpush1.bf16.msra.mxu0 0
        %1941 = vmatprep.subr.bf16.mxu0 0
        %1942 = vmatpush1.bf16.msra.mxu0 0
        %1943 = vmatprep.mubr.bf16.mxu0 0
        %1944 = vmatmul.mubr.bf16.gmra.mrb[0].mxu0 %v1906
        %v1945 = vpop.f32.mrb[0].mxu0
        %v1946 = vadd.f32 0.0, %v1945
        %v1947 = vpop.f32.mrb[0].mxu0
        %v1948 = vpop.f32.mrb[0].mxu0
        %v1949 = vpop.f32.mrb[0].mxu0
        %1950 = vdwg.mxu0
        %v1951 = vadd.f32 %v1892, %v1946
        %v1952 = vld [vmem:[%s1502] sm:$0xff]
        %v1953 = vld [vmem:[%s1494] sm:$0xff]
        %v1954 = vrcp.pop %v1953
        %1956 = vset.pattern.permute.xlu0 0
        %1957 = vperm.xlu0 %1956, %v1954
        %v1958 = vpop.permute.xlu0 %1957
        %v1960 = vmul.f32 %v1952, %v1958
        %v1961 = vpack.c.bf16 %v1960, %v1960
        %s1962 = scalar_lea.vmem %s8, 8
        %v1963 = vld [vmem:[%s1962] sm:$0xf]
        %v1965 = vsel %vm905, %v1961, 0
        %v1968 = vsel %vm987, %v1963, 0
        %1970 = vmatprep.subr.bf16.mxu0 0
        %1971 = vmatpush1.bf16.msra.mxu0 %v1968
        %1972 = vmatprep.subr.bf16.mxu0 0
        %1973 = vmatpush1.bf16.msra.mxu0 0
        %1974 = vmatprep.subr.bf16.mxu0 0
        %1975 = vmatpush1.bf16.msra.mxu0 0
        %1976 = vmatprep.subr.bf16.mxu0 0
        %1977 = vmatpush1.bf16.msra.mxu0 0
        %1978 = vmatprep.subr.bf16.mxu0 0
        %1979 = vmatpush1.bf16.msra.mxu0 0
        %1980 = vmatprep.subr.bf16.mxu0 0
        %1981 = vmatpush1.bf16.msra.mxu0 0
        %1982 = vmatprep.subr.bf16.mxu0 0
        %1983 = vmatpush1.bf16.msra.mxu0 0
        %1984 = vmatprep.subr.bf16.mxu0 0
        %1985 = vmatpush1.bf16.msra.mxu0 0
        %1986 = vmatprep.subr.bf16.mxu0 0
        %1987 = vmatpush1.bf16.msra.mxu0 0
        %1988 = vmatprep.subr.bf16.mxu0 0
        %1989 = vmatpush1.bf16.msra.mxu0 0
        %1990 = vmatprep.subr.bf16.mxu0 0
        %1991 = vmatpush1.bf16.msra.mxu0 0
        %1992 = vmatprep.subr.bf16.mxu0 0
        %1993 = vmatpush1.bf16.msra.mxu0 0
        %1994 = vmatprep.subr.bf16.mxu0 0
        %1995 = vmatpush1.bf16.msra.mxu0 0
        %1996 = vmatprep.subr.bf16.mxu0 0
        %1997 = vmatpush1.bf16.msra.mxu0 0
        %1998 = vmatprep.subr.bf16.mxu0 0
        %1999 = vmatpush1.bf16.msra.mxu0 0
        %2000 = vmatprep.subr.bf16.mxu0 0
        %2001 = vmatpush1.bf16.msra.mxu0 0
        %2002 = vmatprep.mubr.bf16.mxu0 0
        %2003 = vmatmul.mubr.bf16.gmra.mrb[0].mxu0 %v1965
        %v2004 = vpop.f32.mrb[0].mxu0
        %v2005 = vadd.f32 0.0, %v2004
        %v2006 = vpop.f32.mrb[0].mxu0
        %v2007 = vpop.f32.mrb[0].mxu0
        %v2008 = vpop.f32.mrb[0].mxu0
        %2009 = vdwg.mxu0
        %v2010 = vadd.f32 %v1951, %v2005
        %v2011 = vld [vmem:[%s1765] sm:$0xff]
        %v2012 = vld [vmem:[%s1757] sm:$0xff]
        %v2013 = vrcp.pop %v2012
        %2015 = vset.pattern.permute.xlu0 0
        %2016 = vperm.xlu0 %2015, %v2013
        %v2017 = vpop.permute.xlu0 %2016
        %v2019 = vmul.f32 %v2011, %v2017
        %v2020 = vpack.c.bf16 %v2019, %v2019
        %s2021 = scalar_lea.vmem %s8, 12
        %v2022 = vld [vmem:[%s2021] sm:$0xf]
        %v2024 = vsel %vm905, %v2020, 0
        %v2027 = vsel %vm987, %v2022, 0
        %2029 = vmatprep.subr.bf16.mxu0 0
        %2030 = vmatpush1.bf16.msra.mxu0 %v2027
        %2031 = vmatprep.subr.bf16.mxu0 0
        %2032 = vmatpush1.bf16.msra.mxu0 0
        %2033 = vmatprep.subr.bf16.mxu0 0
        %2034 = vmatpush1.bf16.msra.mxu0 0
        %2035 = vmatprep.subr.bf16.mxu0 0
        %2036 = vmatpush1.bf16.msra.mxu0 0
        %2037 = vmatprep.subr.bf16.mxu0 0
        %2038 = vmatpush1.bf16.msra.mxu0 0
        %2039 = vmatprep.subr.bf16.mxu0 0
        %2040 = vmatpush1.bf16.msra.mxu0 0
        %2041 = vmatprep.subr.bf16.mxu0 0
        %2042 = vmatpush1.bf16.msra.mxu0 0
        %2043 = vmatprep.subr.bf16.mxu0 0
        %2044 = vmatpush1.bf16.msra.mxu0 0
        %2045 = vmatprep.subr.bf16.mxu0 0
        %2046 = vmatpush1.bf16.msra.mxu0 0
        %2047 = vmatprep.subr.bf16.mxu0 0
        %2048 = vmatpush1.bf16.msra.mxu0 0
        %2049 = vmatprep.subr.bf16.mxu0 0
        %2050 = vmatpush1.bf16.msra.mxu0 0
        %2051 = vmatprep.subr.bf16.mxu0 0
        %2052 = vmatpush1.bf16.msra.mxu0 0
        %2053 = vmatprep.subr.bf16.mxu0 0
        %2054 = vmatpush1.bf16.msra.mxu0 0
        %2055 = vmatprep.subr.bf16.mxu0 0
        %2056 = vmatpush1.bf16.msra.mxu0 0
        %2057 = vmatprep.subr.bf16.mxu0 0
        %2058 = vmatpush1.bf16.msra.mxu0 0
        %2059 = vmatprep.subr.bf16.mxu0 0
        %2060 = vmatpush1.bf16.msra.mxu0 0
        %2061 = vmatprep.mubr.bf16.mxu0 0
        %2062 = vmatmul.mubr.bf16.gmra.mrb[0].mxu0 %v2024
        %v2063 = vpop.f32.mrb[0].mxu0
        %v2064 = vadd.f32 0.0, %v2063
        %v2065 = vpop.f32.mrb[0].mxu0
        %v2066 = vpop.f32.mrb[0].mxu0
        %v2067 = vpop.f32.mrb[0].mxu0
        %2068 = vdwg.mxu0
        %v2069 = vadd.f32 %v2010, %v2064
        %v2070 = vsel %vm795, %v2069, 0.0
        %2071 = vadd.xlane.f32.xlu0 %v2070
        %v2072 = vpop.xlane.xlu0 %2071
        %v2073 = vrcp.pop 32.0
        %v2074 = vmul.f32 %v2072, %v2073
        %v2075 = vsub.f32 %v2069, %v2074
        %v2076 = vmul.f32 %v2075, %v2075
        %v2077 = vsel %vm795, %v2076, 0.0
        %2078 = vadd.xlane.f32.xlu0 %v2077
        %v2079 = vpop.xlane.xlu0 %2078
        %v2080 = vmul.f32 %v2079, %v2073
        %v2081 = vadd.f32 %v2080, 1e-05
        %v2082 = vrsqrt.pop %v2081
        %v2083 = vmul.f32 %v2075, %v2082
        %v2084 = vld [vmem:[%s10] sm:$0x1]
        %v2086 = vlaneseq
        %v2087 = vshrl.u32 %v2086, 7
        %v2088 = vsub.s32 0, %v2087
        %v2089 = vrot.slane %v2084, %v2088
        %v2091 = vmul.f32 %v2083, %v2089
        %v2092 = vld [vmem:[%s11] sm:$0x1]
        %v2094 = vlaneseq
        %v2095 = vshrl.u32 %v2094, 7
        %v2096 = vsub.s32 0, %v2095
        %v2097 = vrot.slane %v2092, %v2096
        %v2099 = vadd.f32 %v2091, %v2097
        %2100 = vst.msk [vmem:[%s474] sm:$0xff] %vm795, %v2099
      $region76: #{transformer_decoder_layer.3} parent=67 // pred_fallthru
        _
      %p2101 = scmp.lt.s32.totalorder %s28, 1
      %s2102 = scalar_select %p2101, %s28, 1
      %p2103 = scmp.lt.s32.totalorder %s29, 0
      %s2104 = scalar_select %p2103, %s29, 0
      %s2105 = sadd.s32 %s2104, %s2102
      %s2106 = smul.addr %s2105, 8
      %s2107 = scalar_lea.vmem %s12, %s2106
      // Predicated region
      $region77: #{transformer_decoder_layer.3} parent=67 // pred_check
        %p2108 = pneg %p328
      $region78: #{transformer_decoder_layer.3} parent=67 // pred_check_branch
        %2110 = sbr.rel (%p2108) target = $region80
      $region79: #{transformer_decoder_layer.3} parent=67 // pred_region
        _
      $region80: #{transformer_decoder_layer.3} parent=67 // pred_fallthru
        _
    $region68: #{transformer_decoder_layer.3} parent=5 // pred_fallthru
      _
    %p2111 = scmp.le.s32.totalorder 2, %s18
    // Predicated region
    $region81: #{transformer_decoder_layer.3} parent=5 // pred_check
      %p2112 = pneg %p2111
    $region82: #{transformer_decoder_layer.3} parent=5 // pred_check_branch
      %2114 = sbr.rel (%p2112) target = $region84
    $region83: #{transformer_decoder_layer.3} parent=5 // pred_region
      %s2115 = ssub.s32 %s18, 2
      // Predicated region
      $region85: #{transformer_decoder_layer.3} parent=83 // pred_check
        %p2116 = pneg %p334
      $region86: #{transformer_decoder_layer.3} parent=83 // pred_check_branch
        %2118 = sbr.rel (%p2116) target = $region88
      $region87: #{transformer_decoder_layer.3} parent=83 // pred_region
        %p2119 = scmp.lt.s32.totalorder %s31, 1
        %s2120 = scalar_select %p2119, %s31, 1
        %p2121 = scmp.lt.s32.totalorder %s32, 0
        %s2122 = scalar_select %p2121, %s32, 0
        %s2123 = sadd.s32 %s2122, %s2120
        %s2124 = smul.addr %s2123, 8
        %s2125 = scalar_lea.vmem %s12, %s2124
      $region88: #{transformer_decoder_layer.3} parent=83 // pred_fallthru
        _
    $region84: #{transformer_decoder_layer.3} parent=5 // pred_fallthru
      _
  $region6: #{transformer_decoder_layer.3} parent=0 // loop_footer
    %s22 = sadd.s32 1, %s18
  $region7: #{transformer_decoder_layer.3} parent=0 // loop_footer_branch
    %17 = sbr.rel target = $region3
  $region8: #{transformer_decoder_layer.3} parent=0 // loop_exit
    _

</llo_original>
